<compile_context>
chip_gen: v5e
topology: v5e:2x2
jax: 0.10.0
libtpu: 0.0.40
codegen_flags: <defaults>
</compile_context>

<pallas_src>
import functools

import jax
import jax.numpy as jnp
from jax.experimental import pallas as pl
from jax.experimental.pallas import tpu as pltpu

EPS = 1e-5
LANE = 128


# --------------------------------- kernels -----------------------------------

def _conv1_kernel(x_ref, w_ref, y_ref, ssum_ref, ssq_ref, *, mdt):
    """1x1 conv (row tile @ weight) + partial BN stats of its (f32) output."""
    y = jnp.dot(x_ref[...].astype(mdt), w_ref[...],
                preferred_element_type=jnp.float32)
    y_ref[...] = y.astype(y_ref.dtype)
    ssum_ref[0] = jnp.sum(y, axis=0, keepdims=True)
    ssq_ref[0] = jnp.sum(y * y, axis=0, keepdims=True)


def _conv1_ds_kernel(x_ref, w1_ref, wd_ref,
                     y1_ref, s1sum_ref, s1sq_ref,
                     yd_ref, sdsum_ref, sdsq_ref, *, mdt):
    """conv1 and the downsample 1x1 conv share one read of the x tile."""
    x = x_ref[...].astype(mdt)
    y1 = jnp.dot(x, w1_ref[...], preferred_element_type=jnp.float32)
    y1_ref[...] = y1.astype(y1_ref.dtype)
    s1sum_ref[0] = jnp.sum(y1, axis=0, keepdims=True)
    s1sq_ref[0] = jnp.sum(y1 * y1, axis=0, keepdims=True)
    yd = jnp.dot(x, wd_ref[...], preferred_element_type=jnp.float32)
    yd_ref[...] = yd.astype(yd_ref.dtype)
    sdsum_ref[0] = jnp.sum(yd, axis=0, keepdims=True)
    sdsq_ref[0] = jnp.sum(yd * yd, axis=0, keepdims=True)


def _bn_relu_conv1_kernel(x_ref, scale_ref, bias_ref, w_ref,
                          y_ref, ssum_ref, ssq_ref, *, mdt):
    """Folded BN (one FMA) + ReLU + 1x1 conv + partial BN stats."""
    h = jnp.maximum(x_ref[...].astype(jnp.float32) * scale_ref[...]
                    + bias_ref[...], 0.0)
    y = jnp.dot(h.astype(mdt), w_ref[...], preferred_element_type=jnp.float32)
    y_ref[...] = y.astype(y_ref.dtype)
    ssum_ref[0] = jnp.sum(y, axis=0, keepdims=True)
    ssq_ref[0] = jnp.sum(y * y, axis=0, keepdims=True)


def _conv3x3_kernel(y1_ref, scale_ref, bias_ref, w2_ref,
                    y2_ref, ssum_ref, ssq_ref, *, ho, wo, mdt):
    """bn1 + ReLU + 3x3 conv (stride 1, pad 1) on one image.

    The 9 taps are built as XLU row-rolls of h1 (circularly wrapped rows are
    exactly the rows the boundary mask kills), masked with comparisons on an
    in-kernel iota (no mask tensor in HBM/VMEM), lane-concatenated into one
    (r, 9*Cmid) im2col slab and fed to the MXU as a single K=9*Cmid matmul.
    """
    r = ho * wo
    h1 = jnp.maximum(y1_ref[0].astype(jnp.float32) * scale_ref[...]
                     + bias_ref[...], 0.0)

    # Row/col coordinates via float math only (exact for r < 2^22; avoids any
    # reliance on vector integer div/rem lowering).
    idx = jax.lax.broadcasted_iota(jnp.int32, (r, 1), 0).astype(jnp.float32)
    row = jnp.floor((idx + 0.5) * (1.0 / wo))        # == idx // wo exactly
    col = idx - row * wo                             # == idx %  wo exactly

    cols = []
    for dy in (-1, 0, 1):
        for dx in (-1, 0, 1):
            off = dy * wo + dx
            if off == 0:
                tap = h1
            elif r % 8 == 0:
                tap = pltpu.roll(h1, shift=(-off) % r, axis=0)
            else:
                # TODO(synk): relayout-heavy fallback for non-8-multiple r.
                tap = jnp.roll(h1, -off, axis=0)
            conds = []
            if dy < 0:
                conds.append(row >= -dy)
            if dy > 0:
                conds.append(row < ho - dy)
            if dx < 0:
                conds.append(col >= -dx)
            if dx > 0:
                conds.append(col < wo - dx)
            if conds:
                ok = conds[0]
                for c in conds[1:]:
                    ok = ok & c
                tap = jnp.where(ok, tap, 0.0)
            cols.append(tap.astype(mdt))
    slab = jnp.concatenate(cols, axis=1)             # (r, 9*Cmid), lane-dense
    y2 = jnp.dot(slab, w2_ref[...], preferred_element_type=jnp.float32)
    y2_ref[0] = y2.astype(y2_ref.dtype)
    ssum_ref[0] = jnp.sum(y2, axis=0, keepdims=True)
    ssq_ref[0] = jnp.sum(y2 * y2, axis=0, keepdims=True)


def _residual_ds_kernel(y3_ref, s3_ref, b3_ref, yd_ref, sd_ref, bd_ref, o_ref):
    o_ref[...] = jnp.maximum(
        y3_ref[...].astype(jnp.float32) * s3_ref[...] + b3_ref[...]
        + yd_ref[...].astype(jnp.float32) * sd_ref[...] + bd_ref[...], 0.0)


def _residual_id_kernel(y3_ref, s3_ref, b3_ref, x_ref, o_ref):
    o_ref[...] = jnp.maximum(
        y3_ref[...].astype(jnp.float32) * s3_ref[...] + b3_ref[...]
        + x_ref[...].astype(jnp.float32), 0.0)


# -------------------------------- wrapper glue --------------------------------

def _rep_spec(shape):
    nd = len(shape)
    return pl.BlockSpec(tuple(shape), lambda *_, _n=nd: (0,) * _n)


def _row_spec(tm, c):
    return pl.BlockSpec((tm, c), lambda i: (i, 0))


def _stat_spec(c):
    return pl.BlockSpec((1, 1, c), lambda i: (i, 0, 0))


def _round_up(x, q):
    return ((x + q - 1) // q) * q


def _bytes(shape, dtype):
    size = 1
    for s in shape:
        size *= int(s)
    return size * jnp.dtype(dtype).itemsize


def _vmem_limit(block_bytes):
    """Explicit scoped-VMEM limit: 2x (double buffer) + slack, capped at 64MiB
    (v7x physical; v5e/v6e have more so this is always safe)."""
    return int(min(max(2 * block_bytes + (8 << 20), 32 << 20), 64 << 20))


def _pick_tile_m(m, target):
    """Pick a row tile: prefer a multiple-of-8 divisor of M near `target`; if
    only tiny divisors exist, pad M up to a multiple of `target` instead of
    falling back to one giant (pipeline-killing, VMEM-blowing) tile."""
    target = max(8, (min(m, target) // 8) * 8)
    tm = target
    while tm >= 8:
        if m % tm == 0:
            break
        tm -= 8
    if tm >= max(64, target // 2) or tm == m:
        return tm, m
    return target, _round_up(m, target)


def _fold_bn(ssum, ssq, gamma, beta, count):
    """Fold biased batch statistics + affine params into one scale/bias pair."""
    mean = jnp.sum(ssum, axis=0)[0] / count
    var = jnp.maximum(jnp.sum(ssq, axis=0)[0] / count - mean * mean, 0.0)
    scale = gamma * jax.lax.rsqrt(var + EPS)
    bias = beta - mean * scale
    return (scale.reshape(1, -1).astype(jnp.float32),
            bias.reshape(1, -1).astype(jnp.float32))


def _pcall(kernel, grid, in_specs, out_specs, out_shape, vmem_bytes,
           scratch_shapes=()):
    return pl.pallas_call(
        kernel, grid=grid, in_specs=in_specs, out_specs=out_specs,
        out_shape=out_shape, scratch_shapes=scratch_shapes,
        compiler_params=pltpu.CompilerParams(
            dimension_semantics=("parallel",) * len(grid),
            vmem_limit_bytes=vmem_bytes))


@functools.partial(jax.jit, static_argnames=("stride", "matmul_dtype", "tile_m"))
def block50_forward(x, params, stride, *, matmul_dtype=jnp.bfloat16, tile_m=512):
    """x: (N, Cin, H, W) float32 (PyTorch NCHW).  BatchNorm in training mode."""
    n, cin, hin, win = x.shape
    cmid = params["conv1_w"].shape[0]
    cout = params["conv3_w"].shape[0]
    has_ds = (stride != 1) or (cin != cout)
    ho = (hin - 1) // stride + 1
    wo = (win - 1) // stride + 1
    assert ho >= 2 and wo >= 2, "kernel assumes output spatial dims >= 2"
    r = ho * wo
    m = n * r
    mf = float(m)

    # Lane-dense channel padding; bf16 inter-pass activations on the bf16 path.
    cin_p, cmid_p, cout_p = (_round_up(c, LANE) for c in (cin, cmid, cout))
    act_dtype = jnp.float32 if matmul_dtype == jnp.float32 else jnp.bfloat16

    tm, m_pad = _pick_tile_m(m, tile_m)
    gm = m_pad // tm

    # Stride of the 1x1 convs == spatial subsampling of the input (glue).
    # TODO(synk): keep activations NHWC across blocks so this NCHW<->NHWC pair
    # (one extra HBM round trip each way) disappears at the network level.
    xs = jnp.transpose(x[:, :, ::stride, ::stride], (0, 2, 3, 1)).reshape(m, cin)
    xs = jnp.pad(xs, ((0, m_pad - m), (0, cin_p - cin))).astype(act_dtype)

    # Weights in channel-last matmul form, zero-padded, cast to MXU dtype.
    w1 = jnp.pad(params["conv1_w"][:, :, 0, 0].T,
                 ((0, cin_p - cin), (0, cmid_p - cmid))).astype(matmul_dtype)
    w2 = jnp.pad(jnp.transpose(params["conv2_w"], (2, 3, 1, 0)),
                 ((0, 0), (0, 0), (0, cmid_p - cmid), (0, cmid_p - cmid)))
    w2 = w2.reshape(9 * cmid_p, cmid_p).astype(matmul_dtype)
    w3 = jnp.pad(params["conv3_w"][:, :, 0, 0].T,
                 ((0, cmid_p - cmid), (0, cout_p - cout))).astype(matmul_dtype)
    pad_c = lambda v, cp: jnp.pad(v, (0, cp - v.shape[0]))
    g1, b1 = pad_c(params["bn1_gamma"], cmid_p), pad_c(params["bn1_beta"], cmid_p)
    g2, b2 = pad_c(params["bn2_gamma"], cmid_p), pad_c(params["bn2_beta"], cmid_p)
    g3, b3 = pad_c(params["bn3_gamma"], cout_p), pad_c(params["bn3_beta"], cout_p)

    act = lambda c: jax.ShapeDtypeStruct((m_pad, c), act_dtype)
    stat = lambda nb, c: jax.ShapeDtypeStruct((nb, 1, c), jnp.float32)

    # ---- pass 1: conv1 (+ downsample conv) + partial BN stats ----------------
    if has_ds:
        wd = jnp.pad(params["down_w"][:, :, 0, 0].T,
                     ((0, cin_p - cin), (0, cout_p - cout))).astype(matmul_dtype)
        gd, bd = (pad_c(params["down_gamma"], cout_p),
                  pad_c(params["down_beta"], cout_p))
        p1_vmem = _vmem_limit(
            _bytes((tm, cin_p), act_dtype) + _bytes(w1.shape, matmul_dtype)
            + _bytes(wd.shape, matmul_dtype) + _bytes((tm, cmid_p), act_dtype)
            + _bytes((tm, cout_p), act_dtype)
            + 2 * _bytes((1, cmid_p), jnp.float32)
            + 2 * _bytes((1, cout_p), jnp.float32))
        y1, s1s, s1q, yd, sds, sdq = _pcall(
            functools.partial(_conv1_ds_kernel, mdt=matmul_dtype), (gm,),
            [_row_spec(tm, cin_p), _rep_spec(w1.shape), _rep_spec(wd.shape)],
            [_row_spec(tm, cmid_p), _stat_spec(cmid_p), _stat_spec(cmid_p),
             _row_spec(tm, cout_p), _stat_spec(cout_p), _stat_spec(cout_p)],
            [act(cmid_p), stat(gm, cmid_p), stat(gm, cmid_p),
             act(cout_p), stat(gm, cout_p), stat(gm, cout_p)],
            p1_vmem,
        )(xs, w1, wd)
    else:
        p1_vmem = _vmem_limit(
            _bytes((tm, cin_p), act_dtype) + _bytes(w1.shape, matmul_dtype)
            + _bytes((tm, cmid_p), act_dtype)
            + 2 * _bytes((1, cmid_p), jnp.float32))
        y1, s1s, s1q = _pcall(
            functools.partial(_conv1_kernel, mdt=matmul_dtype), (gm,),
            [_row_spec(tm, cin_p), _rep_spec(w1.shape)],
            [_row_spec(tm, cmid_p), _stat_spec(cmid_p), _stat_spec(cmid_p)],
            [act(cmid_p), stat(gm, cmid_p), stat(gm, cmid_p)],
            p1_vmem,
        )(xs, w1)
    scale1, bias1 = _fold_bn(s1s, s1q, g1, b1, mf)

    # ---- pass 2: bn1 + relu + 3x3 conv as ONE im2col matmul per image --------
    # TODO(synk): on v7x, tile this over (n, row_blocks) with a wo-row halo so
    # both TensorCores and >2 pipeline stages are used at small batch.
    y1_img = (y1 if m_pad == m else y1[:m]).reshape(n, r, cmid_p)
    p2_vmem = _vmem_limit(
        2 * _bytes((r, cmid_p), act_dtype) + _bytes(w2.shape, matmul_dtype)
        + _bytes((r, cmid_p), jnp.float32)
        + _bytes((r, 9 * cmid_p), matmul_dtype)
        + 2 * _bytes((1, cmid_p), jnp.float32))
    y2r, s2s, s2q = _pcall(
        functools.partial(_conv3x3_kernel, ho=ho, wo=wo, mdt=matmul_dtype), (n,),
        [pl.BlockSpec((1, r, cmid_p), lambda i: (i, 0, 0)),
         _rep_spec((1, cmid_p)), _rep_spec((1, cmid_p)), _rep_spec(w2.shape)],
        [pl.BlockSpec((1, r, cmid_p), lambda i: (i, 0, 0)),
         _stat_spec(cmid_p), _stat_spec(cmid_p)],
        [jax.ShapeDtypeStruct((n, r, cmid_p), act_dtype),
         stat(n, cmid_p), stat(n, cmid_p)],
        p2_vmem,
    )(y1_img, scale1, bias1, w2)
    y2 = y2r.reshape(m, cmid_p)
    if m_pad != m:
        y2 = jnp.pad(y2, ((0, m_pad - m), (0, 0)))
    scale2, bias2 = _fold_bn(s2s, s2q, g2, b2, mf)

    # ---- pass 3: bn2 + relu + conv3 + partial BN stats ------------------------
    p3_vmem = _vmem_limit(
        _bytes((tm, cmid_p), act_dtype) + _bytes(w3.shape, matmul_dtype)
        + _bytes((tm, cout_p), act_dtype) + 2 * _bytes((1, cout_p), jnp.float32))
    y3, s3s, s3q = _pcall(
        functools.partial(_bn_relu_conv1_kernel, mdt=matmul_dtype), (gm,),
        [_row_spec(tm, cmid_p), _rep_spec((1, cmid_p)), _rep_spec((1, cmid_p)),
         _rep_spec(w3.shape)],
        [_row_spec(tm, cout_p), _stat_spec(cout_p), _stat_spec(cout_p)],
        [act(cout_p), stat(gm, cout_p), stat(gm, cout_p)],
        p3_vmem,
    )(y2, scale2, bias2, w3)
    scale3, bias3 = _fold_bn(s3s, s3q, g3, b3, mf)

    # ---- pass 4: bn3 + residual add + relu ------------------------------------
    out_sds = jax.ShapeDtypeStruct((m_pad, cout_p), jnp.float32)
    p4_vmem = _vmem_limit(3 * _bytes((tm, cout_p), jnp.float32)
                          + 4 * _bytes((1, cout_p), jnp.float32))
    if has_ds:
        scaled, biasd = _fold_bn(sds, sdq, gd, bd, mf)
        out = _pcall(
            _residual_ds_kernel, (gm,),
            [_row_spec(tm, cout_p), _rep_spec((1, cout_p)), _rep_spec((1, cout_p)),
             _row_spec(tm, cout_p), _rep_spec((1, cout_p)), _rep_spec((1, cout_p))],
            _row_spec(tm, cout_p), out_sds, p4_vmem,
        )(y3, scale3, bias3, yd, scaled, biasd)
    else:
        out = _pcall(
            _residual_id_kernel, (gm,),
            [_row_spec(tm, cout_p), _rep_spec((1, cout_p)), _rep_spec((1, cout_p)),
             _row_spec(tm, cout_p)],
            _row_spec(tm, cout_p), out_sds, p4_vmem,
        )(y3, scale3, bias3, xs)

    out = out[:m, :cout].reshape(n, ho, wo, cout)
    return jnp.transpose(out, (0, 3, 1, 2))                   # back to NCHW


# ----------------------------- pure-JAX reference -----------------------------

def _conv2d_nchw(x, w, stride=1, padding=0):
    return jax.lax.conv_general_dilated(
        x, w, window_strides=(stride, stride),
        padding=[(padding, padding), (padding, padding)],
        dimension_numbers=("NCHW", "OIHW", "NCHW"))


def _bn_train_nchw(x, gamma, beta):
    mu = jnp.mean(x, axis=(0, 2, 3), keepdims=True)
    var = jnp.mean((x - mu) ** 2, axis=(0, 2, 3), keepdims=True)
    return (x - mu) * jax.lax.rsqrt(var + EPS) * gamma[None, :, None, None] \
        + beta[None, :, None, None]


def block50_reference(x, params, stride):
    cin, cout = x.shape[1], params["conv3_w"].shape[0]
    out = _conv2d_nchw(x, params["conv1_w"], stride=stride)
    out = jax.nn.relu(_bn_train_nchw(out, params["bn1_gamma"], params["bn1_beta"]))
    out = _conv2d_nchw(out, params["conv2_w"], stride=1, padding=1)
    out = jax.nn.relu(_bn_train_nchw(out, params["bn2_gamma"], params["bn2_beta"]))
    out = _conv2d_nchw(out, params["conv3_w"])
    out = _bn_train_nchw(out, params["bn3_gamma"], params["bn3_beta"])
    if stride != 1 or cin != cout:
        idn = _conv2d_nchw(x, params["down_w"], stride=stride)
        idn = _bn_train_nchw(idn, params["down_gamma"], params["down_beta"])
    else:
        idn = x
    return jax.nn.relu(out + idn)


def init_params(key, in_channels, out_channels):
    cout = out_channels * 4
    ks = jax.random.split(key, 12)

    def w(k, shape, fan_in):
        return jax.random.normal(k, shape, jnp.float32) / jnp.sqrt(float(fan_in))

    return {
        "conv1_w": w(ks[0], (out_channels, in_channels, 1, 1), in_channels),
        "bn1_gamma": jax.random.uniform(ks[1], (out_channels,), jnp.float32, 0.5, 1.5),
        "bn1_beta": 0.1 * jax.random.normal(ks[2], (out_channels,), jnp.float32),
        "conv2_w": w(ks[3], (out_channels, out_channels, 3, 3), out_channels * 9),
        "bn2_gamma": jax.random.uniform(ks[4], (out_channels,), jnp.float32, 0.5, 1.5),
        "bn2_beta": 0.1 * jax.random.normal(ks[5], (out_channels,), jnp.float32),
        "conv3_w": w(ks[6], (cout, out_channels, 1, 1), out_channels),
        "bn3_gamma": jax.random.uniform(ks[7], (cout,), jnp.float32, 0.5, 1.5),
        "bn3_beta": 0.1 * jax.random.normal(ks[8], (cout,), jnp.float32),
        "down_w": w(ks[9], (cout, in_channels, 1, 1), in_channels),
        "down_gamma": jax.random.uniform(ks[10], (cout,), jnp.float32, 0.5, 1.5),
        "down_beta": 0.1 * jax.random.normal(ks[11], (cout,), jnp.float32),
    }


if __name__ == "__main__":
    key = jax.random.PRNGKey(0)
    kx, kp, kx2, kp2 = jax.random.split(key, 4)

    # Config A: stride-2 bottleneck with a downsample branch (Cin=16 -> Cout=32).
    n, cin, h, w = 2, 16, 16, 16
    cmid, stride = 8, 2
    x = jax.random.normal(kx, (n, cin, h, w), jnp.float32)
    params = init_params(kp, cin, cmid)
    y_ref = block50_reference(x, params, stride)

    # f32 verification path (also exercises a multi-tile grid via tile_m=64).
    y_f32 = jax.block_until_ready(
        block50_forward(x, params, stride, matmul_dtype=jnp.float32, tile_m=64))
    assert y_f32.shape == y_ref.shape == (n, 4 * cmid, h // stride, w // stride)
    err = float(jnp.max(jnp.abs(y_f32 - y_ref)))
    assert err < 3e-3, f"f32 max abs error {err}"

    # bf16 production path: bf16 MXU operands + bf16 inter-pass activations,
    # f32 accumulation and f32 BN statistics.
    y_bf16 = jax.block_until_ready(block50_forward(x, params, stride))
    err_bf = float(jnp.max(jnp.abs(y_bf16 - y_ref)))
    assert err_bf < 3e-1, f"bf16 max abs error {err_bf}"

    # Config B: stride-1 block on the identity path (Cin == Cout = 32).
    n2, cin2, cmid2, stride2 = 2, 32, 8, 1
    x2 = jax.random.normal(kx2, (n2, cin2, h, w), jnp.float32)
    params2 = init_params(kp2, cin2, cmid2)
    y2_ref = block50_reference(x2, params2, stride2)
    y2_f32 = jax.block_until_ready(
        block50_forward(x2, params2, stride2, matmul_dtype=jnp.float32))
    err2 = float(jnp.max(jnp.abs(y2_f32 - y2_ref)))
    assert err2 < 3e-3, f"identity-path f32 max abs error {err2}"

    print("KERNEL_OK")
</pallas_src>

<mosaic_0001>
module attributes {stable_mosaic.version = 11 : i64} {
  func.func @_conv1_ds_kernel(%arg0: i32, %arg1: memref<64x128xf32, #tpu.memory_space<vmem>>, %arg2: memref<128x128xf32, #tpu.memory_space<vmem>>, %arg3: memref<128x128xf32, #tpu.memory_space<vmem>>, %arg4: memref<64x128xf32, #tpu.memory_space<vmem>>, %arg5: memref<1x1x128xf32, #tpu.memory_space<vmem>>, %arg6: memref<1x1x128xf32, #tpu.memory_space<vmem>>, %arg7: memref<64x128xf32, #tpu.memory_space<vmem>>, %arg8: memref<1x1x128xf32, #tpu.memory_space<vmem>>, %arg9: memref<1x1x128xf32, #tpu.memory_space<vmem>>) attributes {dimension_semantics = [#tpu.dimension_semantics<parallel>], iteration_bounds = array<i64: 2>, scalar_prefetch = 0 : i64, scratch_operands = 0 : i64, tpu.core_type = #tpu.core_type<tc>, window_params = [{transform_indices = @transform_0, window_bounds = array<i64: 64, 128>}, {pipeline_mode = #tpu.pipeline_mode<synchronous>, transform_indices = @transform_1, window_bounds = array<i64: 128, 128>}, {pipeline_mode = #tpu.pipeline_mode<synchronous>, transform_indices = @transform_2, window_bounds = array<i64: 128, 128>}, {transform_indices = @transform_3, window_bounds = array<i64: 64, 128>}, {transform_indices = @transform_4, window_bounds = array<i64: 1, 1, 128>}, {transform_indices = @transform_5, window_bounds = array<i64: 1, 1, 128>}, {transform_indices = @transform_6, window_bounds = array<i64: 64, 128>}, {transform_indices = @transform_7, window_bounds = array<i64: 1, 1, 128>}, {transform_indices = @transform_8, window_bounds = array<i64: 1, 1, 128>}]} {
    %c0 = arith.constant 0 : index
    %c0_0 = arith.constant 0 : index
    %0 = vector.load %arg1[%c0, %c0_0] : memref<64x128xf32, #tpu.memory_space<vmem>>, vector<64x128xf32>
    %c0_1 = arith.constant 0 : index
    %c0_2 = arith.constant 0 : index
    %1 = vector.load %arg2[%c0_1, %c0_2] : memref<128x128xf32, #tpu.memory_space<vmem>>, vector<128x128xf32>
    %cst = arith.constant dense<0.000000e+00> : vector<64x128xf32>
    %2 = tpu.matmul %0, %1, %cst {dimension_numbers = #tpu.dot_dimension_numbers<[1], [0], [0], [1], [0, 0, 1, 1], [], []>} : vector<64x128xf32>, vector<128x128xf32>, vector<64x128xf32> -> vector<64x128xf32>
    %c0_3 = arith.constant 0 : index
    %c0_4 = arith.constant 0 : index
    %3 = vector.load %arg4[%c0_3, %c0_4] : memref<64x128xf32, #tpu.memory_space<vmem>>, vector<64x128xf32>
    tpu.vector_store %arg4[%c0_3, %c0_4], %2 {strides = array<i32>} : memref<64x128xf32, #tpu.memory_space<vmem>>, vector<64x128xf32>,
    %cst_5 = arith.constant dense<0.000000e+00> : vector<128xf32>
    %4 = vector.multi_reduction <add>, %2, %cst_5 [0] : vector<64x128xf32> to vector<128xf32>
    %5 = vector.shape_cast %4 : vector<128xf32> to vector<1x128xf32>
    %c0_6 = arith.constant 0 : index
    %c0_7 = arith.constant 0 : index
    %c0_8 = arith.constant 0 : index
    %6 = vector.load %arg5[%c0_6, %c0_7, %c0_8] : memref<1x1x128xf32, #tpu.memory_space<vmem>>, vector<1x1x128xf32>
    %7 = vector.shape_cast %6 : vector<1x1x128xf32> to vector<1x128xf32>
    %8 = vector.shape_cast %5 : vector<1x128xf32> to vector<1x1x128xf32>
    tpu.vector_store %arg5[%c0_6, %c0_7, %c0_8], %8 {strides = array<i32>} : memref<1x1x128xf32, #tpu.memory_space<vmem>>, vector<1x1x128xf32>,
    %9 = arith.mulf %2, %2 : vector<64x128xf32>
    %cst_9 = arith.constant dense<0.000000e+00> : vector<128xf32>
    %10 = vector.multi_reduction <add>, %9, %cst_9 [0] : vector<64x128xf32> to vector<128xf32>
    %11 = vector.shape_cast %10 : vector<128xf32> to vector<1x128xf32>
    %c0_10 = arith.constant 0 : index
    %c0_11 = arith.constant 0 : index
    %c0_12 = arith.constant 0 : index
    %12 = vector.load %arg6[%c0_10, %c0_11, %c0_12] : memref<1x1x128xf32, #tpu.memory_space<vmem>>, vector<1x1x128xf32>
    %13 = vector.shape_cast %12 : vector<1x1x128xf32> to vector<1x128xf32>
    %14 = vector.shape_cast %11 : vector<1x128xf32> to vector<1x1x128xf32>
    tpu.vector_store %arg6[%c0_10, %c0_11, %c0_12], %14 {strides = array<i32>} : memref<1x1x128xf32, #tpu.memory_space<vmem>>, vector<1x1x128xf32>,
    %c0_13 = arith.constant 0 : index
    %c0_14 = arith.constant 0 : index
    %15 = vector.load %arg3[%c0_13, %c0_14] : memref<128x128xf32, #tpu.memory_space<vmem>>, vector<128x128xf32>
    %cst_15 = arith.constant dense<0.000000e+00> : vector<64x128xf32>
    %16 = tpu.matmul %0, %15, %cst_15 {dimension_numbers = #tpu.dot_dimension_numbers<[1], [0], [0], [1], [0, 0, 1, 1], [], []>} : vector<64x128xf32>, vector<128x128xf32>, vector<64x128xf32> -> vector<64x128xf32>
    %c0_16 = arith.constant 0 : index
    %c0_17 = arith.constant 0 : index
    %17 = vector.load %arg7[%c0_16, %c0_17] : memref<64x128xf32, #tpu.memory_space<vmem>>, vector<64x128xf32>
    tpu.vector_store %arg7[%c0_16, %c0_17], %16 {strides = array<i32>} : memref<64x128xf32, #tpu.memory_space<vmem>>, vector<64x128xf32>,
    %cst_18 = arith.constant dense<0.000000e+00> : vector<128xf32>
    %18 = vector.multi_reduction <add>, %16, %cst_18 [0] : vector<64x128xf32> to vector<128xf32>
    %19 = vector.shape_cast %18 : vector<128xf32> to vector<1x128xf32>
    %c0_19 = arith.constant 0 : index
    %c0_20 = arith.constant 0 : index
    %c0_21 = arith.constant 0 : index
    %20 = vector.load %arg8[%c0_19, %c0_20, %c0_21] : memref<1x1x128xf32, #tpu.memory_space<vmem>>, vector<1x1x128xf32>
    %21 = vector.shape_cast %20 : vector<1x1x128xf32> to vector<1x128xf32>
    %22 = vector.shape_cast %19 : vector<1x128xf32> to vector<1x1x128xf32>
    tpu.vector_store %arg8[%c0_19, %c0_20, %c0_21], %22 {strides = array<i32>} : memref<1x1x128xf32, #tpu.memory_space<vmem>>, vector<1x1x128xf32>,
    %23 = arith.mulf %16, %16 : vector<64x128xf32>
    %cst_22 = arith.constant dense<0.000000e+00> : vector<128xf32>
    %24 = vector.multi_reduction <add>, %23, %cst_22 [0] : vector<64x128xf32> to vector<128xf32>
    %25 = vector.shape_cast %24 : vector<128xf32> to vector<1x128xf32>
    %c0_23 = arith.constant 0 : index
    %c0_24 = arith.constant 0 : index
    %c0_25 = arith.constant 0 : index
    %26 = vector.load %arg9[%c0_23, %c0_24, %c0_25] : memref<1x1x128xf32, #tpu.memory_space<vmem>>, vector<1x1x128xf32>
    %27 = vector.shape_cast %26 : vector<1x1x128xf32> to vector<1x128xf32>
    %28 = vector.shape_cast %25 : vector<1x128xf32> to vector<1x1x128xf32>
    tpu.vector_store %arg9[%c0_23, %c0_24, %c0_25], %28 {strides = array<i32>} : memref<1x1x128xf32, #tpu.memory_space<vmem>>, vector<1x1x128xf32>,
    return
  }
  func.func @transform_0(%arg0: i32) -> (i32, i32) {
    %c0_i32 = arith.constant 0 : i32
    %c0_i32_0 = arith.constant 0 : i32
    return %arg0, %c0_i32 : i32, i32
  }
  func.func @transform_1(%arg0: i32) -> (i32, i32) {
    %c0_i32 = arith.constant 0 : i32
    %c0_i32_0 = arith.constant 0 : i32
    %c0_i32_1 = arith.constant 0 : i32
    return %c0_i32, %c0_i32_0 : i32, i32
  }
  func.func @transform_2(%arg0: i32) -> (i32, i32) {
    %c0_i32 = arith.constant 0 : i32
    %c0_i32_0 = arith.constant 0 : i32
    %c0_i32_1 = arith.constant 0 : i32
    return %c0_i32, %c0_i32_0 : i32, i32
  }
  func.func @transform_3(%arg0: i32) -> (i32, i32) {
    %c0_i32 = arith.constant 0 : i32
    %c0_i32_0 = arith.constant 0 : i32
    return %arg0, %c0_i32 : i32, i32
  }
  func.func @transform_4(%arg0: i32) -> (i32, i32, i32) {
    %c0_i32 = arith.constant 0 : i32
    %c0_i32_0 = arith.constant 0 : i32
    %c0_i32_1 = arith.constant 0 : i32
    return %arg0, %c0_i32, %c0_i32_0 : i32, i32, i32
  }
  func.func @transform_5(%arg0: i32) -> (i32, i32, i32) {
    %c0_i32 = arith.constant 0 : i32
    %c0_i32_0 = arith.constant 0 : i32
    %c0_i32_1 = arith.constant 0 : i32
    return %arg0, %c0_i32, %c0_i32_0 : i32, i32, i32
  }
  func.func @transform_6(%arg0: i32) -> (i32, i32) {
    %c0_i32 = arith.constant 0 : i32
    %c0_i32_0 = arith.constant 0 : i32
    return %arg0, %c0_i32 : i32, i32
  }
  func.func @transform_7(%arg0: i32) -> (i32, i32, i32) {
    %c0_i32 = arith.constant 0 : i32
    %c0_i32_0 = arith.constant 0 : i32
    %c0_i32_1 = arith.constant 0 : i32
    return %arg0, %c0_i32, %c0_i32_0 : i32, i32, i32
  }
  func.func @transform_8(%arg0: i32) -> (i32, i32, i32) {
    %c0_i32 = arith.constant 0 : i32
    %c0_i32_0 = arith.constant 0 : i32
    %c0_i32_1 = arith.constant 0 : i32
    return %arg0, %c0_i32, %c0_i32_0 : i32, i32, i32
  }
}

module attributes {stable_mosaic.version = 11 : i64} {
  func.func @_bn_relu_conv1_kernel(%arg0: i32, %arg1: memref<64x128xf32, #tpu.memory_space<vmem>>, %arg2: memref<1x128xf32, #tpu.memory_space<vmem>>, %arg3: memref<1x128xf32, #tpu.memory_space<vmem>>, %arg4: memref<128x128xf32, #tpu.memory_space<vmem>>, %arg5: memref<64x128xf32, #tpu.memory_space<vmem>>, %arg6: memref<1x1x128xf32, #tpu.memory_space<vmem>>, %arg7: memref<1x1x128xf32, #tpu.memory_space<vmem>>) attributes {dimension_semantics = [#tpu.dimension_semantics<parallel>], iteration_bounds = array<i64: 2>, scalar_prefetch = 0 : i64, scratch_operands = 0 : i64, tpu.core_type = #tpu.core_type<tc>, window_params = [{transform_indices = @transform_0, window_bounds = array<i64: 64, 128>}, {pipeline_mode = #tpu.pipeline_mode<synchronous>, transform_indices = @transform_1, window_bounds = array<i64: 1, 128>}, {pipeline_mode = #tpu.pipeline_mode<synchronous>, transform_indices = @transform_2, window_bounds = array<i64: 1, 128>}, {pipeline_mode = #tpu.pipeline_mode<synchronous>, transform_indices = @transform_3, window_bounds = array<i64: 128, 128>}, {transform_indices = @transform_4, window_bounds = array<i64: 64, 128>}, {transform_indices = @transform_5, window_bounds = array<i64: 1, 1, 128>}, {transform_indices = @transform_6, window_bounds = array<i64: 1, 1, 128>}]} {
    %c0 = arith.constant 0 : index
    %c0_0 = arith.constant 0 : index
    %0 = vector.load %arg1[%c0, %c0_0] : memref<64x128xf32, #tpu.memory_space<vmem>>, vector<64x128xf32>
    %c0_1 = arith.constant 0 : index
    %c0_2 = arith.constant 0 : index
    %1 = vector.load %arg2[%c0_1, %c0_2] : memref<1x128xf32, #tpu.memory_space<vmem>>, vector<1x128xf32>
    %2 = vector.broadcast %1 : vector<1x128xf32> to vector<64x128xf32>
    %3 = arith.mulf %0, %2 : vector<64x128xf32>
    %c0_3 = arith.constant 0 : index
    %c0_4 = arith.constant 0 : index
    %4 = vector.load %arg3[%c0_3, %c0_4] : memref<1x128xf32, #tpu.memory_space<vmem>>, vector<1x128xf32>
    %5 = vector.broadcast %4 : vector<1x128xf32> to vector<64x128xf32>
    %6 = arith.addf %3, %5 : vector<64x128xf32>
    %cst = arith.constant 0.000000e+00 : f32
    %7 = vector.broadcast %cst : f32 to vector<64x128xf32>
    %8 = arith.maximumf %6, %7 : vector<64x128xf32>
    %c0_5 = arith.constant 0 : index
    %c0_6 = arith.constant 0 : index
    %9 = vector.load %arg4[%c0_5, %c0_6] : memref<128x128xf32, #tpu.memory_space<vmem>>, vector<128x128xf32>
    %cst_7 = arith.constant dense<0.000000e+00> : vector<64x128xf32>
    %10 = tpu.matmul %8, %9, %cst_7 {dimension_numbers = #tpu.dot_dimension_numbers<[1], [0], [0], [1], [0, 0, 1, 1], [], []>} : vector<64x128xf32>, vector<128x128xf32>, vector<64x128xf32> -> vector<64x128xf32>
    %c0_8 = arith.constant 0 : index
    %c0_9 = arith.constant 0 : index
    %11 = vector.load %arg5[%c0_8, %c0_9] : memref<64x128xf32, #tpu.memory_space<vmem>>, vector<64x128xf32>
    tpu.vector_store %arg5[%c0_8, %c0_9], %10 {strides = array<i32>} : memref<64x128xf32, #tpu.memory_space<vmem>>, vector<64x128xf32>,
    %cst_10 = arith.constant dense<0.000000e+00> : vector<128xf32>
    %12 = vector.multi_reduction <add>, %10, %cst_10 [0] : vector<64x128xf32> to vector<128xf32>
    %13 = vector.shape_cast %12 : vector<128xf32> to vector<1x128xf32>
    %c0_11 = arith.constant 0 : index
    %c0_12 = arith.constant 0 : index
    %c0_13 = arith.constant 0 : index
    %14 = vector.load %arg6[%c0_11, %c0_12, %c0_13] : memref<1x1x128xf32, #tpu.memory_space<vmem>>, vector<1x1x128xf32>
    %15 = vector.shape_cast %14 : vector<1x1x128xf32> to vector<1x128xf32>
    %16 = vector.shape_cast %13 : vector<1x128xf32> to vector<1x1x128xf32>
    tpu.vector_store %arg6[%c0_11, %c0_12, %c0_13], %16 {strides = array<i32>} : memref<1x1x128xf32, #tpu.memory_space<vmem>>, vector<1x1x128xf32>,
    %17 = arith.mulf %10, %10 : vector<64x128xf32>
    %cst_14 = arith.constant dense<0.000000e+00> : vector<128xf32>
    %18 = vector.multi_reduction <add>, %17, %cst_14 [0] : vector<64x128xf32> to vector<128xf32>
    %19 = vector.shape_cast %18 : vector<128xf32> to vector<1x128xf32>
    %c0_15 = arith.constant 0 : index
    %c0_16 = arith.constant 0 : index
    %c0_17 = arith.constant 0 : index
    %20 = vector.load %arg7[%c0_15, %c0_16, %c0_17] : memref<1x1x128xf32, #tpu.memory_space<vmem>>, vector<1x1x128xf32>
    %21 = vector.shape_cast %20 : vector<1x1x128xf32> to vector<1x128xf32>
    %22 = vector.shape_cast %19 : vector<1x128xf32> to vector<1x1x128xf32>
    tpu.vector_store %arg7[%c0_15, %c0_16, %c0_17], %22 {strides = array<i32>} : memref<1x1x128xf32, #tpu.memory_space<vmem>>, vector<1x1x128xf32>,
    return
  }
  func.func @transform_0(%arg0: i32) -> (i32, i32) {
    %c0_i32 = arith.constant 0 : i32
    %c0_i32_0 = arith.constant 0 : i32
    return %arg0, %c0_i32 : i32, i32
  }
  func.func @transform_1(%arg0: i32) -> (i32, i32) {
    %c0_i32 = arith.constant 0 : i32
    %c0_i32_0 = arith.constant 0 : i32
    %c0_i32_1 = arith.constant 0 : i32
    return %c0_i32, %c0_i32_0 : i32, i32
  }
  func.func @transform_2(%arg0: i32) -> (i32, i32) {
    %c0_i32 = arith.constant 0 : i32
    %c0_i32_0 = arith.constant 0 : i32
    %c0_i32_1 = arith.constant 0 : i32
    return %c0_i32, %c0_i32_0 : i32, i32
  }
  func.func @transform_3(%arg0: i32) -> (i32, i32) {
    %c0_i32 = arith.constant 0 : i32
    %c0_i32_0 = arith.constant 0 : i32
    %c0_i32_1 = arith.constant 0 : i32
    return %c0_i32, %c0_i32_0 : i32, i32
  }
  func.func @transform_4(%arg0: i32) -> (i32, i32) {
    %c0_i32 = arith.constant 0 : i32
    %c0_i32_0 = arith.constant 0 : i32
    return %arg0, %c0_i32 : i32, i32
  }
  func.func @transform_5(%arg0: i32) -> (i32, i32, i32) {
    %c0_i32 = arith.constant 0 : i32
    %c0_i32_0 = arith.constant 0 : i32
    %c0_i32_1 = arith.constant 0 : i32
    return %arg0, %c0_i32, %c0_i32_0 : i32, i32, i32
  }
  func.func @transform_6(%arg0: i32) -> (i32, i32, i32) {
    %c0_i32 = arith.constant 0 : i32
    %c0_i32_0 = arith.constant 0 : i32
    %c0_i32_1 = arith.constant 0 : i32
    return %arg0, %c0_i32, %c0_i32_0 : i32, i32, i32
  }
}

module attributes {stable_mosaic.version = 11 : i64} {
  func.func @_conv3x3_kernel(%arg0: i32, %arg1: memref<1x64x128xf32, #tpu.memory_space<vmem>>, %arg2: memref<1x128xf32, #tpu.memory_space<vmem>>, %arg3: memref<1x128xf32, #tpu.memory_space<vmem>>, %arg4: memref<1152x128xf32, #tpu.memory_space<vmem>>, %arg5: memref<1x64x128xf32, #tpu.memory_space<vmem>>, %arg6: memref<1x1x128xf32, #tpu.memory_space<vmem>>, %arg7: memref<1x1x128xf32, #tpu.memory_space<vmem>>) attributes {dimension_semantics = [#tpu.dimension_semantics<parallel>], iteration_bounds = array<i64: 2>, scalar_prefetch = 0 : i64, scratch_operands = 0 : i64, tpu.core_type = #tpu.core_type<tc>, window_params = [{transform_indices = @transform_0, window_bounds = array<i64: 1, 64, 128>}, {pipeline_mode = #tpu.pipeline_mode<synchronous>, transform_indices = @transform_1, window_bounds = array<i64: 1, 128>}, {pipeline_mode = #tpu.pipeline_mode<synchronous>, transform_indices = @transform_2, window_bounds = array<i64: 1, 128>}, {pipeline_mode = #tpu.pipeline_mode<synchronous>, transform_indices = @transform_3, window_bounds = array<i64: 1152, 128>}, {transform_indices = @transform_4, window_bounds = array<i64: 1, 64, 128>}, {transform_indices = @transform_5, window_bounds = array<i64: 1, 1, 128>}, {transform_indices = @transform_6, window_bounds = array<i64: 1, 1, 128>}]} {
    %c0 = arith.constant 0 : index
    %c0_0 = arith.constant 0 : index
    %c0_1 = arith.constant 0 : index
    %0 = vector.load %arg1[%c0, %c0_0, %c0_1] : memref<1x64x128xf32, #tpu.memory_space<vmem>>, vector<1x64x128xf32>
    %1 = vector.shape_cast %0 : vector<1x64x128xf32> to vector<64x128xf32>
    %c0_2 = arith.constant 0 : index
    %c0_3 = arith.constant 0 : index
    %2 = vector.load %arg2[%c0_2, %c0_3] : memref<1x128xf32, #tpu.memory_space<vmem>>, vector<1x128xf32>
    %3 = vector.broadcast %2 : vector<1x128xf32> to vector<64x128xf32>
    %4 = arith.mulf %1, %3 : vector<64x128xf32>
    %c0_4 = arith.constant 0 : index
    %c0_5 = arith.constant 0 : index
    %5 = vector.load %arg3[%c0_4, %c0_5] : memref<1x128xf32, #tpu.memory_space<vmem>>, vector<1x128xf32>
    %6 = vector.broadcast %5 : vector<1x128xf32> to vector<64x128xf32>
    %7 = arith.addf %4, %6 : vector<64x128xf32>
    %cst = arith.constant 0.000000e+00 : f32
    %8 = vector.broadcast %cst : f32 to vector<64x128xf32>
    %9 = arith.maximumf %7, %8 : vector<64x128xf32>
    %10 = tpu.iota {dimensions = array<i32: 0>} : vector<64x1xi32>
    %11 = arith.sitofp %10 : vector<64x1xi32> to vector<64x1xf32>
    %cst_6 = arith.constant 5.000000e-01 : f32
    %12 = vector.broadcast %cst_6 : f32 to vector<64x1xf32>
    %13 = arith.addf %11, %12 : vector<64x1xf32>
    %cst_7 = arith.constant 1.250000e-01 : f32
    %14 = vector.broadcast %cst_7 : f32 to vector<64x1xf32>
    %15 = arith.mulf %13, %14 : vector<64x1xf32>
    %16 = math.floor %15 : vector<64x1xf32>
    %cst_8 = arith.constant 8.000000e+00 : f32
    %17 = vector.broadcast %cst_8 : f32 to vector<64x1xf32>
    %18 = arith.mulf %16, %17 : vector<64x1xf32>
    %19 = arith.subf %11, %18 : vector<64x1xf32>
    %c9_i32 = arith.constant 9 : i32
    %20 = tpu.dynamic_rotate %9 by %c9_i32 dim 0 : vector<64x128xf32>, i32 -> vector<64x128xf32>
    %cst_9 = arith.constant 1.000000e+00 : f32
    %21 = vector.broadcast %cst_9 : f32 to vector<64x1xf32>
    %22 = arith.cmpf oge, %16, %21 : vector<64x1xf32>
    %cst_10 = arith.constant 1.000000e+00 : f32
    %23 = vector.broadcast %cst_10 : f32 to vector<64x1xf32>
    %24 = arith.cmpf oge, %19, %23 : vector<64x1xf32>
    %25 = arith.andi %22, %24 : vector<64x1xi1>
    %cst_11 = arith.constant 0.000000e+00 : f32
    %26 = vector.shape_cast %25 : vector<64x1xi1> to vector<64x1xi1>
    %27 = vector.broadcast %26 : vector<64x1xi1> to vector<64x128xi1>
    %28 = vector.broadcast %cst_11 : f32 to vector<64x128xf32>
    %29 = arith.select %27, %20, %28 : vector<64x128xi1>, vector<64x128xf32>
    %c8_i32 = arith.constant 8 : i32
    %30 = tpu.dynamic_rotate %9 by %c8_i32 dim 0 : vector<64x128xf32>, i32 -> vector<64x128xf32>
    %cst_12 = arith.constant 1.000000e+00 : f32
    %31 = vector.broadcast %cst_12 : f32 to vector<64x1xf32>
    %32 = arith.cmpf oge, %16, %31 : vector<64x1xf32>
    %cst_13 = arith.constant 0.000000e+00 : f32
    %33 = vector.shape_cast %32 : vector<64x1xi1> to vector<64x1xi1>
    %34 = vector.broadcast %33 : vector<64x1xi1> to vector<64x128xi1>
    %35 = vector.broadcast %cst_13 : f32 to vector<64x128xf32>
    %36 = arith.select %34, %30, %35 : vector<64x128xi1>, vector<64x128xf32>
    %c7_i32 = arith.constant 7 : i32
    %37 = tpu.dynamic_rotate %9 by %c7_i32 dim 0 : vector<64x128xf32>, i32 -> vector<64x128xf32>
    %cst_14 = arith.constant 1.000000e+00 : f32
    %38 = vector.broadcast %cst_14 : f32 to vector<64x1xf32>
    %39 = arith.cmpf oge, %16, %38 : vector<64x1xf32>
    %cst_15 = arith.constant 7.000000e+00 : f32
    %40 = vector.broadcast %cst_15 : f32 to vector<64x1xf32>
    %41 = arith.cmpf olt, %19, %40 : vector<64x1xf32>
    %42 = arith.andi %39, %41 : vector<64x1xi1>
    %cst_16 = arith.constant 0.000000e+00 : f32
    %43 = vector.shape_cast %42 : vector<64x1xi1> to vector<64x1xi1>
    %44 = vector.broadcast %43 : vector<64x1xi1> to vector<64x128xi1>
    %45 = vector.broadcast %cst_16 : f32 to vector<64x128xf32>
    %46 = arith.select %44, %37, %45 : vector<64x128xi1>, vector<64x128xf32>
    %c1_i32 = arith.constant 1 : i32
    %47 = tpu.dynamic_rotate %9 by %c1_i32 dim 0 : vector<64x128xf32>, i32 -> vector<64x128xf32>
    %cst_17 = arith.constant 1.000000e+00 : f32
    %48 = vector.broadcast %cst_17 : f32 to vector<64x1xf32>
    %49 = arith.cmpf oge, %19, %48 : vector<64x1xf32>
    %cst_18 = arith.constant 0.000000e+00 : f32
    %50 = vector.shape_cast %49 : vector<64x1xi1> to vector<64x1xi1>
    %51 = vector.broadcast %50 : vector<64x1xi1> to vector<64x128xi1>
    %52 = vector.broadcast %cst_18 : f32 to vector<64x128xf32>
    %53 = arith.select %51, %47, %52 : vector<64x128xi1>, vector<64x128xf32>
    %c63_i32 = arith.constant 63 : i32
    %54 = tpu.dynamic_rotate %9 by %c63_i32 dim 0 : vector<64x128xf32>, i32 -> vector<64x128xf32>
    %cst_19 = arith.constant 7.000000e+00 : f32
    %55 = vector.broadcast %cst_19 : f32 to vector<64x1xf32>
    %56 = arith.cmpf olt, %19, %55 : vector<64x1xf32>
    %cst_20 = arith.constant 0.000000e+00 : f32
    %57 = vector.shape_cast %56 : vector<64x1xi1> to vector<64x1xi1>
    %58 = vector.broadcast %57 : vector<64x1xi1> to vector<64x128xi1>
    %59 = vector.broadcast %cst_20 : f32 to vector<64x128xf32>
    %60 = arith.select %58, %54, %59 : vector<64x128xi1>, vector<64x128xf32>
    %c57_i32 = arith.constant 57 : i32
    %61 = tpu.dynamic_rotate %9 by %c57_i32 dim 0 : vector<64x128xf32>, i32 -> vector<64x128xf32>
    %cst_21 = arith.constant 7.000000e+00 : f32
    %62 = vector.broadcast %cst_21 : f32 to vector<64x1xf32>
    %63 = arith.cmpf olt, %16, %62 : vector<64x1xf32>
    %cst_22 = arith.constant 1.000000e+00 : f32
    %64 = vector.broadcast %cst_22 : f32 to vector<64x1xf32>
    %65 = arith.cmpf oge, %19, %64 : vector<64x1xf32>
    %66 = arith.andi %63, %65 : vector<64x1xi1>
    %cst_23 = arith.constant 0.000000e+00 : f32
    %67 = vector.shape_cast %66 : vector<64x1xi1> to vector<64x1xi1>
    %68 = vector.broadcast %67 : vector<64x1xi1> to vector<64x128xi1>
    %69 = vector.broadcast %cst_23 : f32 to vector<64x128xf32>
    %70 = arith.select %68, %61, %69 : vector<64x128xi1>, vector<64x128xf32>
    %c56_i32 = arith.constant 56 : i32
    %71 = tpu.dynamic_rotate %9 by %c56_i32 dim 0 : vector<64x128xf32>, i32 -> vector<64x128xf32>
    %cst_24 = arith.constant 7.000000e+00 : f32
    %72 = vector.broadcast %cst_24 : f32 to vector<64x1xf32>
    %73 = arith.cmpf olt, %16, %72 : vector<64x1xf32>
    %cst_25 = arith.constant 0.000000e+00 : f32
    %74 = vector.shape_cast %73 : vector<64x1xi1> to vector<64x1xi1>
    %75 = vector.broadcast %74 : vector<64x1xi1> to vector<64x128xi1>
    %76 = vector.broadcast %cst_25 : f32 to vector<64x128xf32>
    %77 = arith.select %75, %71, %76 : vector<64x128xi1>, vector<64x128xf32>
    %c55_i32 = arith.constant 55 : i32
    %78 = tpu.dynamic_rotate %9 by %c55_i32 dim 0 : vector<64x128xf32>, i32 -> vector<64x128xf32>
    %cst_26 = arith.constant 7.000000e+00 : f32
    %79 = vector.broadcast %cst_26 : f32 to vector<64x1xf32>
    %80 = arith.cmpf olt, %16, %79 : vector<64x1xf32>
    %cst_27 = arith.constant 7.000000e+00 : f32
    %81 = vector.broadcast %cst_27 : f32 to vector<64x1xf32>
    %82 = arith.cmpf olt, %19, %81 : vector<64x1xf32>
    %83 = arith.andi %80, %82 : vector<64x1xi1>
    %cst_28 = arith.constant 0.000000e+00 : f32
    %84 = vector.shape_cast %83 : vector<64x1xi1> to vector<64x1xi1>
    %85 = vector.broadcast %84 : vector<64x1xi1> to vector<64x128xi1>
    %86 = vector.broadcast %cst_28 : f32 to vector<64x128xf32>
    %87 = arith.select %85, %78, %86 : vector<64x128xi1>, vector<64x128xf32>
    %88 = tpu.concatenate %29, %36, %46, %53, %9, %60, %70, %77, %87 in 1 : vector<64x128xf32>, vector<64x128xf32>, vector<64x128xf32>, vector<64x128xf32>, vector<64x128xf32>, vector<64x128xf32>, vector<64x128xf32>, vector<64x128xf32>, vector<64x128xf32> -> vector<64x1152xf32>
    %c0_29 = arith.constant 0 : index
    %c0_30 = arith.constant 0 : index
    %89 = vector.load %arg4[%c0_29, %c0_30] : memref<1152x128xf32, #tpu.memory_space<vmem>>, vector<1152x128xf32>
    %cst_31 = arith.constant dense<0.000000e+00> : vector<64x128xf32>
    %90 = tpu.matmul %88, %89, %cst_31 {dimension_numbers = #tpu.dot_dimension_numbers<[1], [0], [0], [1], [0, 0, 1, 1], [], []>} : vector<64x1152xf32>, vector<1152x128xf32>, vector<64x128xf32> -> vector<64x128xf32>
    %c0_32 = arith.constant 0 : index
    %c0_33 = arith.constant 0 : index
    %c0_34 = arith.constant 0 : index
    %91 = vector.load %arg5[%c0_32, %c0_33, %c0_34] : memref<1x64x128xf32, #tpu.memory_space<vmem>>, vector<1x64x128xf32>
    %92 = vector.shape_cast %91 : vector<1x64x128xf32> to vector<64x128xf32>
    %93 = vector.shape_cast %90 : vector<64x128xf32> to vector<1x64x128xf32>
    tpu.vector_store %arg5[%c0_32, %c0_33, %c0_34], %93 {strides = array<i32>} : memref<1x64x128xf32, #tpu.memory_space<vmem>>, vector<1x64x128xf32>,
    %cst_35 = arith.constant dense<0.000000e+00> : vector<128xf32>
    %94 = vector.multi_reduction <add>, %90, %cst_35 [0] : vector<64x128xf32> to vector<128xf32>
    %95 = vector.shape_cast %94 : vector<128xf32> to vector<1x128xf32>
    %c0_36 = arith.constant 0 : index
    %c0_37 = arith.constant 0 : index
    %c0_38 = arith.constant 0 : index
    %96 = vector.load %arg6[%c0_36, %c0_37, %c0_38] : memref<1x1x128xf32, #tpu.memory_space<vmem>>, vector<1x1x128xf32>
    %97 = vector.shape_cast %96 : vector<1x1x128xf32> to vector<1x128xf32>
    %98 = vector.shape_cast %95 : vector<1x128xf32> to vector<1x1x128xf32>
    tpu.vector_store %arg6[%c0_36, %c0_37, %c0_38], %98 {strides = array<i32>} : memref<1x1x128xf32, #tpu.memory_space<vmem>>, vector<1x1x128xf32>,
    %99 = arith.mulf %90, %90 : vector<64x128xf32>
    %cst_39 = arith.constant dense<0.000000e+00> : vector<128xf32>
    %100 = vector.multi_reduction <add>, %99, %cst_39 [0] : vector<64x128xf32> to vector<128xf32>
    %101 = vector.shape_cast %100 : vector<128xf32> to vector<1x128xf32>
    %c0_40 = arith.constant 0 : index
    %c0_41 = arith.constant 0 : index
    %c0_42 = arith.constant 0 : index
    %102 = vector.load %arg7[%c0_40, %c0_41, %c0_42] : memref<1x1x128xf32, #tpu.memory_space<vmem>>, vector<1x1x128xf32>
    %103 = vector.shape_cast %102 : vector<1x1x128xf32> to vector<1x128xf32>
    %104 = vector.shape_cast %101 : vector<1x128xf32> to vector<1x1x128xf32>
    tpu.vector_store %arg7[%c0_40, %c0_41, %c0_42], %104 {strides = array<i32>} : memref<1x1x128xf32, #tpu.memory_space<vmem>>, vector<1x1x128xf32>,
    return
  }
  func.func @transform_0(%arg0: i32) -> (i32, i32, i32) {
    %c0_i32 = arith.constant 0 : i32
    %c0_i32_0 = arith.constant 0 : i32
    %c0_i32_1 = arith.constant 0 : i32
    return %arg0, %c0_i32, %c0_i32_0 : i32, i32, i32
  }
  func.func @transform_1(%arg0: i32) -> (i32, i32) {
    %c0_i32 = arith.constant 0 : i32
    %c0_i32_0 = arith.constant 0 : i32
    %c0_i32_1 = arith.constant 0 : i32
    return %c0_i32, %c0_i32_0 : i32, i32
  }
  func.func @transform_2(%arg0: i32) -> (i32, i32) {
    %c0_i32 = arith.constant 0 : i32
    %c0_i32_0 = arith.constant 0 : i32
    %c0_i32_1 = arith.constant 0 : i32
    return %c0_i32, %c0_i32_0 : i32, i32
  }
  func.func @transform_3(%arg0: i32) -> (i32, i32) {
    %c0_i32 = arith.constant 0 : i32
    %c0_i32_0 = arith.constant 0 : i32
    %c0_i32_1 = arith.constant 0 : i32
    return %c0_i32, %c0_i32_0 : i32, i32
  }
  func.func @transform_4(%arg0: i32) -> (i32, i32, i32) {
    %c0_i32 = arith.constant 0 : i32
    %c0_i32_0 = arith.constant 0 : i32
    %c0_i32_1 = arith.constant 0 : i32
    return %arg0, %c0_i32, %c0_i32_0 : i32, i32, i32
  }
  func.func @transform_5(%arg0: i32) -> (i32, i32, i32) {
    %c0_i32 = arith.constant 0 : i32
    %c0_i32_0 = arith.constant 0 : i32
    %c0_i32_1 = arith.constant 0 : i32
    return %arg0, %c0_i32, %c0_i32_0 : i32, i32, i32
  }
  func.func @transform_6(%arg0: i32) -> (i32, i32, i32) {
    %c0_i32 = arith.constant 0 : i32
    %c0_i32_0 = arith.constant 0 : i32
    %c0_i32_1 = arith.constant 0 : i32
    return %arg0, %c0_i32, %c0_i32_0 : i32, i32, i32
  }
}

module attributes {stable_mosaic.version = 11 : i64} {
  func.func @_residual_ds_kernel(%arg0: i32, %arg1: memref<64x128xf32, #tpu.memory_space<vmem>>, %arg2: memref<1x128xf32, #tpu.memory_space<vmem>>, %arg3: memref<1x128xf32, #tpu.memory_space<vmem>>, %arg4: memref<64x128xf32, #tpu.memory_space<vmem>>, %arg5: memref<1x128xf32, #tpu.memory_space<vmem>>, %arg6: memref<1x128xf32, #tpu.memory_space<vmem>>, %arg7: memref<64x128xf32, #tpu.memory_space<vmem>>) attributes {dimension_semantics = [#tpu.dimension_semantics<parallel>], iteration_bounds = array<i64: 2>, scalar_prefetch = 0 : i64, scratch_operands = 0 : i64, tpu.core_type = #tpu.core_type<tc>, window_params = [{transform_indices = @transform_0, window_bounds = array<i64: 64, 128>}, {pipeline_mode = #tpu.pipeline_mode<synchronous>, transform_indices = @transform_1, window_bounds = array<i64: 1, 128>}, {pipeline_mode = #tpu.pipeline_mode<synchronous>, transform_indices = @transform_2, window_bounds = array<i64: 1, 128>}, {transform_indices = @transform_3, window_bounds = array<i64: 64, 128>}, {pipeline_mode = #tpu.pipeline_mode<synchronous>, transform_indices = @transform_4, window_bounds = array<i64: 1, 128>}, {pipeline_mode = #tpu.pipeline_mode<synchronous>, transform_indices = @transform_5, window_bounds = array<i64: 1, 128>}, {transform_indices = @transform_6, window_bounds = array<i64: 64, 128>}]} {
    %c0 = arith.constant 0 : index
    %c0_0 = arith.constant 0 : index
    %0 = vector.load %arg1[%c0, %c0_0] : memref<64x128xf32, #tpu.memory_space<vmem>>, vector<64x128xf32>
    %c0_1 = arith.constant 0 : index
    %c0_2 = arith.constant 0 : index
    %1 = vector.load %arg2[%c0_1, %c0_2] : memref<1x128xf32, #tpu.memory_space<vmem>>, vector<1x128xf32>
    %2 = vector.broadcast %1 : vector<1x128xf32> to vector<64x128xf32>
    %3 = arith.mulf %0, %2 : vector<64x128xf32>
    %c0_3 = arith.constant 0 : index
    %c0_4 = arith.constant 0 : index
    %4 = vector.load %arg3[%c0_3, %c0_4] : memref<1x128xf32, #tpu.memory_space<vmem>>, vector<1x128xf32>
    %5 = vector.broadcast %4 : vector<1x128xf32> to vector<64x128xf32>
    %6 = arith.addf %3, %5 : vector<64x128xf32>
    %c0_5 = arith.constant 0 : index
    %c0_6 = arith.constant 0 : index
    %7 = vector.load %arg4[%c0_5, %c0_6] : memref<64x128xf32, #tpu.memory_space<vmem>>, vector<64x128xf32>
    %c0_7 = arith.constant 0 : index
    %c0_8 = arith.constant 0 : index
    %8 = vector.load %arg5[%c0_7, %c0_8] : memref<1x128xf32, #tpu.memory_space<vmem>>, vector<1x128xf32>
    %9 = vector.broadcast %8 : vector<1x128xf32> to vector<64x128xf32>
    %10 = arith.mulf %7, %9 : vector<64x128xf32>
    %11 = arith.addf %6, %10 : vector<64x128xf32>
    %c0_9 = arith.constant 0 : index
    %c0_10 = arith.constant 0 : index
    %12 = vector.load %arg6[%c0_9, %c0_10] : memref<1x128xf32, #tpu.memory_space<vmem>>, vector<1x128xf32>
    %13 = vector.broadcast %12 : vector<1x128xf32> to vector<64x128xf32>
    %14 = arith.addf %11, %13 : vector<64x128xf32>
    %cst = arith.constant 0.000000e+00 : f32
    %15 = vector.broadcast %cst : f32 to vector<64x128xf32>
    %16 = arith.maximumf %14, %15 : vector<64x128xf32>
    %c0_11 = arith.constant 0 : index
    %c0_12 = arith.constant 0 : index
    %17 = vector.load %arg7[%c0_11, %c0_12] : memref<64x128xf32, #tpu.memory_space<vmem>>, vector<64x128xf32>
    tpu.vector_store %arg7[%c0_11, %c0_12], %16 {strides = array<i32>} : memref<64x128xf32, #tpu.memory_space<vmem>>, vector<64x128xf32>,
    return
  }
  func.func @transform_0(%arg0: i32) -> (i32, i32) {
    %c0_i32 = arith.constant 0 : i32
    %c0_i32_0 = arith.constant 0 : i32
    return %arg0, %c0_i32 : i32, i32
  }
  func.func @transform_1(%arg0: i32) -> (i32, i32) {
    %c0_i32 = arith.constant 0 : i32
    %c0_i32_0 = arith.constant 0 : i32
    %c0_i32_1 = arith.constant 0 : i32
    return %c0_i32, %c0_i32_0 : i32, i32
  }
  func.func @transform_2(%arg0: i32) -> (i32, i32) {
    %c0_i32 = arith.constant 0 : i32
    %c0_i32_0 = arith.constant 0 : i32
    %c0_i32_1 = arith.constant 0 : i32
    return %c0_i32, %c0_i32_0 : i32, i32
  }
  func.func @transform_3(%arg0: i32) -> (i32, i32) {
    %c0_i32 = arith.constant 0 : i32
    %c0_i32_0 = arith.constant 0 : i32
    return %arg0, %c0_i32 : i32, i32
  }
  func.func @transform_4(%arg0: i32) -> (i32, i32) {
    %c0_i32 = arith.constant 0 : i32
    %c0_i32_0 = arith.constant 0 : i32
    %c0_i32_1 = arith.constant 0 : i32
    return %c0_i32, %c0_i32_0 : i32, i32
  }
  func.func @transform_5(%arg0: i32) -> (i32, i32) {
    %c0_i32 = arith.constant 0 : i32
    %c0_i32_0 = arith.constant 0 : i32
    %c0_i32_1 = arith.constant 0 : i32
    return %c0_i32, %c0_i32_0 : i32, i32
  }
  func.func @transform_6(%arg0: i32) -> (i32, i32) {
    %c0_i32 = arith.constant 0 : i32
    %c0_i32_0 = arith.constant 0 : i32
    return %arg0, %c0_i32 : i32, i32
  }
}

</mosaic_0001>

<llo_original>
// kernel: block50_forward.4
$region0: #{block50_forward.4}
  #allocation0 [shape = 'u32[]', space=smem, size = 0x4, offset = 0x4, fixed_abs, tag = 'smem constant byte address 0x4 - core index']
  #allocation1 [shape = 'u32[72,128]{1,0:T(1,128)}', space=vmem, size = 0x9000, scoped, tag = 'internal scratch']
  %s0 = inlined_call_operand.vmem [shape: f32[128,128], index: 0, kind: input, shape index: {}]
  %s1 = inlined_call_operand.vmem [shape: f32[128,128], index: 1, kind: input, shape index: {}]
  %s2 = inlined_call_operand.vmem [shape: f32[128,128], index: 2, kind: input, shape index: {}]
  %s3 = inlined_call_operand.vmem [shape: f32[128,128], index: 3, kind: output, shape index: {0}]
  %s4 = inlined_call_operand.vmem [shape: f32[2,1,128], index: 4, kind: output, shape index: {1}]
  %s5 = inlined_call_operand.vmem [shape: f32[2,1,128], index: 5, kind: output, shape index: {2}]
  %s6 = inlined_call_operand.vmem [shape: f32[128,128], index: 6, kind: output, shape index: {3}]
  %s7 = inlined_call_operand.vmem [shape: f32[2,1,128], index: 7, kind: output, shape index: {4}]
  %s8 = inlined_call_operand.vmem [shape: f32[2,1,128], index: 8, kind: output, shape index: {5}]
  %9 = xla_tuple %s3, %s4, %s5, %s6, %s7, %s8
  %s10 = sld [smem:[#allocation0]]
  $region85: #{block50_forward.4} parent=0
    _
  %s12 = ssub.s32 1, %s10
  %s13 = scalar_select 0, %s12, %s10
  loop: start=0, step=1, limit=4
  $region2: #{block50_forward.4} parent=0 // loop_pre_header
    _
  $region3: #{block50_forward.4} parent=0 // loop_header
    %s15 = sphi 0, %s19
    %p16 = scmp.ge.s32.totalorder %s15, 4
    %s25 = sphi 0, %s27
    %s28 = sphi 0, %s25
    %s29 = sphi 0, %s28
    %s45 = sphi 0, %s29
    %s49 = sphi 0, %s49
    %s51 = sphi 0, %s49
    %s52 = sphi 0, %s51
    %s66 = sphi 0, %s52
    %s70 = sphi 0, %s70
    %s72 = sphi 0, %s70
    %s73 = sphi 0, %s72
    %s87 = sphi 0, %s73
    %s93 = sphi 0, %s95
    %s96 = sphi 0, %s93
    %s97 = sphi 0, %s96
    %s113 = sphi 0, %s97
    %s119 = sphi 0, %s121
    %s122 = sphi 0, %s119
    %s123 = sphi 0, %s122
    %s139 = sphi 0, %s123
    %s145 = sphi 0, %s147
    %s148 = sphi 0, %s145
    %s149 = sphi 0, %s148
    %s165 = sphi 0, %s149
    %s171 = sphi 0, %s173
    %s174 = sphi 0, %s171
    %s175 = sphi 0, %s174
    %s191 = sphi 0, %s175
    %s197 = sphi 0, %s199
    %s200 = sphi 0, %s197
    %s201 = sphi 0, %s200
    %s217 = sphi 0, %s201
    %s223 = sphi 0, %s225
    %s226 = sphi 0, %s223
    %s227 = sphi 0, %s226
    %s243 = sphi 0, %s227
  $region4: #{block50_forward.4} parent=0 // loop_header_branch
    %18 = sbr.rel (%p16) target = $region8
  $region5: #{block50_forward.4} parent=0 // loop_body
    %s20 = ssub.s32 %s15, 1
    %s21 = ssub.s32 %s15, 2
    %s22 = sadd.s32 %s15, 1
    %s23 = ssub.s32 %s15, %s22
    %p24 = scmp.eq.s32.totalorder %s23, 0
    %s26 = sadd.s32 %s25, 1
    %s27 = scalar_select %p24, %s25, %s26
    %p30 = pneg %p24
    %p31 = scmp.eq.s32.totalorder %s15, 1
    %p32 = por %p30, %p31
    %p33 = scmp.ne.s32.totalorder %s25, %s28
    %p34 = scmp.eq.s32.totalorder %s15, 0
    %p35 = por %p33, %p34
    %p36 = scmp.ne.s32.totalorder %s25, %s28
    %p37 = scmp.eq.s32.totalorder %s20, 1
    %p38 = por %p36, %p37
    %p39 = scmp.ne.s32.totalorder %s28, %s29
    %p40 = scmp.eq.s32.totalorder %s20, 0
    %p41 = por %p39, %p40
    %p42 = scmp.ne.s32.totalorder %s28, %s29
    %p43 = scmp.eq.s32.totalorder %s21, 1
    %p44 = por %p42, %p43
    %p46 = scmp.ne.s32.totalorder %s29, %s45
    %p47 = scmp.eq.s32.totalorder %s21, 0
    %p48 = por %p46, %p47
    %s50 = sadd.s32 %s49, 1
    %p53 = scmp.eq.s32.totalorder %s15, 1
    %p54 = scmp.ne.s32.totalorder %s49, %s51
    %p55 = scmp.eq.s32.totalorder %s15, 0
    %p56 = por %p54, %p55
    %p57 = scmp.ne.s32.totalorder %s49, %s51
    %p58 = scmp.eq.s32.totalorder %s20, 1
    %p59 = por %p57, %p58
    %p60 = scmp.ne.s32.totalorder %s51, %s52
    %p61 = scmp.eq.s32.totalorder %s20, 0
    %p62 = por %p60, %p61
    %p63 = scmp.ne.s32.totalorder %s51, %s52
    %p64 = scmp.eq.s32.totalorder %s21, 1
    %p65 = por %p63, %p64
    %p67 = scmp.ne.s32.totalorder %s52, %s66
    %p68 = scmp.eq.s32.totalorder %s21, 0
    %p69 = por %p67, %p68
    %s71 = sadd.s32 %s70, 1
    %p74 = scmp.eq.s32.totalorder %s15, 1
    %p75 = scmp.ne.s32.totalorder %s70, %s72
    %p76 = scmp.eq.s32.totalorder %s15, 0
    %p77 = por %p75, %p76
    %p78 = scmp.ne.s32.totalorder %s70, %s72
    %p79 = scmp.eq.s32.totalorder %s20, 1
    %p80 = por %p78, %p79
    %p81 = scmp.ne.s32.totalorder %s72, %s73
    %p82 = scmp.eq.s32.totalorder %s20, 0
    %p83 = por %p81, %p82
    %p84 = scmp.ne.s32.totalorder %s72, %s73
    %p85 = scmp.eq.s32.totalorder %s21, 1
    %p86 = por %p84, %p85
    %p88 = scmp.ne.s32.totalorder %s73, %s87
    %p89 = scmp.eq.s32.totalorder %s21, 0
    %p90 = por %p88, %p89
    %s91 = ssub.s32 %s15, %s22
    %p92 = scmp.eq.s32.totalorder %s91, 0
    %s94 = sadd.s32 %s93, 1
    %s95 = scalar_select %p92, %s93, %s94
    %p98 = pneg %p92
    %p99 = scmp.eq.s32.totalorder %s15, 1
    %p100 = por %p98, %p99
    %p101 = scmp.ne.s32.totalorder %s93, %s96
    %p102 = scmp.eq.s32.totalorder %s15, 0
    %p103 = por %p101, %p102
    %p104 = scmp.ne.s32.totalorder %s93, %s96
    %p105 = scmp.eq.s32.totalorder %s20, 1
    %p106 = por %p104, %p105
    %p107 = scmp.ne.s32.totalorder %s96, %s97
    %p108 = scmp.eq.s32.totalorder %s20, 0
    %p109 = por %p107, %p108
    %p110 = scmp.ne.s32.totalorder %s96, %s97
    %p111 = scmp.eq.s32.totalorder %s21, 1
    %p112 = por %p110, %p111
    %p114 = scmp.ne.s32.totalorder %s97, %s113
    %p115 = scmp.eq.s32.totalorder %s21, 0
    %p116 = por %p114, %p115
    %s117 = ssub.s32 %s15, %s22
    %p118 = scmp.eq.s32.totalorder %s117, 0
    %s120 = sadd.s32 %s119, 1
    %s121 = scalar_select %p118, %s119, %s120
    %p124 = pneg %p118
    %p125 = scmp.eq.s32.totalorder %s15, 1
    %p126 = por %p124, %p125
    %p127 = scmp.ne.s32.totalorder %s119, %s122
    %p128 = scmp.eq.s32.totalorder %s15, 0
    %p129 = por %p127, %p128
    %p130 = scmp.ne.s32.totalorder %s119, %s122
    %p131 = scmp.eq.s32.totalorder %s20, 1
    %p132 = por %p130, %p131
    %p133 = scmp.ne.s32.totalorder %s122, %s123
    %p134 = scmp.eq.s32.totalorder %s20, 0
    %p135 = por %p133, %p134
    %p136 = scmp.ne.s32.totalorder %s122, %s123
    %p137 = scmp.eq.s32.totalorder %s21, 1
    %p138 = por %p136, %p137
    %p140 = scmp.ne.s32.totalorder %s123, %s139
    %p141 = scmp.eq.s32.totalorder %s21, 0
    %p142 = por %p140, %p141
    %s143 = ssub.s32 %s15, %s22
    %p144 = scmp.eq.s32.totalorder %s143, 0
    %s146 = sadd.s32 %s145, 1
    %s147 = scalar_select %p144, %s145, %s146
    %p150 = pneg %p144
    %p151 = scmp.eq.s32.totalorder %s15, 1
    %p152 = por %p150, %p151
    %p153 = scmp.ne.s32.totalorder %s145, %s148
    %p154 = scmp.eq.s32.totalorder %s15, 0
    %p155 = por %p153, %p154
    %p156 = scmp.ne.s32.totalorder %s145, %s148
    %p157 = scmp.eq.s32.totalorder %s20, 1
    %p158 = por %p156, %p157
    %p159 = scmp.ne.s32.totalorder %s148, %s149
    %p160 = scmp.eq.s32.totalorder %s20, 0
    %p161 = por %p159, %p160
    %p162 = scmp.ne.s32.totalorder %s148, %s149
    %p163 = scmp.eq.s32.totalorder %s21, 1
    %p164 = por %p162, %p163
    %p166 = scmp.ne.s32.totalorder %s149, %s165
    %p167 = scmp.eq.s32.totalorder %s21, 0
    %p168 = por %p166, %p167
    %s169 = ssub.s32 %s15, %s22
    %p170 = scmp.eq.s32.totalorder %s169, 0
    %s172 = sadd.s32 %s171, 1
    %s173 = scalar_select %p170, %s171, %s172
    %p176 = pneg %p170
    %p177 = scmp.eq.s32.totalorder %s15, 1
    %p178 = por %p176, %p177
    %p179 = scmp.ne.s32.totalorder %s171, %s174
    %p180 = scmp.eq.s32.totalorder %s15, 0
    %p181 = por %p179, %p180
    %p182 = scmp.ne.s32.totalorder %s171, %s174
    %p183 = scmp.eq.s32.totalorder %s20, 1
    %p184 = por %p182, %p183
    %p185 = scmp.ne.s32.totalorder %s174, %s175
    %p186 = scmp.eq.s32.totalorder %s20, 0
    %p187 = por %p185, %p186
    %p188 = scmp.ne.s32.totalorder %s174, %s175
    %p189 = scmp.eq.s32.totalorder %s21, 1
    %p190 = por %p188, %p189
    %p192 = scmp.ne.s32.totalorder %s175, %s191
    %p193 = scmp.eq.s32.totalorder %s21, 0
    %p194 = por %p192, %p193
    %s195 = ssub.s32 %s15, %s22
    %p196 = scmp.eq.s32.totalorder %s195, 0
    %s198 = sadd.s32 %s197, 1
    %s199 = scalar_select %p196, %s197, %s198
    %p202 = pneg %p196
    %p203 = scmp.eq.s32.totalorder %s15, 1
    %p204 = por %p202, %p203
    %p205 = scmp.ne.s32.totalorder %s197, %s200
    %p206 = scmp.eq.s32.totalorder %s15, 0
    %p207 = por %p205, %p206
    %p208 = scmp.ne.s32.totalorder %s197, %s200
    %p209 = scmp.eq.s32.totalorder %s20, 1
    %p210 = por %p208, %p209
    %p211 = scmp.ne.s32.totalorder %s200, %s201
    %p212 = scmp.eq.s32.totalorder %s20, 0
    %p213 = por %p211, %p212
    %p214 = scmp.ne.s32.totalorder %s200, %s201
    %p215 = scmp.eq.s32.totalorder %s21, 1
    %p216 = por %p214, %p215
    %p218 = scmp.ne.s32.totalorder %s201, %s217
    %p219 = scmp.eq.s32.totalorder %s21, 0
    %p220 = por %p218, %p219
    %s221 = ssub.s32 %s15, %s22
    %p222 = scmp.eq.s32.totalorder %s221, 0
    %s224 = sadd.s32 %s223, 1
    %s225 = scalar_select %p222, %s223, %s224
    %p228 = pneg %p222
    %p229 = scmp.eq.s32.totalorder %s15, 1
    %p230 = por %p228, %p229
    %p231 = scmp.ne.s32.totalorder %s223, %s226
    %p232 = scmp.eq.s32.totalorder %s15, 0
    %p233 = por %p231, %p232
    %p234 = scmp.ne.s32.totalorder %s223, %s226
    %p235 = scmp.eq.s32.totalorder %s20, 1
    %p236 = por %p234, %p235
    %p237 = scmp.ne.s32.totalorder %s226, %s227
    %p238 = scmp.eq.s32.totalorder %s20, 0
    %p239 = por %p237, %p238
    %p240 = scmp.ne.s32.totalorder %s226, %s227
    %p241 = scmp.eq.s32.totalorder %s21, 1
    %p242 = por %p240, %p241
    %p244 = scmp.ne.s32.totalorder %s227, %s243
    %p245 = scmp.eq.s32.totalorder %s21, 0
    %p246 = por %p244, %p245
    %p247 = scmp.le.s32.totalorder 1, %s15
    %p248 = scmp.lt.s32.totalorder %s15, 3
    %p249 = pnand %p247, %p248
    %p250 = pneg %p249
    // Predicated region
    $region9: #{block50_forward.4} parent=5 // pred_check
      _
    $region10: #{block50_forward.4} parent=5 // pred_check_branch
      %252 = sbr.rel (%p249) target = $region12
    $region11: #{block50_forward.4} parent=5 // pred_region
      %s253 = ssub.s32 %s15, 1
      // Predicated region
      $region13: #{block50_forward.4} parent=11 // pred_check
        %p254 = pneg %p62
      $region14: #{block50_forward.4} parent=11 // pred_check_branch
        %256 = sbr.rel (%p254) target = $region16
      $region15: #{block50_forward.4} parent=11 // pred_region
        _
      $region16: #{block50_forward.4} parent=11 // pred_fallthru
        _
      // Predicated region
      $region17: #{block50_forward.4} parent=11 // pred_check
        %p257 = pneg %p83
      $region18: #{block50_forward.4} parent=11 // pred_check_branch
        %259 = sbr.rel (%p257) target = $region20
      $region19: #{block50_forward.4} parent=11 // pred_region
        _
      $region20: #{block50_forward.4} parent=11 // pred_fallthru
        _
    $region12: #{block50_forward.4} parent=5 // pred_fallthru
      _
    %p260 = scmp.lt.s32.totalorder %s15, 2
    // Predicated region
    $region21: #{block50_forward.4} parent=5 // pred_check
      %p261 = pneg %p260
    $region22: #{block50_forward.4} parent=5 // pred_check_branch
      %263 = sbr.rel (%p261) target = $region24
    $region23: #{block50_forward.4} parent=5 // pred_region
      // Predicated region
      $region25: #{block50_forward.4} parent=23 // pred_check
        %p264 = pneg %p35
      $region26: #{block50_forward.4} parent=23 // pred_check_branch
        %266 = sbr.rel (%p264) target = $region28
      $region27: #{block50_forward.4} parent=23 // pred_region
        %s267 = smul.u32 8, %s15
        %p268 = scmp.lt.s32.totalorder %s267, 15
        %s269 = scalar_select %p268, %s267, 15
        %s270 = smul.addr %s269, 8
        %s271 = scalar_lea.vmem %s0, %s270
        %s272 = smul.u32 8, %s15
      $region28: #{block50_forward.4} parent=23 // pred_fallthru
        _
    $region24: #{block50_forward.4} parent=5 // pred_fallthru
      _
    %p273 = scmp.le.s32.totalorder 1, %s15
    %p274 = scmp.lt.s32.totalorder %s15, 3
    %p275 = pnand %p273, %p274
    %p276 = pneg %p275
    // Predicated region
    $region29: #{block50_forward.4} parent=5 // pred_check
      _
    $region30: #{block50_forward.4} parent=5 // pred_check_branch
      %278 = sbr.rel (%p275) target = $region32
    $region31: #{block50_forward.4} parent=5 // pred_region
      %s279 = ssub.s32 %s15, 1
      %s280 = smul.u32 8, %s20
      %p281 = scmp.lt.s32.totalorder %s280, 15
      %s282 = scalar_select %p281, %s280, 15
      %s283 = smul.addr %s282, 8
      %s284 = scalar_lea.vmem %s0, %s283
      %p285 = pneg %p41
      %p286 = pneg %p38
      %p287 = pneg %p62
      %p288 = pneg %p59
      %p289 = pneg %p83
      %p290 = pneg %p80
      %p291 = pneg %p109
      %p292 = pneg %p106
      %s293 = smul.u32 8, %s20
      %p294 = scmp.lt.s32.totalorder %s293, 15
      %s295 = scalar_select %p294, %s293, 15
      %s296 = smul.addr %s295, 8
      %s297 = scalar_lea.vmem %s3, %s296
      %p298 = pneg %p135
      %p299 = pneg %p132
      %p300 = scmp.lt.s32.totalorder %s20, 1
      %s301 = scalar_select %p300, %s20, 1
      %s302 = scalar_lea.vmem %s4, %s301
      %p303 = pneg %p161
      %p304 = pneg %p158
      %p305 = scmp.lt.s32.totalorder %s20, 1
      %s306 = scalar_select %p305, %s20, 1
      %s307 = scalar_lea.vmem %s5, %s306
      %p308 = pneg %p187
      %p309 = pneg %p184
      %s310 = smul.u32 8, %s20
      %p311 = scmp.lt.s32.totalorder %s310, 15
      %s312 = scalar_select %p311, %s310, 15
      %s313 = smul.addr %s312, 8
      %s314 = scalar_lea.vmem %s6, %s313
      %p315 = pneg %p213
      %p316 = pneg %p210
      %p317 = scmp.lt.s32.totalorder %s20, 1
      %s318 = scalar_select %p317, %s20, 1
      %s319 = scalar_lea.vmem %s7, %s318
      %p320 = pneg %p239
      %p321 = pneg %p236
      %p322 = scmp.lt.s32.totalorder %s20, 1
      %s323 = scalar_select %p322, %s20, 1
      %s324 = scalar_lea.vmem %s8, %s323
      %s325 = smul.u32 8, %s20
      %p326 = scmp.lt.s32.totalorder %s325, 15
      %s327 = scalar_select %p326, %s325, 15
      %s328 = smul.addr %s327, 8
      %s329 = scalar_lea.vmem %s0, %s328
      %s330 = smul.u32 8, %s20
      %s331 = smul.u32 8, %s20
      %p332 = scmp.lt.s32.totalorder %s331, 15
      %s333 = scalar_select %p332, %s331, 15
      %s334 = smul.addr %s333, 8
      %s335 = scalar_lea.vmem %s3, %s334
      %s336 = smul.u32 8, %s20
      %p337 = scmp.lt.s32.totalorder %s20, 1
      %s338 = scalar_select %p337, %s20, 1
      %s339 = scalar_lea.vmem %s4, %s338
      %p340 = scmp.lt.s32.totalorder %s20, 1
      %s341 = scalar_select %p340, %s20, 1
      %s342 = scalar_lea.vmem %s5, %s341
      %s343 = smul.u32 8, %s20
      %p344 = scmp.lt.s32.totalorder %s343, 15
      %s345 = scalar_select %p344, %s343, 15
      %s346 = smul.addr %s345, 8
      %s347 = scalar_lea.vmem %s6, %s346
      %s348 = smul.u32 8, %s20
      %p349 = scmp.lt.s32.totalorder %s20, 1
      %s350 = scalar_select %p349, %s20, 1
      %s351 = scalar_lea.vmem %s7, %s350
      %p352 = scmp.lt.s32.totalorder %s20, 1
      %s353 = scalar_select %p352, %s20, 1
      %s354 = scalar_lea.vmem %s8, %s353
      %v355 = vld [vmem:[%s329] sm:$0xff]
      %v356 = vld [vmem:[%s329 + $0x8] sm:$0xff]
      %v357 = vld [vmem:[%s329 + $0x10] sm:$0xff]
      %v358 = vld [vmem:[%s329 + $0x18] sm:$0xff]
      %v359 = vld [vmem:[%s329 + $0x20] sm:$0xff]
      %v360 = vld [vmem:[%s329 + $0x28] sm:$0xff]
      %v361 = vld [vmem:[%s329 + $0x30] sm:$0xff]
      %v362 = vld [vmem:[%s329 + $0x38] sm:$0xff]
      %v363 = vld [vmem:[%s1] sm:$0xff]
      %v364 = vld [vmem:[%s1 + $0x8] sm:$0xff]
      %v365 = vld [vmem:[%s1 + $0x10] sm:$0xff]
      %v366 = vld [vmem:[%s1 + $0x18] sm:$0xff]
      %v367 = vld [vmem:[%s1 + $0x20] sm:$0xff]
      %v368 = vld [vmem:[%s1 + $0x28] sm:$0xff]
      %v369 = vld [vmem:[%s1 + $0x30] sm:$0xff]
      %v370 = vld [vmem:[%s1 + $0x38] sm:$0xff]
      %v371 = vld [vmem:[%s1 + $0x40] sm:$0xff]
      %v372 = vld [vmem:[%s1 + $0x48] sm:$0xff]
      %v373 = vld [vmem:[%s1 + $0x50] sm:$0xff]
      %v374 = vld [vmem:[%s1 + $0x58] sm:$0xff]
      %v375 = vld [vmem:[%s1 + $0x60] sm:$0xff]
      %v376 = vld [vmem:[%s1 + $0x68] sm:$0xff]
      %v377 = vld [vmem:[%s1 + $0x70] sm:$0xff]
      %v378 = vld [vmem:[%s1 + $0x78] sm:$0xff]
      %379 = vmatpush.msra.mxu0 %v378
      %380 = vmatpush.msra.mxu0 %v377
      %381 = vmatpush.msra.mxu0 %v376
      %382 = vmatpush.msra.mxu0 %v375
      %383 = vmatpush.msra.mxu0 %v374
      %384 = vmatpush.msra.mxu0 %v373
      %385 = vmatpush.msra.mxu0 %v372
      %386 = vmatpush.msra.mxu0 %v371
      %387 = vmatpush.msra.mxu0 %v370
      %388 = vmatpush.msra.mxu0 %v369
      %389 = vmatpush.msra.mxu0 %v368
      %390 = vmatpush.msra.mxu0 %v367
      %391 = vmatpush.msra.mxu0 %v366
      %392 = vmatpush.msra.mxu0 %v365
      %393 = vmatpush.msra.mxu0 %v364
      %394 = vmatpush.msra.mxu0 %v363
      %395 = vmatmul.f32.gmra.mxu0 %v355
      %v396 = vpop.f32.mrf.mxu0
      %v397 = vadd.f32 0.0, %v396
      %398 = vmatmul.f32.gmra.mxu0 %v356
      %v399 = vpop.f32.mrf.mxu0
      %v400 = vadd.f32 0.0, %v399
      %401 = vmatmul.f32.gmra.mxu0 %v357
      %v402 = vpop.f32.mrf.mxu0
      %v403 = vadd.f32 0.0, %v402
      %404 = vmatmul.f32.gmra.mxu0 %v358
      %v405 = vpop.f32.mrf.mxu0
      %v406 = vadd.f32 0.0, %v405
      %407 = vmatmul.f32.gmra.mxu0 %v359
      %v408 = vpop.f32.mrf.mxu0
      %v409 = vadd.f32 0.0, %v408
      %410 = vmatmul.f32.gmra.mxu0 %v360
      %v411 = vpop.f32.mrf.mxu0
      %v412 = vadd.f32 0.0, %v411
      %413 = vmatmul.f32.gmra.mxu0 %v361
      %v414 = vpop.f32.mrf.mxu0
      %v415 = vadd.f32 0.0, %v414
      %416 = vmatmul.f32.gmra.mxu0 %v362
      %v417 = vpop.f32.mrf.mxu0
      %v418 = vadd.f32 0.0, %v417
      %419 = vdwg.mxu0
      %420 = vst [vmem:[%s335] sm:$0xff] %v397
      %421 = vst [vmem:[%s335 + $0x8] sm:$0xff] %v400
      %422 = vst [vmem:[%s335 + $0x10] sm:$0xff] %v403
      %423 = vst [vmem:[%s335 + $0x18] sm:$0xff] %v406
      %424 = vst [vmem:[%s335 + $0x20] sm:$0xff] %v409
      %425 = vst [vmem:[%s335 + $0x28] sm:$0xff] %v412
      %426 = vst [vmem:[%s335 + $0x30] sm:$0xff] %v415
      %427 = vst [vmem:[%s335 + $0x38] sm:$0xff] %v418
      %v428 = vadd.f32 %v397, %v400
      %v429 = vadd.f32 %v428, %v403
      %v430 = vadd.f32 %v429, %v406
      %v431 = vadd.f32 %v430, %v409
      %v432 = vadd.f32 %v431, %v412
      %v433 = vadd.f32 %v432, %v415
      %v434 = vadd.f32 %v433, %v418
      %v435 = vrot.slane %v434, 4
      %v436 = vadd.f32 %v434, %v435
      %v437 = vrot.slane %v436, 2
      %v438 = vadd.f32 %v436, %v437
      %v439 = vrot.slane %v438, 1
      %v440 = vadd.f32 %v438, %v439
      %441 = vst [vmem:[%s339] sm:$0x1] %v440
      %v442 = vmul.f32 %v397, %v397
      %v443 = vmul.f32 %v400, %v400
      %v444 = vmul.f32 %v403, %v403
      %v445 = vmul.f32 %v406, %v406
      %v446 = vmul.f32 %v409, %v409
      %v447 = vmul.f32 %v412, %v412
      %v448 = vmul.f32 %v415, %v415
      %v449 = vmul.f32 %v418, %v418
      %v450 = vadd.f32 %v442, %v443
      %v451 = vadd.f32 %v450, %v444
      %v452 = vadd.f32 %v451, %v445
      %v453 = vadd.f32 %v452, %v446
      %v454 = vadd.f32 %v453, %v447
      %v455 = vadd.f32 %v454, %v448
      %v456 = vadd.f32 %v455, %v449
      %v457 = vrot.slane %v456, 4
      %v458 = vadd.f32 %v456, %v457
      %v459 = vrot.slane %v458, 2
      %v460 = vadd.f32 %v458, %v459
      %v461 = vrot.slane %v460, 1
      %v462 = vadd.f32 %v460, %v461
      %463 = vst [vmem:[%s342] sm:$0x1] %v462
      %v464 = vld [vmem:[%s2] sm:$0xff]
      %v465 = vld [vmem:[%s2 + $0x8] sm:$0xff]
      %v466 = vld [vmem:[%s2 + $0x10] sm:$0xff]
      %v467 = vld [vmem:[%s2 + $0x18] sm:$0xff]
      %v468 = vld [vmem:[%s2 + $0x20] sm:$0xff]
      %v469 = vld [vmem:[%s2 + $0x28] sm:$0xff]
      %v470 = vld [vmem:[%s2 + $0x30] sm:$0xff]
      %v471 = vld [vmem:[%s2 + $0x38] sm:$0xff]
      %v472 = vld [vmem:[%s2 + $0x40] sm:$0xff]
      %v473 = vld [vmem:[%s2 + $0x48] sm:$0xff]
      %v474 = vld [vmem:[%s2 + $0x50] sm:$0xff]
      %v475 = vld [vmem:[%s2 + $0x58] sm:$0xff]
      %v476 = vld [vmem:[%s2 + $0x60] sm:$0xff]
      %v477 = vld [vmem:[%s2 + $0x68] sm:$0xff]
      %v478 = vld [vmem:[%s2 + $0x70] sm:$0xff]
      %v479 = vld [vmem:[%s2 + $0x78] sm:$0xff]
      %480 = vmatpush.msra.mxu0 %v479
      %481 = vmatpush.msra.mxu0 %v478
      %482 = vmatpush.msra.mxu0 %v477
      %483 = vmatpush.msra.mxu0 %v476
      %484 = vmatpush.msra.mxu0 %v475
      %485 = vmatpush.msra.mxu0 %v474
      %486 = vmatpush.msra.mxu0 %v473
      %487 = vmatpush.msra.mxu0 %v472
      %488 = vmatpush.msra.mxu0 %v471
      %489 = vmatpush.msra.mxu0 %v470
      %490 = vmatpush.msra.mxu0 %v469
      %491 = vmatpush.msra.mxu0 %v468
      %492 = vmatpush.msra.mxu0 %v467
      %493 = vmatpush.msra.mxu0 %v466
      %494 = vmatpush.msra.mxu0 %v465
      %495 = vmatpush.msra.mxu0 %v464
      %496 = vmatmul.f32.gmra.mxu0 %v355
      %v497 = vpop.f32.mrf.mxu0
      %v498 = vadd.f32 0.0, %v497
      %499 = vmatmul.f32.gmra.mxu0 %v356
      %v500 = vpop.f32.mrf.mxu0
      %v501 = vadd.f32 0.0, %v500
      %502 = vmatmul.f32.gmra.mxu0 %v357
      %v503 = vpop.f32.mrf.mxu0
      %v504 = vadd.f32 0.0, %v503
      %505 = vmatmul.f32.gmra.mxu0 %v358
      %v506 = vpop.f32.mrf.mxu0
      %v507 = vadd.f32 0.0, %v506
      %508 = vmatmul.f32.gmra.mxu0 %v359
      %v509 = vpop.f32.mrf.mxu0
      %v510 = vadd.f32 0.0, %v509
      %511 = vmatmul.f32.gmra.mxu0 %v360
      %v512 = vpop.f32.mrf.mxu0
      %v513 = vadd.f32 0.0, %v512
      %514 = vmatmul.f32.gmra.mxu0 %v361
      %v515 = vpop.f32.mrf.mxu0
      %v516 = vadd.f32 0.0, %v515
      %517 = vmatmul.f32.gmra.mxu0 %v362
      %v518 = vpop.f32.mrf.mxu0
      %v519 = vadd.f32 0.0, %v518
      %520 = vdwg.mxu0
      %521 = vst [vmem:[%s347] sm:$0xff] %v498
      %522 = vst [vmem:[%s347 + $0x8] sm:$0xff] %v501
      %523 = vst [vmem:[%s347 + $0x10] sm:$0xff] %v504
      %524 = vst [vmem:[%s347 + $0x18] sm:$0xff] %v507
      %525 = vst [vmem:[%s347 + $0x20] sm:$0xff] %v510
      %526 = vst [vmem:[%s347 + $0x28] sm:$0xff] %v513
      %527 = vst [vmem:[%s347 + $0x30] sm:$0xff] %v516
      %528 = vst [vmem:[%s347 + $0x38] sm:$0xff] %v519
      %v529 = vadd.f32 %v498, %v501
      %v530 = vadd.f32 %v529, %v504
      %v531 = vadd.f32 %v530, %v507
      %v532 = vadd.f32 %v531, %v510
      %v533 = vadd.f32 %v532, %v513
      %v534 = vadd.f32 %v533, %v516
      %v535 = vadd.f32 %v534, %v519
      %v536 = vrot.slane %v535, 4
      %v537 = vadd.f32 %v535, %v536
      %v538 = vrot.slane %v537, 2
      %v539 = vadd.f32 %v537, %v538
      %v540 = vrot.slane %v539, 1
      %v541 = vadd.f32 %v539, %v540
      %542 = vst [vmem:[%s351] sm:$0x1] %v541
      %v543 = vmul.f32 %v498, %v498
      %v544 = vmul.f32 %v501, %v501
      %v545 = vmul.f32 %v504, %v504
      %v546 = vmul.f32 %v507, %v507
      %v547 = vmul.f32 %v510, %v510
      %v548 = vmul.f32 %v513, %v513
      %v549 = vmul.f32 %v516, %v516
      %v550 = vmul.f32 %v519, %v519
      %v551 = vadd.f32 %v543, %v544
      %v552 = vadd.f32 %v551, %v545
      %v553 = vadd.f32 %v552, %v546
      %v554 = vadd.f32 %v553, %v547
      %v555 = vadd.f32 %v554, %v548
      %v556 = vadd.f32 %v555, %v549
      %v557 = vadd.f32 %v556, %v550
      %v558 = vrot.slane %v557, 4
      %v559 = vadd.f32 %v557, %v558
      %v560 = vrot.slane %v559, 2
      %v561 = vadd.f32 %v559, %v560
      %v562 = vrot.slane %v561, 1
      %v563 = vadd.f32 %v561, %v562
      %564 = vst [vmem:[%s354] sm:$0x1] %v563
      %s565 = smul.u32 8, %s20
      %p566 = scmp.lt.s32.totalorder %s565, 15
      %s567 = scalar_select %p566, %s565, 15
      %s568 = smul.addr %s567, 8
      %s569 = scalar_lea.vmem %s3, %s568
      %p570 = scmp.lt.s32.totalorder %s20, 1
      %s571 = scalar_select %p570, %s20, 1
      %s572 = scalar_lea.vmem %s4, %s571
      %p573 = scmp.lt.s32.totalorder %s20, 1
      %s574 = scalar_select %p573, %s20, 1
      %s575 = scalar_lea.vmem %s5, %s574
      %s576 = smul.u32 8, %s20
      %p577 = scmp.lt.s32.totalorder %s576, 15
      %s578 = scalar_select %p577, %s576, 15
      %s579 = smul.addr %s578, 8
      %s580 = scalar_lea.vmem %s6, %s579
      %p581 = scmp.lt.s32.totalorder %s20, 1
      %s582 = scalar_select %p581, %s20, 1
      %s583 = scalar_lea.vmem %s7, %s582
      %p584 = scmp.lt.s32.totalorder %s20, 1
      %s585 = scalar_select %p584, %s20, 1
      %s586 = scalar_lea.vmem %s8, %s585
      // Predicated region
      $region33: #{block50_forward.4} parent=31 // pred_check
        %p587 = pneg %p106
      $region34: #{block50_forward.4} parent=31 // pred_check_branch
        %589 = sbr.rel (%p587) target = $region36
      $region35: #{block50_forward.4} parent=31 // pred_region
        %s590 = smul.u32 8, %s20
      $region36: #{block50_forward.4} parent=31 // pred_fallthru
        _
      // Predicated region
      $region37: #{block50_forward.4} parent=31 // pred_check
        %p591 = pneg %p132
      $region38: #{block50_forward.4} parent=31 // pred_check_branch
        %593 = sbr.rel (%p591) target = $region40
      $region39: #{block50_forward.4} parent=31 // pred_region
        _
      $region40: #{block50_forward.4} parent=31 // pred_fallthru
        _
      // Predicated region
      $region41: #{block50_forward.4} parent=31 // pred_check
        %p594 = pneg %p158
      $region42: #{block50_forward.4} parent=31 // pred_check_branch
        %596 = sbr.rel (%p594) target = $region44
      $region43: #{block50_forward.4} parent=31 // pred_region
        _
      $region44: #{block50_forward.4} parent=31 // pred_fallthru
        _
      // Predicated region
      $region45: #{block50_forward.4} parent=31 // pred_check
        %p597 = pneg %p184
      $region46: #{block50_forward.4} parent=31 // pred_check_branch
        %599 = sbr.rel (%p597) target = $region48
      $region47: #{block50_forward.4} parent=31 // pred_region
        %s600 = smul.u32 8, %s20
      $region48: #{block50_forward.4} parent=31 // pred_fallthru
        _
      // Predicated region
      $region49: #{block50_forward.4} parent=31 // pred_check
        %p601 = pneg %p210
      $region50: #{block50_forward.4} parent=31 // pred_check_branch
        %603 = sbr.rel (%p601) target = $region52
      $region51: #{block50_forward.4} parent=31 // pred_region
        _
      $region52: #{block50_forward.4} parent=31 // pred_fallthru
        _
      // Predicated region
      $region53: #{block50_forward.4} parent=31 // pred_check
        %p604 = pneg %p236
      $region54: #{block50_forward.4} parent=31 // pred_check_branch
        %606 = sbr.rel (%p604) target = $region56
      $region55: #{block50_forward.4} parent=31 // pred_region
        _
      $region56: #{block50_forward.4} parent=31 // pred_fallthru
        _
    $region32: #{block50_forward.4} parent=5 // pred_fallthru
      _
    %p607 = scmp.le.s32.totalorder 2, %s15
    // Predicated region
    $region57: #{block50_forward.4} parent=5 // pred_check
      %p608 = pneg %p607
    $region58: #{block50_forward.4} parent=5 // pred_check_branch
      %610 = sbr.rel (%p608) target = $region60
    $region59: #{block50_forward.4} parent=5 // pred_region
      %s611 = ssub.s32 %s15, 2
      // Predicated region
      $region61: #{block50_forward.4} parent=59 // pred_check
        %p612 = pneg %p112
      $region62: #{block50_forward.4} parent=59 // pred_check_branch
        %614 = sbr.rel (%p612) target = $region64
      $region63: #{block50_forward.4} parent=59 // pred_region
        %s615 = smul.u32 8, %s21
        %p616 = scmp.lt.s32.totalorder %s615, 15
        %s617 = scalar_select %p616, %s615, 15
        %s618 = smul.addr %s617, 8
        %s619 = scalar_lea.vmem %s3, %s618
      $region64: #{block50_forward.4} parent=59 // pred_fallthru
        _
      // Predicated region
      $region65: #{block50_forward.4} parent=59 // pred_check
        %p620 = pneg %p138
      $region66: #{block50_forward.4} parent=59 // pred_check_branch
        %622 = sbr.rel (%p620) target = $region68
      $region67: #{block50_forward.4} parent=59 // pred_region
        %p623 = scmp.lt.s32.totalorder %s21, 1
        %s624 = scalar_select %p623, %s21, 1
        %s625 = scalar_lea.vmem %s4, %s624
      $region68: #{block50_forward.4} parent=59 // pred_fallthru
        _
      // Predicated region
      $region69: #{block50_forward.4} parent=59 // pred_check
        %p626 = pneg %p164
      $region70: #{block50_forward.4} parent=59 // pred_check_branch
        %628 = sbr.rel (%p626) target = $region72
      $region71: #{block50_forward.4} parent=59 // pred_region
        %p629 = scmp.lt.s32.totalorder %s21, 1
        %s630 = scalar_select %p629, %s21, 1
        %s631 = scalar_lea.vmem %s5, %s630
      $region72: #{block50_forward.4} parent=59 // pred_fallthru
        _
      // Predicated region
      $region73: #{block50_forward.4} parent=59 // pred_check
        %p632 = pneg %p190
      $region74: #{block50_forward.4} parent=59 // pred_check_branch
        %634 = sbr.rel (%p632) target = $region76
      $region75: #{block50_forward.4} parent=59 // pred_region
        %s635 = smul.u32 8, %s21
        %p636 = scmp.lt.s32.totalorder %s635, 15
        %s637 = scalar_select %p636, %s635, 15
        %s638 = smul.addr %s637, 8
        %s639 = scalar_lea.vmem %s6, %s638
      $region76: #{block50_forward.4} parent=59 // pred_fallthru
        _
      // Predicated region
      $region77: #{block50_forward.4} parent=59 // pred_check
        %p640 = pneg %p216
      $region78: #{block50_forward.4} parent=59 // pred_check_branch
        %642 = sbr.rel (%p640) target = $region80
      $region79: #{block50_forward.4} parent=59 // pred_region
        %p643 = scmp.lt.s32.totalorder %s21, 1
        %s644 = scalar_select %p643, %s21, 1
        %s645 = scalar_lea.vmem %s7, %s644
      $region80: #{block50_forward.4} parent=59 // pred_fallthru
        _
      // Predicated region
      $region81: #{block50_forward.4} parent=59 // pred_check
        %p646 = pneg %p242
      $region82: #{block50_forward.4} parent=59 // pred_check_branch
        %648 = sbr.rel (%p646) target = $region84
      $region83: #{block50_forward.4} parent=59 // pred_region
        %p649 = scmp.lt.s32.totalorder %s21, 1
        %s650 = scalar_select %p649, %s21, 1
        %s651 = scalar_lea.vmem %s8, %s650
      $region84: #{block50_forward.4} parent=59 // pred_fallthru
        _
    $region60: #{block50_forward.4} parent=5 // pred_fallthru
      _
  $region6: #{block50_forward.4} parent=0 // loop_footer
    %s19 = sadd.s32 1, %s15
  $region7: #{block50_forward.4} parent=0 // loop_footer_branch
    %14 = sbr.rel target = $region3
  $region8: #{block50_forward.4} parent=0 // loop_exit
    _

// kernel: block50_forward.6
$region0: #{block50_forward.6}
  #allocation0 [shape = 'u32[]', space=smem, size = 0x4, offset = 0x4, fixed_abs, tag = 'smem constant byte address 0x4 - core index']
  #allocation1 [shape = 'u32[72,128]{1,0:T(1,128)}', space=vmem, size = 0x9000, scoped, tag = 'internal scratch']
  %s0 = inlined_call_operand.vmem [shape: f32[128,128], index: 0, kind: input, shape index: {}]
  %s1 = inlined_call_operand.vmem [shape: f32[1,128], index: 1, kind: input, shape index: {}]
  %s2 = inlined_call_operand.vmem [shape: f32[1,128], index: 2, kind: input, shape index: {}]
  %s3 = inlined_call_operand.vmem [shape: f32[128,128], index: 3, kind: input, shape index: {}]
  %s4 = inlined_call_operand.vmem [shape: f32[128,128], index: 4, kind: output, shape index: {0}]
  %s5 = inlined_call_operand.vmem [shape: f32[2,1,128], index: 5, kind: output, shape index: {1}]
  %s6 = inlined_call_operand.vmem [shape: f32[2,1,128], index: 6, kind: output, shape index: {2}]
  %7 = xla_tuple %s4, %s5, %s6
  %s8 = sld [smem:[#allocation0]]
  $region65: #{block50_forward.6} parent=0
    _
  %s10 = ssub.s32 1, %s8
  %s11 = scalar_select 0, %s10, %s8
  loop: start=0, step=1, limit=4
  $region2: #{block50_forward.6} parent=0 // loop_pre_header
    _
  $region3: #{block50_forward.6} parent=0 // loop_header
    %s13 = sphi 0, %s17
    %p14 = scmp.ge.s32.totalorder %s13, 4
    %s23 = sphi 0, %s25
    %s26 = sphi 0, %s23
    %s27 = sphi 0, %s26
    %s43 = sphi 0, %s27
    %s47 = sphi 0, %s47
    %s49 = sphi 0, %s47
    %s50 = sphi 0, %s49
    %s64 = sphi 0, %s50
    %s68 = sphi 0, %s68
    %s70 = sphi 0, %s68
    %s71 = sphi 0, %s70
    %s85 = sphi 0, %s71
    %s89 = sphi 0, %s89
    %s91 = sphi 0, %s89
    %s92 = sphi 0, %s91
    %s106 = sphi 0, %s92
    %s112 = sphi 0, %s114
    %s115 = sphi 0, %s112
    %s116 = sphi 0, %s115
    %s132 = sphi 0, %s116
    %s138 = sphi 0, %s140
    %s141 = sphi 0, %s138
    %s142 = sphi 0, %s141
    %s158 = sphi 0, %s142
    %s164 = sphi 0, %s166
    %s167 = sphi 0, %s164
    %s168 = sphi 0, %s167
    %s184 = sphi 0, %s168
  $region4: #{block50_forward.6} parent=0 // loop_header_branch
    %16 = sbr.rel (%p14) target = $region8
  $region5: #{block50_forward.6} parent=0 // loop_body
    %s18 = ssub.s32 %s13, 1
    %s19 = ssub.s32 %s13, 2
    %s20 = sadd.s32 %s13, 1
    %s21 = ssub.s32 %s13, %s20
    %p22 = scmp.eq.s32.totalorder %s21, 0
    %s24 = sadd.s32 %s23, 1
    %s25 = scalar_select %p22, %s23, %s24
    %p28 = pneg %p22
    %p29 = scmp.eq.s32.totalorder %s13, 1
    %p30 = por %p28, %p29
    %p31 = scmp.ne.s32.totalorder %s23, %s26
    %p32 = scmp.eq.s32.totalorder %s13, 0
    %p33 = por %p31, %p32
    %p34 = scmp.ne.s32.totalorder %s23, %s26
    %p35 = scmp.eq.s32.totalorder %s18, 1
    %p36 = por %p34, %p35
    %p37 = scmp.ne.s32.totalorder %s26, %s27
    %p38 = scmp.eq.s32.totalorder %s18, 0
    %p39 = por %p37, %p38
    %p40 = scmp.ne.s32.totalorder %s26, %s27
    %p41 = scmp.eq.s32.totalorder %s19, 1
    %p42 = por %p40, %p41
    %p44 = scmp.ne.s32.totalorder %s27, %s43
    %p45 = scmp.eq.s32.totalorder %s19, 0
    %p46 = por %p44, %p45
    %s48 = sadd.s32 %s47, 1
    %p51 = scmp.eq.s32.totalorder %s13, 1
    %p52 = scmp.ne.s32.totalorder %s47, %s49
    %p53 = scmp.eq.s32.totalorder %s13, 0
    %p54 = por %p52, %p53
    %p55 = scmp.ne.s32.totalorder %s47, %s49
    %p56 = scmp.eq.s32.totalorder %s18, 1
    %p57 = por %p55, %p56
    %p58 = scmp.ne.s32.totalorder %s49, %s50
    %p59 = scmp.eq.s32.totalorder %s18, 0
    %p60 = por %p58, %p59
    %p61 = scmp.ne.s32.totalorder %s49, %s50
    %p62 = scmp.eq.s32.totalorder %s19, 1
    %p63 = por %p61, %p62
    %p65 = scmp.ne.s32.totalorder %s50, %s64
    %p66 = scmp.eq.s32.totalorder %s19, 0
    %p67 = por %p65, %p66
    %s69 = sadd.s32 %s68, 1
    %p72 = scmp.eq.s32.totalorder %s13, 1
    %p73 = scmp.ne.s32.totalorder %s68, %s70
    %p74 = scmp.eq.s32.totalorder %s13, 0
    %p75 = por %p73, %p74
    %p76 = scmp.ne.s32.totalorder %s68, %s70
    %p77 = scmp.eq.s32.totalorder %s18, 1
    %p78 = por %p76, %p77
    %p79 = scmp.ne.s32.totalorder %s70, %s71
    %p80 = scmp.eq.s32.totalorder %s18, 0
    %p81 = por %p79, %p80
    %p82 = scmp.ne.s32.totalorder %s70, %s71
    %p83 = scmp.eq.s32.totalorder %s19, 1
    %p84 = por %p82, %p83
    %p86 = scmp.ne.s32.totalorder %s71, %s85
    %p87 = scmp.eq.s32.totalorder %s19, 0
    %p88 = por %p86, %p87
    %s90 = sadd.s32 %s89, 1
    %p93 = scmp.eq.s32.totalorder %s13, 1
    %p94 = scmp.ne.s32.totalorder %s89, %s91
    %p95 = scmp.eq.s32.totalorder %s13, 0
    %p96 = por %p94, %p95
    %p97 = scmp.ne.s32.totalorder %s89, %s91
    %p98 = scmp.eq.s32.totalorder %s18, 1
    %p99 = por %p97, %p98
    %p100 = scmp.ne.s32.totalorder %s91, %s92
    %p101 = scmp.eq.s32.totalorder %s18, 0
    %p102 = por %p100, %p101
    %p103 = scmp.ne.s32.totalorder %s91, %s92
    %p104 = scmp.eq.s32.totalorder %s19, 1
    %p105 = por %p103, %p104
    %p107 = scmp.ne.s32.totalorder %s92, %s106
    %p108 = scmp.eq.s32.totalorder %s19, 0
    %p109 = por %p107, %p108
    %s110 = ssub.s32 %s13, %s20
    %p111 = scmp.eq.s32.totalorder %s110, 0
    %s113 = sadd.s32 %s112, 1
    %s114 = scalar_select %p111, %s112, %s113
    %p117 = pneg %p111
    %p118 = scmp.eq.s32.totalorder %s13, 1
    %p119 = por %p117, %p118
    %p120 = scmp.ne.s32.totalorder %s112, %s115
    %p121 = scmp.eq.s32.totalorder %s13, 0
    %p122 = por %p120, %p121
    %p123 = scmp.ne.s32.totalorder %s112, %s115
    %p124 = scmp.eq.s32.totalorder %s18, 1
    %p125 = por %p123, %p124
    %p126 = scmp.ne.s32.totalorder %s115, %s116
    %p127 = scmp.eq.s32.totalorder %s18, 0
    %p128 = por %p126, %p127
    %p129 = scmp.ne.s32.totalorder %s115, %s116
    %p130 = scmp.eq.s32.totalorder %s19, 1
    %p131 = por %p129, %p130
    %p133 = scmp.ne.s32.totalorder %s116, %s132
    %p134 = scmp.eq.s32.totalorder %s19, 0
    %p135 = por %p133, %p134
    %s136 = ssub.s32 %s13, %s20
    %p137 = scmp.eq.s32.totalorder %s136, 0
    %s139 = sadd.s32 %s138, 1
    %s140 = scalar_select %p137, %s138, %s139
    %p143 = pneg %p137
    %p144 = scmp.eq.s32.totalorder %s13, 1
    %p145 = por %p143, %p144
    %p146 = scmp.ne.s32.totalorder %s138, %s141
    %p147 = scmp.eq.s32.totalorder %s13, 0
    %p148 = por %p146, %p147
    %p149 = scmp.ne.s32.totalorder %s138, %s141
    %p150 = scmp.eq.s32.totalorder %s18, 1
    %p151 = por %p149, %p150
    %p152 = scmp.ne.s32.totalorder %s141, %s142
    %p153 = scmp.eq.s32.totalorder %s18, 0
    %p154 = por %p152, %p153
    %p155 = scmp.ne.s32.totalorder %s141, %s142
    %p156 = scmp.eq.s32.totalorder %s19, 1
    %p157 = por %p155, %p156
    %p159 = scmp.ne.s32.totalorder %s142, %s158
    %p160 = scmp.eq.s32.totalorder %s19, 0
    %p161 = por %p159, %p160
    %s162 = ssub.s32 %s13, %s20
    %p163 = scmp.eq.s32.totalorder %s162, 0
    %s165 = sadd.s32 %s164, 1
    %s166 = scalar_select %p163, %s164, %s165
    %p169 = pneg %p163
    %p170 = scmp.eq.s32.totalorder %s13, 1
    %p171 = por %p169, %p170
    %p172 = scmp.ne.s32.totalorder %s164, %s167
    %p173 = scmp.eq.s32.totalorder %s13, 0
    %p174 = por %p172, %p173
    %p175 = scmp.ne.s32.totalorder %s164, %s167
    %p176 = scmp.eq.s32.totalorder %s18, 1
    %p177 = por %p175, %p176
    %p178 = scmp.ne.s32.totalorder %s167, %s168
    %p179 = scmp.eq.s32.totalorder %s18, 0
    %p180 = por %p178, %p179
    %p181 = scmp.ne.s32.totalorder %s167, %s168
    %p182 = scmp.eq.s32.totalorder %s19, 1
    %p183 = por %p181, %p182
    %p185 = scmp.ne.s32.totalorder %s168, %s184
    %p186 = scmp.eq.s32.totalorder %s19, 0
    %p187 = por %p185, %p186
    %p188 = scmp.le.s32.totalorder 1, %s13
    %p189 = scmp.lt.s32.totalorder %s13, 3
    %p190 = pnand %p188, %p189
    %p191 = pneg %p190
    // Predicated region
    $region9: #{block50_forward.6} parent=5 // pred_check
      _
    $region10: #{block50_forward.6} parent=5 // pred_check_branch
      %193 = sbr.rel (%p190) target = $region12
    $region11: #{block50_forward.6} parent=5 // pred_region
      %s194 = ssub.s32 %s13, 1
      // Predicated region
      $region13: #{block50_forward.6} parent=11 // pred_check
        %p195 = pneg %p60
      $region14: #{block50_forward.6} parent=11 // pred_check_branch
        %197 = sbr.rel (%p195) target = $region16
      $region15: #{block50_forward.6} parent=11 // pred_region
        _
      $region16: #{block50_forward.6} parent=11 // pred_fallthru
        _
      // Predicated region
      $region17: #{block50_forward.6} parent=11 // pred_check
        %p198 = pneg %p81
      $region18: #{block50_forward.6} parent=11 // pred_check_branch
        %200 = sbr.rel (%p198) target = $region20
      $region19: #{block50_forward.6} parent=11 // pred_region
        _
      $region20: #{block50_forward.6} parent=11 // pred_fallthru
        _
      // Predicated region
      $region21: #{block50_forward.6} parent=11 // pred_check
        %p201 = pneg %p102
      $region22: #{block50_forward.6} parent=11 // pred_check_branch
        %203 = sbr.rel (%p201) target = $region24
      $region23: #{block50_forward.6} parent=11 // pred_region
        _
      $region24: #{block50_forward.6} parent=11 // pred_fallthru
        _
    $region12: #{block50_forward.6} parent=5 // pred_fallthru
      _
    %p204 = scmp.lt.s32.totalorder %s13, 2
    // Predicated region
    $region25: #{block50_forward.6} parent=5 // pred_check
      %p205 = pneg %p204
    $region26: #{block50_forward.6} parent=5 // pred_check_branch
      %207 = sbr.rel (%p205) target = $region28
    $region27: #{block50_forward.6} parent=5 // pred_region
      // Predicated region
      $region29: #{block50_forward.6} parent=27 // pred_check
        %p208 = pneg %p33
      $region30: #{block50_forward.6} parent=27 // pred_check_branch
        %210 = sbr.rel (%p208) target = $region32
      $region31: #{block50_forward.6} parent=27 // pred_region
        %s211 = smul.u32 8, %s13
        %p212 = scmp.lt.s32.totalorder %s211, 15
        %s213 = scalar_select %p212, %s211, 15
        %s214 = smul.addr %s213, 8
        %s215 = scalar_lea.vmem %s0, %s214
        %s216 = smul.u32 8, %s13
      $region32: #{block50_forward.6} parent=27 // pred_fallthru
        _
    $region28: #{block50_forward.6} parent=5 // pred_fallthru
      _
    %p217 = scmp.le.s32.totalorder 1, %s13
    %p218 = scmp.lt.s32.totalorder %s13, 3
    %p219 = pnand %p217, %p218
    %p220 = pneg %p219
    // Predicated region
    $region33: #{block50_forward.6} parent=5 // pred_check
      _
    $region34: #{block50_forward.6} parent=5 // pred_check_branch
      %222 = sbr.rel (%p219) target = $region36
    $region35: #{block50_forward.6} parent=5 // pred_region
      %s223 = ssub.s32 %s13, 1
      %s224 = smul.u32 8, %s18
      %p225 = scmp.lt.s32.totalorder %s224, 15
      %s226 = scalar_select %p225, %s224, 15
      %s227 = smul.addr %s226, 8
      %s228 = scalar_lea.vmem %s0, %s227
      %p229 = pneg %p39
      %p230 = pneg %p36
      %p231 = pneg %p60
      %p232 = pneg %p57
      %p233 = pneg %p81
      %p234 = pneg %p78
      %p235 = pneg %p102
      %p236 = pneg %p99
      %p237 = pneg %p128
      %p238 = pneg %p125
      %s239 = smul.u32 8, %s18
      %p240 = scmp.lt.s32.totalorder %s239, 15
      %s241 = scalar_select %p240, %s239, 15
      %s242 = smul.addr %s241, 8
      %s243 = scalar_lea.vmem %s4, %s242
      %p244 = pneg %p154
      %p245 = pneg %p151
      %p246 = scmp.lt.s32.totalorder %s18, 1
      %s247 = scalar_select %p246, %s18, 1
      %s248 = scalar_lea.vmem %s5, %s247
      %p249 = pneg %p180
      %p250 = pneg %p177
      %p251 = scmp.lt.s32.totalorder %s18, 1
      %s252 = scalar_select %p251, %s18, 1
      %s253 = scalar_lea.vmem %s6, %s252
      %s254 = smul.u32 8, %s18
      %p255 = scmp.lt.s32.totalorder %s254, 15
      %s256 = scalar_select %p255, %s254, 15
      %s257 = smul.addr %s256, 8
      %s258 = scalar_lea.vmem %s0, %s257
      %s259 = smul.u32 8, %s18
      %s260 = smul.u32 8, %s18
      %p261 = scmp.lt.s32.totalorder %s260, 15
      %s262 = scalar_select %p261, %s260, 15
      %s263 = smul.addr %s262, 8
      %s264 = scalar_lea.vmem %s4, %s263
      %s265 = smul.u32 8, %s18
      %p266 = scmp.lt.s32.totalorder %s18, 1
      %s267 = scalar_select %p266, %s18, 1
      %s268 = scalar_lea.vmem %s5, %s267
      %p269 = scmp.lt.s32.totalorder %s18, 1
      %s270 = scalar_select %p269, %s18, 1
      %s271 = scalar_lea.vmem %s6, %s270
      %v272 = vld [vmem:[%s258] sm:$0xff]
      %v273 = vld [vmem:[%s258 + $0x8] sm:$0xff]
      %v274 = vld [vmem:[%s258 + $0x10] sm:$0xff]
      %v275 = vld [vmem:[%s258 + $0x18] sm:$0xff]
      %v276 = vld [vmem:[%s258 + $0x20] sm:$0xff]
      %v277 = vld [vmem:[%s258 + $0x28] sm:$0xff]
      %v278 = vld [vmem:[%s258 + $0x30] sm:$0xff]
      %v279 = vld [vmem:[%s258 + $0x38] sm:$0xff]
      %v280 = vld [vmem:[%s1] sm:$0x1]
      %v282 = vperm.slane %v280, 0
      %v284 = vmul.f32 %v272, %v282
      %v285 = vmul.f32 %v273, %v282
      %v286 = vmul.f32 %v274, %v282
      %v287 = vmul.f32 %v275, %v282
      %v288 = vmul.f32 %v276, %v282
      %v289 = vmul.f32 %v277, %v282
      %v290 = vmul.f32 %v278, %v282
      %v291 = vmul.f32 %v279, %v282
      %v292 = vld [vmem:[%s2] sm:$0x1]
      %v294 = vperm.slane %v292, 0
      %v296 = vadd.f32 %v284, %v294
      %v297 = vadd.f32 %v285, %v294
      %v298 = vadd.f32 %v286, %v294
      %v299 = vadd.f32 %v287, %v294
      %v300 = vadd.f32 %v288, %v294
      %v301 = vadd.f32 %v289, %v294
      %v302 = vadd.f32 %v290, %v294
      %v303 = vadd.f32 %v291, %v294
      %v304 = vmax.f32 %v296, 0.0
      %v305 = vmax.f32 %v297, 0.0
      %v306 = vmax.f32 %v298, 0.0
      %v307 = vmax.f32 %v299, 0.0
      %v308 = vmax.f32 %v300, 0.0
      %v309 = vmax.f32 %v301, 0.0
      %v310 = vmax.f32 %v302, 0.0
      %v311 = vmax.f32 %v303, 0.0
      %v312 = vld [vmem:[%s3] sm:$0xff]
      %v313 = vld [vmem:[%s3 + $0x8] sm:$0xff]
      %v314 = vld [vmem:[%s3 + $0x10] sm:$0xff]
      %v315 = vld [vmem:[%s3 + $0x18] sm:$0xff]
      %v316 = vld [vmem:[%s3 + $0x20] sm:$0xff]
      %v317 = vld [vmem:[%s3 + $0x28] sm:$0xff]
      %v318 = vld [vmem:[%s3 + $0x30] sm:$0xff]
      %v319 = vld [vmem:[%s3 + $0x38] sm:$0xff]
      %v320 = vld [vmem:[%s3 + $0x40] sm:$0xff]
      %v321 = vld [vmem:[%s3 + $0x48] sm:$0xff]
      %v322 = vld [vmem:[%s3 + $0x50] sm:$0xff]
      %v323 = vld [vmem:[%s3 + $0x58] sm:$0xff]
      %v324 = vld [vmem:[%s3 + $0x60] sm:$0xff]
      %v325 = vld [vmem:[%s3 + $0x68] sm:$0xff]
      %v326 = vld [vmem:[%s3 + $0x70] sm:$0xff]
      %v327 = vld [vmem:[%s3 + $0x78] sm:$0xff]
      %328 = vmatpush.msra.mxu0 %v327
      %329 = vmatpush.msra.mxu0 %v326
      %330 = vmatpush.msra.mxu0 %v325
      %331 = vmatpush.msra.mxu0 %v324
      %332 = vmatpush.msra.mxu0 %v323
      %333 = vmatpush.msra.mxu0 %v322
      %334 = vmatpush.msra.mxu0 %v321
      %335 = vmatpush.msra.mxu0 %v320
      %336 = vmatpush.msra.mxu0 %v319
      %337 = vmatpush.msra.mxu0 %v318
      %338 = vmatpush.msra.mxu0 %v317
      %339 = vmatpush.msra.mxu0 %v316
      %340 = vmatpush.msra.mxu0 %v315
      %341 = vmatpush.msra.mxu0 %v314
      %342 = vmatpush.msra.mxu0 %v313
      %343 = vmatpush.msra.mxu0 %v312
      %344 = vmatmul.f32.gmra.mxu0 %v304
      %v345 = vpop.f32.mrf.mxu0
      %v346 = vadd.f32 0.0, %v345
      %347 = vmatmul.f32.gmra.mxu0 %v305
      %v348 = vpop.f32.mrf.mxu0
      %v349 = vadd.f32 0.0, %v348
      %350 = vmatmul.f32.gmra.mxu0 %v306
      %v351 = vpop.f32.mrf.mxu0
      %v352 = vadd.f32 0.0, %v351
      %353 = vmatmul.f32.gmra.mxu0 %v307
      %v354 = vpop.f32.mrf.mxu0
      %v355 = vadd.f32 0.0, %v354
      %356 = vmatmul.f32.gmra.mxu0 %v308
      %v357 = vpop.f32.mrf.mxu0
      %v358 = vadd.f32 0.0, %v357
      %359 = vmatmul.f32.gmra.mxu0 %v309
      %v360 = vpop.f32.mrf.mxu0
      %v361 = vadd.f32 0.0, %v360
      %362 = vmatmul.f32.gmra.mxu0 %v310
      %v363 = vpop.f32.mrf.mxu0
      %v364 = vadd.f32 0.0, %v363
      %365 = vmatmul.f32.gmra.mxu0 %v311
      %v366 = vpop.f32.mrf.mxu0
      %v367 = vadd.f32 0.0, %v366
      %368 = vdwg.mxu0
      %369 = vst [vmem:[%s264] sm:$0xff] %v346
      %370 = vst [vmem:[%s264 + $0x8] sm:$0xff] %v349
      %371 = vst [vmem:[%s264 + $0x10] sm:$0xff] %v352
      %372 = vst [vmem:[%s264 + $0x18] sm:$0xff] %v355
      %373 = vst [vmem:[%s264 + $0x20] sm:$0xff] %v358
      %374 = vst [vmem:[%s264 + $0x28] sm:$0xff] %v361
      %375 = vst [vmem:[%s264 + $0x30] sm:$0xff] %v364
      %376 = vst [vmem:[%s264 + $0x38] sm:$0xff] %v367
      %v377 = vadd.f32 %v346, %v349
      %v378 = vadd.f32 %v377, %v352
      %v379 = vadd.f32 %v378, %v355
      %v380 = vadd.f32 %v379, %v358
      %v381 = vadd.f32 %v380, %v361
      %v382 = vadd.f32 %v381, %v364
      %v383 = vadd.f32 %v382, %v367
      %v384 = vrot.slane %v383, 4
      %v385 = vadd.f32 %v383, %v384
      %v386 = vrot.slane %v385, 2
      %v387 = vadd.f32 %v385, %v386
      %v388 = vrot.slane %v387, 1
      %v389 = vadd.f32 %v387, %v388
      %390 = vst [vmem:[%s268] sm:$0x1] %v389
      %v391 = vmul.f32 %v346, %v346
      %v392 = vmul.f32 %v349, %v349
      %v393 = vmul.f32 %v352, %v352
      %v394 = vmul.f32 %v355, %v355
      %v395 = vmul.f32 %v358, %v358
      %v396 = vmul.f32 %v361, %v361
      %v397 = vmul.f32 %v364, %v364
      %v398 = vmul.f32 %v367, %v367
      %v399 = vadd.f32 %v391, %v392
      %v400 = vadd.f32 %v399, %v393
      %v401 = vadd.f32 %v400, %v394
      %v402 = vadd.f32 %v401, %v395
      %v403 = vadd.f32 %v402, %v396
      %v404 = vadd.f32 %v403, %v397
      %v405 = vadd.f32 %v404, %v398
      %v406 = vrot.slane %v405, 4
      %v407 = vadd.f32 %v405, %v406
      %v408 = vrot.slane %v407, 2
      %v409 = vadd.f32 %v407, %v408
      %v410 = vrot.slane %v409, 1
      %v411 = vadd.f32 %v409, %v410
      %412 = vst [vmem:[%s271] sm:$0x1] %v411
      %s413 = smul.u32 8, %s18
      %p414 = scmp.lt.s32.totalorder %s413, 15
      %s415 = scalar_select %p414, %s413, 15
      %s416 = smul.addr %s415, 8
      %s417 = scalar_lea.vmem %s4, %s416
      %p418 = scmp.lt.s32.totalorder %s18, 1
      %s419 = scalar_select %p418, %s18, 1
      %s420 = scalar_lea.vmem %s5, %s419
      %p421 = scmp.lt.s32.totalorder %s18, 1
      %s422 = scalar_select %p421, %s18, 1
      %s423 = scalar_lea.vmem %s6, %s422
      // Predicated region
      $region37: #{block50_forward.6} parent=35 // pred_check
        %p424 = pneg %p125
      $region38: #{block50_forward.6} parent=35 // pred_check_branch
        %426 = sbr.rel (%p424) target = $region40
      $region39: #{block50_forward.6} parent=35 // pred_region
        %s427 = smul.u32 8, %s18
      $region40: #{block50_forward.6} parent=35 // pred_fallthru
        _
      // Predicated region
      $region41: #{block50_forward.6} parent=35 // pred_check
        %p428 = pneg %p151
      $region42: #{block50_forward.6} parent=35 // pred_check_branch
        %430 = sbr.rel (%p428) target = $region44
      $region43: #{block50_forward.6} parent=35 // pred_region
        _
      $region44: #{block50_forward.6} parent=35 // pred_fallthru
        _
      // Predicated region
      $region45: #{block50_forward.6} parent=35 // pred_check
        %p431 = pneg %p177
      $region46: #{block50_forward.6} parent=35 // pred_check_branch
        %433 = sbr.rel (%p431) target = $region48
      $region47: #{block50_forward.6} parent=35 // pred_region
        _
      $region48: #{block50_forward.6} parent=35 // pred_fallthru
        _
    $region36: #{block50_forward.6} parent=5 // pred_fallthru
      _
    %p434 = scmp.le.s32.totalorder 2, %s13
    // Predicated region
    $region49: #{block50_forward.6} parent=5 // pred_check
      %p435 = pneg %p434
    $region50: #{block50_forward.6} parent=5 // pred_check_branch
      %437 = sbr.rel (%p435) target = $region52
    $region51: #{block50_forward.6} parent=5 // pred_region
      %s438 = ssub.s32 %s13, 2
      // Predicated region
      $region53: #{block50_forward.6} parent=51 // pred_check
        %p439 = pneg %p131
      $region54: #{block50_forward.6} parent=51 // pred_check_branch
        %441 = sbr.rel (%p439) target = $region56
      $region55: #{block50_forward.6} parent=51 // pred_region
        %s442 = smul.u32 8, %s19
        %p443 = scmp.lt.s32.totalorder %s442, 15
        %s444 = scalar_select %p443, %s442, 15
        %s445 = smul.addr %s444, 8
        %s446 = scalar_lea.vmem %s4, %s445
      $region56: #{block50_forward.6} parent=51 // pred_fallthru
        _
      // Predicated region
      $region57: #{block50_forward.6} parent=51 // pred_check
        %p447 = pneg %p157
      $region58: #{block50_forward.6} parent=51 // pred_check_branch
        %449 = sbr.rel (%p447) target = $region60
      $region59: #{block50_forward.6} parent=51 // pred_region
        %p450 = scmp.lt.s32.totalorder %s19, 1
        %s451 = scalar_select %p450, %s19, 1
        %s452 = scalar_lea.vmem %s5, %s451
      $region60: #{block50_forward.6} parent=51 // pred_fallthru
        _
      // Predicated region
      $region61: #{block50_forward.6} parent=51 // pred_check
        %p453 = pneg %p183
      $region62: #{block50_forward.6} parent=51 // pred_check_branch
        %455 = sbr.rel (%p453) target = $region64
      $region63: #{block50_forward.6} parent=51 // pred_region
        %p456 = scmp.lt.s32.totalorder %s19, 1
        %s457 = scalar_select %p456, %s19, 1
        %s458 = scalar_lea.vmem %s6, %s457
      $region64: #{block50_forward.6} parent=51 // pred_fallthru
        _
    $region52: #{block50_forward.6} parent=5 // pred_fallthru
      _
  $region6: #{block50_forward.6} parent=0 // loop_footer
    %s17 = sadd.s32 1, %s13
  $region7: #{block50_forward.6} parent=0 // loop_footer_branch
    %12 = sbr.rel target = $region3
  $region8: #{block50_forward.6} parent=0 // loop_exit
    _

// kernel: block50_forward.7
$region0: #{block50_forward.7}
  #allocation0 [shape = 'u32[]', space=smem, size = 0x4, offset = 0x4, fixed_abs, tag = 'smem constant byte address 0x4 - core index']
  #allocation1 [shape = 'u32[72,128]{1,0:T(1,128)}', space=vmem, size = 0x9000, scoped, tag = 'internal scratch']
  %s0 = inlined_call_operand.vmem [shape: f32[128,128], index: 0, kind: input, shape index: {}]
  %s1 = inlined_call_operand.vmem [shape: f32[1,128], index: 1, kind: input, shape index: {}]
  %s2 = inlined_call_operand.vmem [shape: f32[1,128], index: 2, kind: input, shape index: {}]
  %s3 = inlined_call_operand.vmem [shape: f32[128,128], index: 3, kind: input, shape index: {}]
  %s4 = inlined_call_operand.vmem [shape: f32[1,128], index: 4, kind: input, shape index: {}]
  %s5 = inlined_call_operand.vmem [shape: f32[1,128], index: 5, kind: input, shape index: {}]
  %s6 = inlined_call_operand.hbm [shape: f32[128,128], index: 6, kind: output, shape index: {}]
  %s7 = sld [smem:[#allocation0]]
  $region57: #{block50_forward.7} parent=0
    _
  %s9 = ssub.s32 1, %s7
  %s10 = scalar_select 0, %s9, %s7
  $region1: #{block50_forward.7} parent=0
    #allocation2 [shape = 'u8[65536]{0}', space=vmem, size = 0x10000, scoped, tag = 'output window, operand 0']
    #allocation3 [shape = 's32[2]{0}', space=sflag, size = 0x8, scoped, tag = 'scoped memory for block50_forward.7']
    %11 = vsyncpa [#allocation3], 0
    %s12 = scalar_lea.sflag [#allocation3], 1
    %13 = vsyncpa %s12, 0
    loop: start=0, step=1, limit=4
    $region2: #{block50_forward.7} parent=1 // loop_pre_header
      _
    $region3: #{block50_forward.7} parent=1 // loop_header
      %s15 = sphi 0, %s19
      %p16 = scmp.ge.s32.totalorder %s15, 4
      %s25 = sphi 0, %s27
      %s28 = sphi 0, %s25
      %s29 = sphi 0, %s28
      %s45 = sphi 0, %s29
      %s49 = sphi 0, %s49
      %s51 = sphi 0, %s49
      %s52 = sphi 0, %s51
      %s66 = sphi 0, %s52
      %s70 = sphi 0, %s70
      %s72 = sphi 0, %s70
      %s73 = sphi 0, %s72
      %s87 = sphi 0, %s73
      %s93 = sphi 0, %s95
      %s96 = sphi 0, %s93
      %s97 = sphi 0, %s96
      %s113 = sphi 0, %s97
      %s117 = sphi 0, %s117
      %s119 = sphi 0, %s117
      %s120 = sphi 0, %s119
      %s134 = sphi 0, %s120
      %s138 = sphi 0, %s138
      %s140 = sphi 0, %s138
      %s141 = sphi 0, %s140
      %s155 = sphi 0, %s141
      %s161 = sphi 0, %s163
      %s164 = sphi 0, %s161
      %s165 = sphi 0, %s164
      %s181 = sphi 0, %s165
    $region4: #{block50_forward.7} parent=1 // loop_header_branch
      %18 = sbr.rel (%p16) target = $region8
    $region5: #{block50_forward.7} parent=1 // loop_body
      %s20 = ssub.s32 %s15, 1
      %s21 = ssub.s32 %s15, 2
      %s22 = sadd.s32 %s15, 1
      %s23 = ssub.s32 %s15, %s22
      %p24 = scmp.eq.s32.totalorder %s23, 0
      %s26 = sadd.s32 %s25, 1
      %s27 = scalar_select %p24, %s25, %s26
      %p30 = pneg %p24
      %p31 = scmp.eq.s32.totalorder %s15, 1
      %p32 = por %p30, %p31
      %p33 = scmp.ne.s32.totalorder %s25, %s28
      %p34 = scmp.eq.s32.totalorder %s15, 0
      %p35 = por %p33, %p34
      %p36 = scmp.ne.s32.totalorder %s25, %s28
      %p37 = scmp.eq.s32.totalorder %s20, 1
      %p38 = por %p36, %p37
      %p39 = scmp.ne.s32.totalorder %s28, %s29
      %p40 = scmp.eq.s32.totalorder %s20, 0
      %p41 = por %p39, %p40
      %p42 = scmp.ne.s32.totalorder %s28, %s29
      %p43 = scmp.eq.s32.totalorder %s21, 1
      %p44 = por %p42, %p43
      %p46 = scmp.ne.s32.totalorder %s29, %s45
      %p47 = scmp.eq.s32.totalorder %s21, 0
      %p48 = por %p46, %p47
      %s50 = sadd.s32 %s49, 1
      %p53 = scmp.eq.s32.totalorder %s15, 1
      %p54 = scmp.ne.s32.totalorder %s49, %s51
      %p55 = scmp.eq.s32.totalorder %s15, 0
      %p56 = por %p54, %p55
      %p57 = scmp.ne.s32.totalorder %s49, %s51
      %p58 = scmp.eq.s32.totalorder %s20, 1
      %p59 = por %p57, %p58
      %p60 = scmp.ne.s32.totalorder %s51, %s52
      %p61 = scmp.eq.s32.totalorder %s20, 0
      %p62 = por %p60, %p61
      %p63 = scmp.ne.s32.totalorder %s51, %s52
      %p64 = scmp.eq.s32.totalorder %s21, 1
      %p65 = por %p63, %p64
      %p67 = scmp.ne.s32.totalorder %s52, %s66
      %p68 = scmp.eq.s32.totalorder %s21, 0
      %p69 = por %p67, %p68
      %s71 = sadd.s32 %s70, 1
      %p74 = scmp.eq.s32.totalorder %s15, 1
      %p75 = scmp.ne.s32.totalorder %s70, %s72
      %p76 = scmp.eq.s32.totalorder %s15, 0
      %p77 = por %p75, %p76
      %p78 = scmp.ne.s32.totalorder %s70, %s72
      %p79 = scmp.eq.s32.totalorder %s20, 1
      %p80 = por %p78, %p79
      %p81 = scmp.ne.s32.totalorder %s72, %s73
      %p82 = scmp.eq.s32.totalorder %s20, 0
      %p83 = por %p81, %p82
      %p84 = scmp.ne.s32.totalorder %s72, %s73
      %p85 = scmp.eq.s32.totalorder %s21, 1
      %p86 = por %p84, %p85
      %p88 = scmp.ne.s32.totalorder %s73, %s87
      %p89 = scmp.eq.s32.totalorder %s21, 0
      %p90 = por %p88, %p89
      %s91 = ssub.s32 %s15, %s22
      %p92 = scmp.eq.s32.totalorder %s91, 0
      %s94 = sadd.s32 %s93, 1
      %s95 = scalar_select %p92, %s93, %s94
      %p98 = pneg %p92
      %p99 = scmp.eq.s32.totalorder %s15, 1
      %p100 = por %p98, %p99
      %p101 = scmp.ne.s32.totalorder %s93, %s96
      %p102 = scmp.eq.s32.totalorder %s15, 0
      %p103 = por %p101, %p102
      %p104 = scmp.ne.s32.totalorder %s93, %s96
      %p105 = scmp.eq.s32.totalorder %s20, 1
      %p106 = por %p104, %p105
      %p107 = scmp.ne.s32.totalorder %s96, %s97
      %p108 = scmp.eq.s32.totalorder %s20, 0
      %p109 = por %p107, %p108
      %p110 = scmp.ne.s32.totalorder %s96, %s97
      %p111 = scmp.eq.s32.totalorder %s21, 1
      %p112 = por %p110, %p111
      %p114 = scmp.ne.s32.totalorder %s97, %s113
      %p115 = scmp.eq.s32.totalorder %s21, 0
      %p116 = por %p114, %p115
      %s118 = sadd.s32 %s117, 1
      %p121 = scmp.eq.s32.totalorder %s15, 1
      %p122 = scmp.ne.s32.totalorder %s117, %s119
      %p123 = scmp.eq.s32.totalorder %s15, 0
      %p124 = por %p122, %p123
      %p125 = scmp.ne.s32.totalorder %s117, %s119
      %p126 = scmp.eq.s32.totalorder %s20, 1
      %p127 = por %p125, %p126
      %p128 = scmp.ne.s32.totalorder %s119, %s120
      %p129 = scmp.eq.s32.totalorder %s20, 0
      %p130 = por %p128, %p129
      %p131 = scmp.ne.s32.totalorder %s119, %s120
      %p132 = scmp.eq.s32.totalorder %s21, 1
      %p133 = por %p131, %p132
      %p135 = scmp.ne.s32.totalorder %s120, %s134
      %p136 = scmp.eq.s32.totalorder %s21, 0
      %p137 = por %p135, %p136
      %s139 = sadd.s32 %s138, 1
      %p142 = scmp.eq.s32.totalorder %s15, 1
      %p143 = scmp.ne.s32.totalorder %s138, %s140
      %p144 = scmp.eq.s32.totalorder %s15, 0
      %p145 = por %p143, %p144
      %p146 = scmp.ne.s32.totalorder %s138, %s140
      %p147 = scmp.eq.s32.totalorder %s20, 1
      %p148 = por %p146, %p147
      %p149 = scmp.ne.s32.totalorder %s140, %s141
      %p150 = scmp.eq.s32.totalorder %s20, 0
      %p151 = por %p149, %p150
      %p152 = scmp.ne.s32.totalorder %s140, %s141
      %p153 = scmp.eq.s32.totalorder %s21, 1
      %p154 = por %p152, %p153
      %p156 = scmp.ne.s32.totalorder %s141, %s155
      %p157 = scmp.eq.s32.totalorder %s21, 0
      %p158 = por %p156, %p157
      %s159 = ssub.s32 %s15, %s22
      %p160 = scmp.eq.s32.totalorder %s159, 0
      %s162 = sadd.s32 %s161, 1
      %s163 = scalar_select %p160, %s161, %s162
      %p166 = pneg %p160
      %p167 = scmp.eq.s32.totalorder %s15, 1
      %p168 = por %p166, %p167
      %p169 = scmp.ne.s32.totalorder %s161, %s164
      %p170 = scmp.eq.s32.totalorder %s15, 0
      %p171 = por %p169, %p170
      %p172 = scmp.ne.s32.totalorder %s161, %s164
      %p173 = scmp.eq.s32.totalorder %s20, 1
      %p174 = por %p172, %p173
      %p175 = scmp.ne.s32.totalorder %s164, %s165
      %p176 = scmp.eq.s32.totalorder %s20, 0
      %p177 = por %p175, %p176
      %p178 = scmp.ne.s32.totalorder %s164, %s165
      %p179 = scmp.eq.s32.totalorder %s21, 1
      %p180 = por %p178, %p179
      %p182 = scmp.ne.s32.totalorder %s165, %s181
      %p183 = scmp.eq.s32.totalorder %s21, 0
      %p184 = por %p182, %p183
      %p185 = scmp.le.s32.totalorder 1, %s15
      %p186 = scmp.lt.s32.totalorder %s15, 3
      %p187 = pnand %p185, %p186
      %p188 = pneg %p187
      // Predicated region
      $region9: #{block50_forward.7} parent=5 // pred_check
        _
      $region10: #{block50_forward.7} parent=5 // pred_check_branch
        %190 = sbr.rel (%p187) target = $region12
      $region11: #{block50_forward.7} parent=5 // pred_region
        %s191 = ssub.s32 %s15, 1
        // Predicated region
        $region13: #{block50_forward.7} parent=11 // pred_check
          %p192 = pneg %p62
        $region14: #{block50_forward.7} parent=11 // pred_check_branch
          %194 = sbr.rel (%p192) target = $region16
        $region15: #{block50_forward.7} parent=11 // pred_region
          _
        $region16: #{block50_forward.7} parent=11 // pred_fallthru
          _
        // Predicated region
        $region17: #{block50_forward.7} parent=11 // pred_check
          %p195 = pneg %p83
        $region18: #{block50_forward.7} parent=11 // pred_check_branch
          %197 = sbr.rel (%p195) target = $region20
        $region19: #{block50_forward.7} parent=11 // pred_region
          _
        $region20: #{block50_forward.7} parent=11 // pred_fallthru
          _
        // Predicated region
        $region21: #{block50_forward.7} parent=11 // pred_check
          %p198 = pneg %p130
        $region22: #{block50_forward.7} parent=11 // pred_check_branch
          %200 = sbr.rel (%p198) target = $region24
        $region23: #{block50_forward.7} parent=11 // pred_region
          _
        $region24: #{block50_forward.7} parent=11 // pred_fallthru
          _
        // Predicated region
        $region25: #{block50_forward.7} parent=11 // pred_check
          %p201 = pneg %p151
        $region26: #{block50_forward.7} parent=11 // pred_check_branch
          %203 = sbr.rel (%p201) target = $region28
        $region27: #{block50_forward.7} parent=11 // pred_region
          _
        $region28: #{block50_forward.7} parent=11 // pred_fallthru
          _
      $region12: #{block50_forward.7} parent=5 // pred_fallthru
        _
      %p204 = scmp.lt.s32.totalorder %s15, 2
      // Predicated region
      $region29: #{block50_forward.7} parent=5 // pred_check
        %p205 = pneg %p204
      $region30: #{block50_forward.7} parent=5 // pred_check_branch
        %207 = sbr.rel (%p205) target = $region32
      $region31: #{block50_forward.7} parent=5 // pred_region
        // Predicated region
        $region33: #{block50_forward.7} parent=31 // pred_check
          %p208 = pneg %p35
        $region34: #{block50_forward.7} parent=31 // pred_check_branch
          %210 = sbr.rel (%p208) target = $region36
        $region35: #{block50_forward.7} parent=31 // pred_region
          %s211 = smul.u32 8, %s15
          %p212 = scmp.lt.s32.totalorder %s211, 15
          %s213 = scalar_select %p212, %s211, 15
          %s214 = smul.addr %s213, 8
          %s215 = scalar_lea.vmem %s0, %s214
          %s216 = smul.u32 8, %s15
        $region36: #{block50_forward.7} parent=31 // pred_fallthru
          _
        // Predicated region
        $region37: #{block50_forward.7} parent=31 // pred_check
          %p217 = pneg %p103
        $region38: #{block50_forward.7} parent=31 // pred_check_branch
          %219 = sbr.rel (%p217) target = $region40
        $region39: #{block50_forward.7} parent=31 // pred_region
          %s220 = smul.u32 8, %s15
          %p221 = scmp.lt.s32.totalorder %s220, 15
          %s222 = scalar_select %p221, %s220, 15
          %s223 = smul.addr %s222, 8
          %s224 = scalar_lea.vmem %s3, %s223
          %s225 = smul.u32 8, %s15
        $region40: #{block50_forward.7} parent=31 // pred_fallthru
          _
      $region32: #{block50_forward.7} parent=5 // pred_fallthru
        _
      %p226 = scmp.le.s32.totalorder 1, %s15
      %p227 = scmp.lt.s32.totalorder %s15, 3
      %p228 = pnand %p226, %p227
      %p229 = pneg %p228
      // Predicated region
      $region41: #{block50_forward.7} parent=5 // pred_check
        _
      $region42: #{block50_forward.7} parent=5 // pred_check_branch
        %231 = sbr.rel (%p228) target = $region44
      $region43: #{block50_forward.7} parent=5 // pred_region
        %s232 = ssub.s32 %s15, 1
        %s233 = smul.u32 8, %s20
        %p234 = scmp.lt.s32.totalorder %s233, 15
        %s235 = scalar_select %p234, %s233, 15
        %s236 = smul.addr %s235, 8
        %s237 = scalar_lea.vmem %s0, %s236
        %p238 = pneg %p41
        %p239 = pneg %p38
        %p240 = pneg %p62
        %p241 = pneg %p59
        %p242 = pneg %p83
        %p243 = pneg %p80
        %s244 = smul.u32 8, %s20
        %p245 = scmp.lt.s32.totalorder %s244, 15
        %s246 = scalar_select %p245, %s244, 15
        %s247 = smul.addr %s246, 8
        %s248 = scalar_lea.vmem %s3, %s247
        %p249 = pneg %p109
        %p250 = pneg %p106
        %p251 = pneg %p130
        %p252 = pneg %p127
        %p253 = pneg %p151
        %p254 = pneg %p148
        %p255 = pneg %p177
        %p256 = pneg %p174
        %s257 = sand.u32 %s164, 1
        %s258 = scalar_lea.sflag [#allocation3], %s257
        %s259 = sand.u32 %s164, 1
        %s260 = smul.addr %s259, 64
        %s261 = scalar_lea.vmem [#allocation2], %s260
        %s262 = smul.u32 8, %s20
        %p263 = scmp.lt.s32.totalorder %s262, 15
        %s264 = scalar_select %p263, %s262, 15
        %s265 = smul.addr %s264, 8
        %s266 = scalar_lea.vmem %s0, %s265
        %s267 = smul.u32 8, %s20
        %s268 = smul.u32 8, %s20
        %p269 = scmp.lt.s32.totalorder %s268, 15
        %s270 = scalar_select %p269, %s268, 15
        %s271 = smul.addr %s270, 8
        %s272 = scalar_lea.vmem %s3, %s271
        %s273 = smul.u32 8, %s20
        %s274 = smul.u32 8, %s20
        %v275 = vld [vmem:[%s266] sm:$0xff]
        %v276 = vld [vmem:[%s266 + $0x8] sm:$0xff]
        %v277 = vld [vmem:[%s266 + $0x10] sm:$0xff]
        %v278 = vld [vmem:[%s266 + $0x18] sm:$0xff]
        %v279 = vld [vmem:[%s266 + $0x20] sm:$0xff]
        %v280 = vld [vmem:[%s266 + $0x28] sm:$0xff]
        %v281 = vld [vmem:[%s266 + $0x30] sm:$0xff]
        %v282 = vld [vmem:[%s266 + $0x38] sm:$0xff]
        %v283 = vld [vmem:[%s1] sm:$0x1]
        %v285 = vperm.slane %v283, 0
        %v287 = vmul.f32 %v275, %v285
        %v288 = vmul.f32 %v276, %v285
        %v289 = vmul.f32 %v277, %v285
        %v290 = vmul.f32 %v278, %v285
        %v291 = vmul.f32 %v279, %v285
        %v292 = vmul.f32 %v280, %v285
        %v293 = vmul.f32 %v281, %v285
        %v294 = vmul.f32 %v282, %v285
        %v295 = vld [vmem:[%s2] sm:$0x1]
        %v297 = vperm.slane %v295, 0
        %v299 = vadd.f32 %v287, %v297
        %v300 = vadd.f32 %v288, %v297
        %v301 = vadd.f32 %v289, %v297
        %v302 = vadd.f32 %v290, %v297
        %v303 = vadd.f32 %v291, %v297
        %v304 = vadd.f32 %v292, %v297
        %v305 = vadd.f32 %v293, %v297
        %v306 = vadd.f32 %v294, %v297
        %v307 = vld [vmem:[%s272] sm:$0xff]
        %v308 = vld [vmem:[%s272 + $0x8] sm:$0xff]
        %v309 = vld [vmem:[%s272 + $0x10] sm:$0xff]
        %v310 = vld [vmem:[%s272 + $0x18] sm:$0xff]
        %v311 = vld [vmem:[%s272 + $0x20] sm:$0xff]
        %v312 = vld [vmem:[%s272 + $0x28] sm:$0xff]
        %v313 = vld [vmem:[%s272 + $0x30] sm:$0xff]
        %v314 = vld [vmem:[%s272 + $0x38] sm:$0xff]
        %v315 = vld [vmem:[%s4] sm:$0x1]
        %v317 = vperm.slane %v315, 0
        %v319 = vmul.f32 %v307, %v317
        %v320 = vmul.f32 %v308, %v317
        %v321 = vmul.f32 %v309, %v317
        %v322 = vmul.f32 %v310, %v317
        %v323 = vmul.f32 %v311, %v317
        %v324 = vmul.f32 %v312, %v317
        %v325 = vmul.f32 %v313, %v317
        %v326 = vmul.f32 %v314, %v317
        %v327 = vadd.f32 %v299, %v319
        %v328 = vadd.f32 %v300, %v320
        %v329 = vadd.f32 %v301, %v321
        %v330 = vadd.f32 %v302, %v322
        %v331 = vadd.f32 %v303, %v323
        %v332 = vadd.f32 %v304, %v324
        %v333 = vadd.f32 %v305, %v325
        %v334 = vadd.f32 %v306, %v326
        %v335 = vld [vmem:[%s5] sm:$0x1]
        %v337 = vperm.slane %v335, 0
        %v339 = vadd.f32 %v327, %v337
        %v340 = vadd.f32 %v328, %v337
        %v341 = vadd.f32 %v329, %v337
        %v342 = vadd.f32 %v330, %v337
        %v343 = vadd.f32 %v331, %v337
        %v344 = vadd.f32 %v332, %v337
        %v345 = vadd.f32 %v333, %v337
        %v346 = vadd.f32 %v334, %v337
        %v347 = vmax.f32 %v339, 0.0
        %v348 = vmax.f32 %v340, 0.0
        %v349 = vmax.f32 %v341, 0.0
        %v350 = vmax.f32 %v342, 0.0
        %v351 = vmax.f32 %v343, 0.0
        %v352 = vmax.f32 %v344, 0.0
        %v353 = vmax.f32 %v345, 0.0
        %v354 = vmax.f32 %v346, 0.0
        %355 = vst [vmem:[%s261] sm:$0xff] %v347
        %356 = vst [vmem:[%s261 + $0x8] sm:$0xff] %v348
        %357 = vst [vmem:[%s261 + $0x10] sm:$0xff] %v349
        %358 = vst [vmem:[%s261 + $0x18] sm:$0xff] %v350
        %359 = vst [vmem:[%s261 + $0x20] sm:$0xff] %v351
        %360 = vst [vmem:[%s261 + $0x28] sm:$0xff] %v352
        %361 = vst [vmem:[%s261 + $0x30] sm:$0xff] %v353
        %362 = vst [vmem:[%s261 + $0x38] sm:$0xff] %v354
        %s363 = sand.u32 %s164, 1
        %s364 = scalar_lea.sflag [#allocation3], %s363
        %s365 = sand.u32 %s164, 1
        %s366 = smul.addr %s365, 64
        %s367 = scalar_lea.vmem [#allocation2], %s366
        // Predicated region
        $region45: #{block50_forward.7} parent=43 // pred_check
          %p368 = pneg %p174
        $region46: #{block50_forward.7} parent=43 // pred_check_branch
          %370 = sbr.rel (%p368) target = $region48
        $region47: #{block50_forward.7} parent=43 // pred_region
          %s371 = smul.u32 8, %s20
          %373 = vsyncadd %s364, 0
          %s374 = smul.addr %s371, 8
          %s375 = scalar_lea.hbm %s6, %s374
          %s376 = sshll.u32 %s367, 4
          %s377 = int_to_ptr.vmem [resolvable:$true] %s376
          %s378 = sshll.u32 %s375, 4
          %s379 = int_to_ptr.hbm [resolvable:$true] %s378
          %384 = dma.vmem_to_hbm [thread:$0]  %s377, 1024, %s379, %s364, 128, 128, 8
        $region48: #{block50_forward.7} parent=43 // pred_fallthru
          _
      $region44: #{block50_forward.7} parent=5 // pred_fallthru
        _
      %p385 = scmp.le.s32.totalorder 2, %s15
      // Predicated region
      $region49: #{block50_forward.7} parent=5 // pred_check
        %p386 = pneg %p385
      $region50: #{block50_forward.7} parent=5 // pred_check_branch
        %388 = sbr.rel (%p386) target = $region52
      $region51: #{block50_forward.7} parent=5 // pred_region
        %s389 = ssub.s32 %s15, 2
        // Predicated region
        $region53: #{block50_forward.7} parent=51 // pred_check
          %p390 = pneg %p180
        $region54: #{block50_forward.7} parent=51 // pred_check_branch
          %392 = sbr.rel (%p390) target = $region56
        $region55: #{block50_forward.7} parent=51 // pred_region
          %s393 = sand.u32 %s165, 1
          %s394 = scalar_lea.sflag [#allocation3], %s393
          %s395 = sand.u32 %s165, 1
          %s396 = smul.addr %s395, 64
          %s397 = scalar_lea.vmem [#allocation2], %s396
          %399 = dma.done %s394, 1024
        $region56: #{block50_forward.7} parent=51 // pred_fallthru
          _
      $region52: #{block50_forward.7} parent=5 // pred_fallthru
        _
    $region6: #{block50_forward.7} parent=1 // loop_footer
      %s19 = sadd.s32 1, %s15
    $region7: #{block50_forward.7} parent=1 // loop_footer_branch
      %14 = sbr.rel target = $region3
    $region8: #{block50_forward.7} parent=1 // loop_exit
      _
    %400 = vsyncpa [#allocation3], 1
    %s401 = scalar_lea.sflag [#allocation3], 1
    %402 = vsyncpa %s401, 1

// kernel: block50_forward.5
$region0: #{block50_forward.5}
  #allocation0 [shape = 'u32[]', space=smem, size = 0x4, offset = 0x4, fixed_abs, tag = 'smem constant byte address 0x4 - core index']
  #allocation1 [shape = 'u32[72,128]{1,0:T(1,128)}', space=vmem, size = 0x9000, scoped, tag = 'internal scratch']
  %s0 = inlined_call_operand.vmem [shape: f32[2,64,128], index: 0, kind: input, shape index: {}]
  %s1 = inlined_call_operand.vmem [shape: f32[1,128], index: 1, kind: input, shape index: {}]
  %s2 = inlined_call_operand.vmem [shape: f32[1,128], index: 2, kind: input, shape index: {}]
  %s3 = inlined_call_operand.vmem [shape: f32[1152,128], index: 3, kind: input, shape index: {}]
  %s4 = inlined_call_operand.vmem [shape: f32[2,64,128], index: 4, kind: output, shape index: {0}]
  %s5 = inlined_call_operand.vmem [shape: f32[2,1,128], index: 5, kind: output, shape index: {1}]
  %s6 = inlined_call_operand.vmem [shape: f32[2,1,128], index: 6, kind: output, shape index: {2}]
  %7 = xla_tuple %s4, %s5, %s6
  %s8 = sld [smem:[#allocation0]]
  $region65: #{block50_forward.5} parent=0
    _
  %s10 = ssub.s32 1, %s8
  %s11 = scalar_select 0, %s10, %s8
  loop: start=0, step=1, limit=4
  $region2: #{block50_forward.5} parent=0 // loop_pre_header
    _
  $region3: #{block50_forward.5} parent=0 // loop_header
    %s13 = sphi 0, %s17
    %p14 = scmp.ge.s32.totalorder %s13, 4
    %s23 = sphi 0, %s25
    %s26 = sphi 0, %s23
    %s27 = sphi 0, %s26
    %s43 = sphi 0, %s27
    %s47 = sphi 0, %s47
    %s49 = sphi 0, %s47
    %s50 = sphi 0, %s49
    %s64 = sphi 0, %s50
    %s68 = sphi 0, %s68
    %s70 = sphi 0, %s68
    %s71 = sphi 0, %s70
    %s85 = sphi 0, %s71
    %s89 = sphi 0, %s89
    %s91 = sphi 0, %s89
    %s92 = sphi 0, %s91
    %s106 = sphi 0, %s92
    %s112 = sphi 0, %s114
    %s115 = sphi 0, %s112
    %s116 = sphi 0, %s115
    %s132 = sphi 0, %s116
    %s138 = sphi 0, %s140
    %s141 = sphi 0, %s138
    %s142 = sphi 0, %s141
    %s158 = sphi 0, %s142
    %s164 = sphi 0, %s166
    %s167 = sphi 0, %s164
    %s168 = sphi 0, %s167
    %s184 = sphi 0, %s168
  $region4: #{block50_forward.5} parent=0 // loop_header_branch
    %16 = sbr.rel (%p14) target = $region8
  $region5: #{block50_forward.5} parent=0 // loop_body
    %s18 = ssub.s32 %s13, 1
    %s19 = ssub.s32 %s13, 2
    %s20 = sadd.s32 %s13, 1
    %s21 = ssub.s32 %s13, %s20
    %p22 = scmp.eq.s32.totalorder %s21, 0
    %s24 = sadd.s32 %s23, 1
    %s25 = scalar_select %p22, %s23, %s24
    %p28 = pneg %p22
    %p29 = scmp.eq.s32.totalorder %s13, 1
    %p30 = por %p28, %p29
    %p31 = scmp.ne.s32.totalorder %s23, %s26
    %p32 = scmp.eq.s32.totalorder %s13, 0
    %p33 = por %p31, %p32
    %p34 = scmp.ne.s32.totalorder %s23, %s26
    %p35 = scmp.eq.s32.totalorder %s18, 1
    %p36 = por %p34, %p35
    %p37 = scmp.ne.s32.totalorder %s26, %s27
    %p38 = scmp.eq.s32.totalorder %s18, 0
    %p39 = por %p37, %p38
    %p40 = scmp.ne.s32.totalorder %s26, %s27
    %p41 = scmp.eq.s32.totalorder %s19, 1
    %p42 = por %p40, %p41
    %p44 = scmp.ne.s32.totalorder %s27, %s43
    %p45 = scmp.eq.s32.totalorder %s19, 0
    %p46 = por %p44, %p45
    %s48 = sadd.s32 %s47, 1
    %p51 = scmp.eq.s32.totalorder %s13, 1
    %p52 = scmp.ne.s32.totalorder %s47, %s49
    %p53 = scmp.eq.s32.totalorder %s13, 0
    %p54 = por %p52, %p53
    %p55 = scmp.ne.s32.totalorder %s47, %s49
    %p56 = scmp.eq.s32.totalorder %s18, 1
    %p57 = por %p55, %p56
    %p58 = scmp.ne.s32.totalorder %s49, %s50
    %p59 = scmp.eq.s32.totalorder %s18, 0
    %p60 = por %p58, %p59
    %p61 = scmp.ne.s32.totalorder %s49, %s50
    %p62 = scmp.eq.s32.totalorder %s19, 1
    %p63 = por %p61, %p62
    %p65 = scmp.ne.s32.totalorder %s50, %s64
    %p66 = scmp.eq.s32.totalorder %s19, 0
    %p67 = por %p65, %p66
    %s69 = sadd.s32 %s68, 1
    %p72 = scmp.eq.s32.totalorder %s13, 1
    %p73 = scmp.ne.s32.totalorder %s68, %s70
    %p74 = scmp.eq.s32.totalorder %s13, 0
    %p75 = por %p73, %p74
    %p76 = scmp.ne.s32.totalorder %s68, %s70
    %p77 = scmp.eq.s32.totalorder %s18, 1
    %p78 = por %p76, %p77
    %p79 = scmp.ne.s32.totalorder %s70, %s71
    %p80 = scmp.eq.s32.totalorder %s18, 0
    %p81 = por %p79, %p80
    %p82 = scmp.ne.s32.totalorder %s70, %s71
    %p83 = scmp.eq.s32.totalorder %s19, 1
    %p84 = por %p82, %p83
    %p86 = scmp.ne.s32.totalorder %s71, %s85
    %p87 = scmp.eq.s32.totalorder %s19, 0
    %p88 = por %p86, %p87
    %s90 = sadd.s32 %s89, 1
    %p93 = scmp.eq.s32.totalorder %s13, 1
    %p94 = scmp.ne.s32.totalorder %s89, %s91
    %p95 = scmp.eq.s32.totalorder %s13, 0
    %p96 = por %p94, %p95
    %p97 = scmp.ne.s32.totalorder %s89, %s91
    %p98 = scmp.eq.s32.totalorder %s18, 1
    %p99 = por %p97, %p98
    %p100 = scmp.ne.s32.totalorder %s91, %s92
    %p101 = scmp.eq.s32.totalorder %s18, 0
    %p102 = por %p100, %p101
    %p103 = scmp.ne.s32.totalorder %s91, %s92
    %p104 = scmp.eq.s32.totalorder %s19, 1
    %p105 = por %p103, %p104
    %p107 = scmp.ne.s32.totalorder %s92, %s106
    %p108 = scmp.eq.s32.totalorder %s19, 0
    %p109 = por %p107, %p108
    %s110 = ssub.s32 %s13, %s20
    %p111 = scmp.eq.s32.totalorder %s110, 0
    %s113 = sadd.s32 %s112, 1
    %s114 = scalar_select %p111, %s112, %s113
    %p117 = pneg %p111
    %p118 = scmp.eq.s32.totalorder %s13, 1
    %p119 = por %p117, %p118
    %p120 = scmp.ne.s32.totalorder %s112, %s115
    %p121 = scmp.eq.s32.totalorder %s13, 0
    %p122 = por %p120, %p121
    %p123 = scmp.ne.s32.totalorder %s112, %s115
    %p124 = scmp.eq.s32.totalorder %s18, 1
    %p125 = por %p123, %p124
    %p126 = scmp.ne.s32.totalorder %s115, %s116
    %p127 = scmp.eq.s32.totalorder %s18, 0
    %p128 = por %p126, %p127
    %p129 = scmp.ne.s32.totalorder %s115, %s116
    %p130 = scmp.eq.s32.totalorder %s19, 1
    %p131 = por %p129, %p130
    %p133 = scmp.ne.s32.totalorder %s116, %s132
    %p134 = scmp.eq.s32.totalorder %s19, 0
    %p135 = por %p133, %p134
    %s136 = ssub.s32 %s13, %s20
    %p137 = scmp.eq.s32.totalorder %s136, 0
    %s139 = sadd.s32 %s138, 1
    %s140 = scalar_select %p137, %s138, %s139
    %p143 = pneg %p137
    %p144 = scmp.eq.s32.totalorder %s13, 1
    %p145 = por %p143, %p144
    %p146 = scmp.ne.s32.totalorder %s138, %s141
    %p147 = scmp.eq.s32.totalorder %s13, 0
    %p148 = por %p146, %p147
    %p149 = scmp.ne.s32.totalorder %s138, %s141
    %p150 = scmp.eq.s32.totalorder %s18, 1
    %p151 = por %p149, %p150
    %p152 = scmp.ne.s32.totalorder %s141, %s142
    %p153 = scmp.eq.s32.totalorder %s18, 0
    %p154 = por %p152, %p153
    %p155 = scmp.ne.s32.totalorder %s141, %s142
    %p156 = scmp.eq.s32.totalorder %s19, 1
    %p157 = por %p155, %p156
    %p159 = scmp.ne.s32.totalorder %s142, %s158
    %p160 = scmp.eq.s32.totalorder %s19, 0
    %p161 = por %p159, %p160
    %s162 = ssub.s32 %s13, %s20
    %p163 = scmp.eq.s32.totalorder %s162, 0
    %s165 = sadd.s32 %s164, 1
    %s166 = scalar_select %p163, %s164, %s165
    %p169 = pneg %p163
    %p170 = scmp.eq.s32.totalorder %s13, 1
    %p171 = por %p169, %p170
    %p172 = scmp.ne.s32.totalorder %s164, %s167
    %p173 = scmp.eq.s32.totalorder %s13, 0
    %p174 = por %p172, %p173
    %p175 = scmp.ne.s32.totalorder %s164, %s167
    %p176 = scmp.eq.s32.totalorder %s18, 1
    %p177 = por %p175, %p176
    %p178 = scmp.ne.s32.totalorder %s167, %s168
    %p179 = scmp.eq.s32.totalorder %s18, 0
    %p180 = por %p178, %p179
    %p181 = scmp.ne.s32.totalorder %s167, %s168
    %p182 = scmp.eq.s32.totalorder %s19, 1
    %p183 = por %p181, %p182
    %p185 = scmp.ne.s32.totalorder %s168, %s184
    %p186 = scmp.eq.s32.totalorder %s19, 0
    %p187 = por %p185, %p186
    %p188 = scmp.le.s32.totalorder 1, %s13
    %p189 = scmp.lt.s32.totalorder %s13, 3
    %p190 = pnand %p188, %p189
    %p191 = pneg %p190
    // Predicated region
    $region9: #{block50_forward.5} parent=5 // pred_check
      _
    $region10: #{block50_forward.5} parent=5 // pred_check_branch
      %193 = sbr.rel (%p190) target = $region12
    $region11: #{block50_forward.5} parent=5 // pred_region
      %s194 = ssub.s32 %s13, 1
      // Predicated region
      $region13: #{block50_forward.5} parent=11 // pred_check
        %p195 = pneg %p60
      $region14: #{block50_forward.5} parent=11 // pred_check_branch
        %197 = sbr.rel (%p195) target = $region16
      $region15: #{block50_forward.5} parent=11 // pred_region
        _
      $region16: #{block50_forward.5} parent=11 // pred_fallthru
        _
      // Predicated region
      $region17: #{block50_forward.5} parent=11 // pred_check
        %p198 = pneg %p81
      $region18: #{block50_forward.5} parent=11 // pred_check_branch
        %200 = sbr.rel (%p198) target = $region20
      $region19: #{block50_forward.5} parent=11 // pred_region
        _
      $region20: #{block50_forward.5} parent=11 // pred_fallthru
        _
      // Predicated region
      $region21: #{block50_forward.5} parent=11 // pred_check
        %p201 = pneg %p102
      $region22: #{block50_forward.5} parent=11 // pred_check_branch
        %203 = sbr.rel (%p201) target = $region24
      $region23: #{block50_forward.5} parent=11 // pred_region
        _
      $region24: #{block50_forward.5} parent=11 // pred_fallthru
        _
    $region12: #{block50_forward.5} parent=5 // pred_fallthru
      _
    %p204 = scmp.lt.s32.totalorder %s13, 2
    // Predicated region
    $region25: #{block50_forward.5} parent=5 // pred_check
      %p205 = pneg %p204
    $region26: #{block50_forward.5} parent=5 // pred_check_branch
      %207 = sbr.rel (%p205) target = $region28
    $region27: #{block50_forward.5} parent=5 // pred_region
      // Predicated region
      $region29: #{block50_forward.5} parent=27 // pred_check
        %p208 = pneg %p33
      $region30: #{block50_forward.5} parent=27 // pred_check_branch
        %210 = sbr.rel (%p208) target = $region32
      $region31: #{block50_forward.5} parent=27 // pred_region
        %p211 = scmp.lt.s32.totalorder %s13, 1
        %s212 = scalar_select %p211, %s13, 1
        %s213 = smul.addr %s212, 8
        %s214 = smul.addr %s213, 8
        %s215 = scalar_lea.vmem %s0, %s214
      $region32: #{block50_forward.5} parent=27 // pred_fallthru
        _
    $region28: #{block50_forward.5} parent=5 // pred_fallthru
      _
    %p216 = scmp.le.s32.totalorder 1, %s13
    %p217 = scmp.lt.s32.totalorder %s13, 3
    %p218 = pnand %p216, %p217
    %p219 = pneg %p218
    // Predicated region
    $region33: #{block50_forward.5} parent=5 // pred_check
      _
    $region34: #{block50_forward.5} parent=5 // pred_check_branch
      %221 = sbr.rel (%p218) target = $region36
    $region35: #{block50_forward.5} parent=5 // pred_region
      %s222 = ssub.s32 %s13, 1
      %p223 = scmp.lt.s32.totalorder %s18, 1
      %s224 = scalar_select %p223, %s18, 1
      %s225 = smul.addr %s224, 8
      %s226 = smul.addr %s225, 8
      %s227 = scalar_lea.vmem %s0, %s226
      %p228 = pneg %p39
      %p229 = pneg %p36
      %p230 = pneg %p60
      %p231 = pneg %p57
      %p232 = pneg %p81
      %p233 = pneg %p78
      %p234 = pneg %p102
      %p235 = pneg %p99
      %p236 = pneg %p128
      %p237 = pneg %p125
      %p238 = scmp.lt.s32.totalorder %s18, 1
      %s239 = scalar_select %p238, %s18, 1
      %s240 = smul.addr %s239, 8
      %s241 = smul.addr %s240, 8
      %s242 = scalar_lea.vmem %s4, %s241
      %p243 = pneg %p154
      %p244 = pneg %p151
      %p245 = scmp.lt.s32.totalorder %s18, 1
      %s246 = scalar_select %p245, %s18, 1
      %s247 = scalar_lea.vmem %s5, %s246
      %p248 = pneg %p180
      %p249 = pneg %p177
      %p250 = scmp.lt.s32.totalorder %s18, 1
      %s251 = scalar_select %p250, %s18, 1
      %s252 = scalar_lea.vmem %s6, %s251
      %p253 = scmp.lt.s32.totalorder %s18, 1
      %s254 = scalar_select %p253, %s18, 1
      %s255 = smul.addr %s254, 8
      %s256 = smul.addr %s255, 8
      %s257 = scalar_lea.vmem %s0, %s256
      %p258 = scmp.lt.s32.totalorder %s18, 1
      %s259 = scalar_select %p258, %s18, 1
      %s260 = smul.addr %s259, 8
      %s261 = smul.addr %s260, 8
      %s262 = scalar_lea.vmem %s4, %s261
      %p263 = scmp.lt.s32.totalorder %s18, 1
      %s264 = scalar_select %p263, %s18, 1
      %s265 = scalar_lea.vmem %s5, %s264
      %p266 = scmp.lt.s32.totalorder %s18, 1
      %s267 = scalar_select %p266, %s18, 1
      %s268 = scalar_lea.vmem %s6, %s267
      %v269 = vld [vmem:[%s257] sm:$0xff]
      %v270 = vld [vmem:[%s257 + $0x8] sm:$0xff]
      %v271 = vld [vmem:[%s257 + $0x10] sm:$0xff]
      %v272 = vld [vmem:[%s257 + $0x18] sm:$0xff]
      %v273 = vld [vmem:[%s257 + $0x20] sm:$0xff]
      %v274 = vld [vmem:[%s257 + $0x28] sm:$0xff]
      %v275 = vld [vmem:[%s257 + $0x30] sm:$0xff]
      %v276 = vld [vmem:[%s257 + $0x38] sm:$0xff]
      %v277 = vld [vmem:[%s1] sm:$0x1]
      %v279 = vperm.slane %v277, 0
      %v281 = vmul.f32 %v269, %v279
      %v282 = vmul.f32 %v270, %v279
      %v283 = vmul.f32 %v271, %v279
      %v284 = vmul.f32 %v272, %v279
      %v285 = vmul.f32 %v273, %v279
      %v286 = vmul.f32 %v274, %v279
      %v287 = vmul.f32 %v275, %v279
      %v288 = vmul.f32 %v276, %v279
      %v289 = vld [vmem:[%s2] sm:$0x1]
      %v291 = vperm.slane %v289, 0
      %v293 = vadd.f32 %v281, %v291
      %v294 = vadd.f32 %v282, %v291
      %v295 = vadd.f32 %v283, %v291
      %v296 = vadd.f32 %v284, %v291
      %v297 = vadd.f32 %v285, %v291
      %v298 = vadd.f32 %v286, %v291
      %v299 = vadd.f32 %v287, %v291
      %v300 = vadd.f32 %v288, %v291
      %v301 = vmax.f32 %v293, 0.0
      %v302 = vmax.f32 %v294, 0.0
      %v303 = vmax.f32 %v295, 0.0
      %v304 = vmax.f32 %v296, 0.0
      %v305 = vmax.f32 %v297, 0.0
      %v306 = vmax.f32 %v298, 0.0
      %v307 = vmax.f32 %v299, 0.0
      %v308 = vmax.f32 %v300, 0.0
      %v309 = vlaneseq
      %v310 = vshrl.u32 %v309, 7
      %v311 = vadd.s32 %v310, 8
      %v312 = vadd.s32 %v310, 16
      %v313 = vadd.s32 %v310, 24
      %v314 = vadd.s32 %v310, 32
      %v315 = vadd.s32 %v310, 40
      %v316 = vadd.s32 %v310, 48
      %v317 = vadd.s32 %v310, 56
      %v318 = vcvt.s32.f32 %v310
      %v319 = vcvt.s32.f32 %v311
      %v320 = vcvt.s32.f32 %v312
      %v321 = vcvt.s32.f32 %v313
      %v322 = vcvt.s32.f32 %v314
      %v323 = vcvt.s32.f32 %v315
      %v324 = vcvt.s32.f32 %v316
      %v325 = vcvt.s32.f32 %v317
      %v326 = vadd.f32 %v318, 0.5
      %v327 = vadd.f32 %v319, 0.5
      %v328 = vadd.f32 %v320, 0.5
      %v329 = vadd.f32 %v321, 0.5
      %v330 = vadd.f32 %v322, 0.5
      %v331 = vadd.f32 %v323, 0.5
      %v332 = vadd.f32 %v324, 0.5
      %v333 = vadd.f32 %v325, 0.5
      %v334 = vmul.f32 %v326, 0.125
      %v335 = vmul.f32 %v327, 0.125
      %v336 = vmul.f32 %v328, 0.125
      %v337 = vmul.f32 %v329, 0.125
      %v338 = vmul.f32 %v330, 0.125
      %v339 = vmul.f32 %v331, 0.125
      %v340 = vmul.f32 %v332, 0.125
      %v341 = vmul.f32 %v333, 0.125
      %v342 = vfloor.f32 %v334
      %v343 = vfloor.f32 %v335
      %v344 = vfloor.f32 %v336
      %v345 = vfloor.f32 %v337
      %v346 = vfloor.f32 %v338
      %v347 = vfloor.f32 %v339
      %v348 = vfloor.f32 %v340
      %v349 = vfloor.f32 %v341
      %v350 = vmul.f32 %v342, 8.0
      %v351 = vmul.f32 %v343, 8.0
      %v352 = vmul.f32 %v344, 8.0
      %v353 = vmul.f32 %v345, 8.0
      %v354 = vmul.f32 %v346, 8.0
      %v355 = vmul.f32 %v347, 8.0
      %v356 = vmul.f32 %v348, 8.0
      %v357 = vmul.f32 %v349, 8.0
      %v358 = vsub.f32 %v318, %v350
      %v359 = vsub.f32 %v319, %v351
      %v360 = vsub.f32 %v320, %v352
      %v361 = vsub.f32 %v321, %v353
      %v362 = vsub.f32 %v322, %v354
      %v363 = vsub.f32 %v323, %v355
      %v364 = vsub.f32 %v324, %v356
      %v365 = vsub.f32 %v325, %v357
      %v366 = vrot.slane %v301, 7
      %v367 = vrot.slane %v302, 7
      %v368 = vrot.slane %v303, 7
      %v369 = vrot.slane %v304, 7
      %v370 = vrot.slane %v305, 7
      %v371 = vrot.slane %v306, 7
      %v372 = vrot.slane %v307, 7
      %v373 = vrot.slane %v308, 7
      %vm374 = vcmp.lt.s32.totalorder %v310, 1
      %v375 = vsel %vm374, %v372, %v373
      %v376 = vsel %vm374, %v371, %v372
      %v377 = vsel %vm374, %v370, %v371
      %v378 = vsel %vm374, %v369, %v370
      %v379 = vsel %vm374, %v368, %v369
      %v380 = vsel %vm374, %v367, %v368
      %v381 = vsel %vm374, %v366, %v367
      %v382 = vsel %vm374, %v373, %v366
      %vm383 = vcmp.ge.f32.partialorder %v342, 1.0
      %vm384 = vcmp.ge.f32.partialorder %v343, 1.0
      %vm385 = vcmp.ge.f32.partialorder %v344, 1.0
      %vm386 = vcmp.ge.f32.partialorder %v345, 1.0
      %vm387 = vcmp.ge.f32.partialorder %v346, 1.0
      %vm388 = vcmp.ge.f32.partialorder %v347, 1.0
      %vm389 = vcmp.ge.f32.partialorder %v348, 1.0
      %vm390 = vcmp.ge.f32.partialorder %v349, 1.0
      %vm391 = vcmp.ge.f32.partialorder %v358, 1.0
      %vm392 = vcmp.ge.f32.partialorder %v359, 1.0
      %vm393 = vcmp.ge.f32.partialorder %v360, 1.0
      %vm394 = vcmp.ge.f32.partialorder %v361, 1.0
      %vm395 = vcmp.ge.f32.partialorder %v362, 1.0
      %vm396 = vcmp.ge.f32.partialorder %v363, 1.0
      %vm397 = vcmp.ge.f32.partialorder %v364, 1.0
      %vm398 = vcmp.ge.f32.partialorder %v365, 1.0
      %vm399 = vmand %vm383, %vm391
      %vm400 = vmand %vm384, %vm392
      %vm401 = vmand %vm385, %vm393
      %vm402 = vmand %vm386, %vm394
      %vm403 = vmand %vm387, %vm395
      %vm404 = vmand %vm388, %vm396
      %vm405 = vmand %vm389, %vm397
      %vm406 = vmand %vm390, %vm398
      %v407 = vsel %vm399, 1, 0
      %v408 = vsel %vm400, 1, 0
      %v409 = vsel %vm401, 1, 0
      %v410 = vsel %vm402, 1, 0
      %v411 = vsel %vm403, 1, 0
      %v412 = vsel %vm404, 1, 0
      %v413 = vsel %vm405, 1, 0
      %v414 = vsel %vm406, 1, 0
      %vm415 = vcmp.eq.s32.totalorder %v407, 1
      %vm416 = vcmp.eq.s32.totalorder %v408, 1
      %vm417 = vcmp.eq.s32.totalorder %v409, 1
      %vm418 = vcmp.eq.s32.totalorder %v410, 1
      %vm419 = vcmp.eq.s32.totalorder %v411, 1
      %vm420 = vcmp.eq.s32.totalorder %v412, 1
      %vm421 = vcmp.eq.s32.totalorder %v413, 1
      %vm422 = vcmp.eq.s32.totalorder %v414, 1
      %v423 = vsel %vm415, %v375, 0.0
      %v424 = vsel %vm416, %v382, 0.0
      %v425 = vsel %vm417, %v381, 0.0
      %v426 = vsel %vm418, %v380, 0.0
      %v427 = vsel %vm419, %v379, 0.0
      %v428 = vsel %vm420, %v378, 0.0
      %v429 = vsel %vm421, %v377, 0.0
      %v430 = vsel %vm422, %v376, 0.0
      %v431 = vsel %vm383, 1, 0
      %v432 = vsel %vm384, 1, 0
      %v433 = vsel %vm385, 1, 0
      %v434 = vsel %vm386, 1, 0
      %v435 = vsel %vm387, 1, 0
      %v436 = vsel %vm388, 1, 0
      %v437 = vsel %vm389, 1, 0
      %v438 = vsel %vm390, 1, 0
      %vm439 = vcmp.eq.s32.totalorder %v431, 1
      %vm440 = vcmp.eq.s32.totalorder %v432, 1
      %vm441 = vcmp.eq.s32.totalorder %v433, 1
      %vm442 = vcmp.eq.s32.totalorder %v434, 1
      %vm443 = vcmp.eq.s32.totalorder %v435, 1
      %vm444 = vcmp.eq.s32.totalorder %v436, 1
      %vm445 = vcmp.eq.s32.totalorder %v437, 1
      %vm446 = vcmp.eq.s32.totalorder %v438, 1
      %v447 = vsel %vm439, %v308, 0.0
      %v448 = vsel %vm440, %v301, 0.0
      %v449 = vsel %vm441, %v302, 0.0
      %v450 = vsel %vm442, %v303, 0.0
      %v451 = vsel %vm443, %v304, 0.0
      %v452 = vsel %vm444, %v305, 0.0
      %v453 = vsel %vm445, %v306, 0.0
      %v454 = vsel %vm446, %v307, 0.0
      %v455 = vrot.slane %v301, 1
      %v456 = vrot.slane %v302, 1
      %v457 = vrot.slane %v303, 1
      %v458 = vrot.slane %v304, 1
      %v459 = vrot.slane %v305, 1
      %v460 = vrot.slane %v306, 1
      %v461 = vrot.slane %v307, 1
      %v462 = vrot.slane %v308, 1
      %vm463 = vcmp.lt.s32.totalorder %v310, 7
      %v464 = vsel %vm463, %v461, %v462
      %v465 = vsel %vm463, %v460, %v461
      %v466 = vsel %vm463, %v459, %v460
      %v467 = vsel %vm463, %v458, %v459
      %v468 = vsel %vm463, %v457, %v458
      %v469 = vsel %vm463, %v456, %v457
      %v470 = vsel %vm463, %v455, %v456
      %v471 = vsel %vm463, %v462, %v455
      %vm472 = vcmp.lt.f32.partialorder %v358, 7.0
      %vm473 = vcmp.lt.f32.partialorder %v359, 7.0
      %vm474 = vcmp.lt.f32.partialorder %v360, 7.0
      %vm475 = vcmp.lt.f32.partialorder %v361, 7.0
      %vm476 = vcmp.lt.f32.partialorder %v362, 7.0
      %vm477 = vcmp.lt.f32.partialorder %v363, 7.0
      %vm478 = vcmp.lt.f32.partialorder %v364, 7.0
      %vm479 = vcmp.lt.f32.partialorder %v365, 7.0
      %vm480 = vmand %vm383, %vm472
      %vm481 = vmand %vm384, %vm473
      %vm482 = vmand %vm385, %vm474
      %vm483 = vmand %vm386, %vm475
      %vm484 = vmand %vm387, %vm476
      %vm485 = vmand %vm388, %vm477
      %vm486 = vmand %vm389, %vm478
      %vm487 = vmand %vm390, %vm479
      %v488 = vsel %vm480, 1, 0
      %v489 = vsel %vm481, 1, 0
      %v490 = vsel %vm482, 1, 0
      %v491 = vsel %vm483, 1, 0
      %v492 = vsel %vm484, 1, 0
      %v493 = vsel %vm485, 1, 0
      %v494 = vsel %vm486, 1, 0
      %v495 = vsel %vm487, 1, 0
      %vm496 = vcmp.eq.s32.totalorder %v488, 1
      %vm497 = vcmp.eq.s32.totalorder %v489, 1
      %vm498 = vcmp.eq.s32.totalorder %v490, 1
      %vm499 = vcmp.eq.s32.totalorder %v491, 1
      %vm500 = vcmp.eq.s32.totalorder %v492, 1
      %vm501 = vcmp.eq.s32.totalorder %v493, 1
      %vm502 = vcmp.eq.s32.totalorder %v494, 1
      %vm503 = vcmp.eq.s32.totalorder %v495, 1
      %v504 = vsel %vm496, %v471, 0.0
      %v505 = vsel %vm497, %v470, 0.0
      %v506 = vsel %vm498, %v469, 0.0
      %v507 = vsel %vm499, %v468, 0.0
      %v508 = vsel %vm500, %v467, 0.0
      %v509 = vsel %vm501, %v466, 0.0
      %v510 = vsel %vm502, %v465, 0.0
      %v511 = vsel %vm503, %v464, 0.0
      %v512 = vsel %vm391, 1, 0
      %v513 = vsel %vm392, 1, 0
      %v514 = vsel %vm393, 1, 0
      %v515 = vsel %vm394, 1, 0
      %v516 = vsel %vm395, 1, 0
      %v517 = vsel %vm396, 1, 0
      %v518 = vsel %vm397, 1, 0
      %v519 = vsel %vm398, 1, 0
      %vm520 = vcmp.eq.s32.totalorder %v512, 1
      %vm521 = vcmp.eq.s32.totalorder %v513, 1
      %vm522 = vcmp.eq.s32.totalorder %v514, 1
      %vm523 = vcmp.eq.s32.totalorder %v515, 1
      %vm524 = vcmp.eq.s32.totalorder %v516, 1
      %vm525 = vcmp.eq.s32.totalorder %v517, 1
      %vm526 = vcmp.eq.s32.totalorder %v518, 1
      %vm527 = vcmp.eq.s32.totalorder %v519, 1
      %v528 = vsel %vm520, %v382, 0.0
      %v529 = vsel %vm521, %v381, 0.0
      %v530 = vsel %vm522, %v380, 0.0
      %v531 = vsel %vm523, %v379, 0.0
      %v532 = vsel %vm524, %v378, 0.0
      %v533 = vsel %vm525, %v377, 0.0
      %v534 = vsel %vm526, %v376, 0.0
      %v535 = vsel %vm527, %v375, 0.0
      %v536 = vsel %vm472, 1, 0
      %v537 = vsel %vm473, 1, 0
      %v538 = vsel %vm474, 1, 0
      %v539 = vsel %vm475, 1, 0
      %v540 = vsel %vm476, 1, 0
      %v541 = vsel %vm477, 1, 0
      %v542 = vsel %vm478, 1, 0
      %v543 = vsel %vm479, 1, 0
      %vm544 = vcmp.eq.s32.totalorder %v536, 1
      %vm545 = vcmp.eq.s32.totalorder %v537, 1
      %vm546 = vcmp.eq.s32.totalorder %v538, 1
      %vm547 = vcmp.eq.s32.totalorder %v539, 1
      %vm548 = vcmp.eq.s32.totalorder %v540, 1
      %vm549 = vcmp.eq.s32.totalorder %v541, 1
      %vm550 = vcmp.eq.s32.totalorder %v542, 1
      %vm551 = vcmp.eq.s32.totalorder %v543, 1
      %v552 = vsel %vm544, %v470, 0.0
      %v553 = vsel %vm545, %v469, 0.0
      %v554 = vsel %vm546, %v468, 0.0
      %v555 = vsel %vm547, %v467, 0.0
      %v556 = vsel %vm548, %v466, 0.0
      %v557 = vsel %vm549, %v465, 0.0
      %v558 = vsel %vm550, %v464, 0.0
      %v559 = vsel %vm551, %v471, 0.0
      %vm560 = vcmp.lt.f32.partialorder %v342, 7.0
      %vm561 = vcmp.lt.f32.partialorder %v343, 7.0
      %vm562 = vcmp.lt.f32.partialorder %v344, 7.0
      %vm563 = vcmp.lt.f32.partialorder %v345, 7.0
      %vm564 = vcmp.lt.f32.partialorder %v346, 7.0
      %vm565 = vcmp.lt.f32.partialorder %v347, 7.0
      %vm566 = vcmp.lt.f32.partialorder %v348, 7.0
      %vm567 = vcmp.lt.f32.partialorder %v349, 7.0
      %vm568 = vmand %vm560, %vm391
      %vm569 = vmand %vm561, %vm392
      %vm570 = vmand %vm562, %vm393
      %vm571 = vmand %vm563, %vm394
      %vm572 = vmand %vm564, %vm395
      %vm573 = vmand %vm565, %vm396
      %vm574 = vmand %vm566, %vm397
      %vm575 = vmand %vm567, %vm398
      %v576 = vsel %vm568, 1, 0
      %v577 = vsel %vm569, 1, 0
      %v578 = vsel %vm570, 1, 0
      %v579 = vsel %vm571, 1, 0
      %v580 = vsel %vm572, 1, 0
      %v581 = vsel %vm573, 1, 0
      %v582 = vsel %vm574, 1, 0
      %v583 = vsel %vm575, 1, 0
      %vm584 = vcmp.eq.s32.totalorder %v576, 1
      %vm585 = vcmp.eq.s32.totalorder %v577, 1
      %vm586 = vcmp.eq.s32.totalorder %v578, 1
      %vm587 = vcmp.eq.s32.totalorder %v579, 1
      %vm588 = vcmp.eq.s32.totalorder %v580, 1
      %vm589 = vcmp.eq.s32.totalorder %v581, 1
      %vm590 = vcmp.eq.s32.totalorder %v582, 1
      %vm591 = vcmp.eq.s32.totalorder %v583, 1
      %v592 = vsel %vm584, %v381, 0.0
      %v593 = vsel %vm585, %v380, 0.0
      %v594 = vsel %vm586, %v379, 0.0
      %v595 = vsel %vm587, %v378, 0.0
      %v596 = vsel %vm588, %v377, 0.0
      %v597 = vsel %vm589, %v376, 0.0
      %v598 = vsel %vm590, %v375, 0.0
      %v599 = vsel %vm591, %v382, 0.0
      %v600 = vsel %vm560, 1, 0
      %v601 = vsel %vm561, 1, 0
      %v602 = vsel %vm562, 1, 0
      %v603 = vsel %vm563, 1, 0
      %v604 = vsel %vm564, 1, 0
      %v605 = vsel %vm565, 1, 0
      %v606 = vsel %vm566, 1, 0
      %v607 = vsel %vm567, 1, 0
      %vm608 = vcmp.eq.s32.totalorder %v600, 1
      %vm609 = vcmp.eq.s32.totalorder %v601, 1
      %vm610 = vcmp.eq.s32.totalorder %v602, 1
      %vm611 = vcmp.eq.s32.totalorder %v603, 1
      %vm612 = vcmp.eq.s32.totalorder %v604, 1
      %vm613 = vcmp.eq.s32.totalorder %v605, 1
      %vm614 = vcmp.eq.s32.totalorder %v606, 1
      %vm615 = vcmp.eq.s32.totalorder %v607, 1
      %v616 = vsel %vm608, %v302, 0.0
      %v617 = vsel %vm609, %v303, 0.0
      %v618 = vsel %vm610, %v304, 0.0
      %v619 = vsel %vm611, %v305, 0.0
      %v620 = vsel %vm612, %v306, 0.0
      %v621 = vsel %vm613, %v307, 0.0
      %v622 = vsel %vm614, %v308, 0.0
      %v623 = vsel %vm615, %v301, 0.0
      %vm624 = vmand %vm560, %vm472
      %vm625 = vmand %vm561, %vm473
      %vm626 = vmand %vm562, %vm474
      %vm627 = vmand %vm563, %vm475
      %vm628 = vmand %vm564, %vm476
      %vm629 = vmand %vm565, %vm477
      %vm630 = vmand %vm566, %vm478
      %vm631 = vmand %vm567, %vm479
      %v632 = vsel %vm624, 1, 0
      %v633 = vsel %vm625, 1, 0
      %v634 = vsel %vm626, 1, 0
      %v635 = vsel %vm627, 1, 0
      %v636 = vsel %vm628, 1, 0
      %v637 = vsel %vm629, 1, 0
      %v638 = vsel %vm630, 1, 0
      %v639 = vsel %vm631, 1, 0
      %vm640 = vcmp.eq.s32.totalorder %v632, 1
      %vm641 = vcmp.eq.s32.totalorder %v633, 1
      %vm642 = vcmp.eq.s32.totalorder %v634, 1
      %vm643 = vcmp.eq.s32.totalorder %v635, 1
      %vm644 = vcmp.eq.s32.totalorder %v636, 1
      %vm645 = vcmp.eq.s32.totalorder %v637, 1
      %vm646 = vcmp.eq.s32.totalorder %v638, 1
      %vm647 = vcmp.eq.s32.totalorder %v639, 1
      %v648 = vsel %vm640, %v469, 0.0
      %v649 = vsel %vm641, %v468, 0.0
      %v650 = vsel %vm642, %v467, 0.0
      %v651 = vsel %vm643, %v466, 0.0
      %v652 = vsel %vm644, %v465, 0.0
      %v653 = vsel %vm645, %v464, 0.0
      %v654 = vsel %vm646, %v471, 0.0
      %v655 = vsel %vm647, %v470, 0.0
      %v656 = vld [vmem:[%s3] sm:$0xff]
      %v657 = vld [vmem:[%s3 + $0x8] sm:$0xff]
      %v658 = vld [vmem:[%s3 + $0x10] sm:$0xff]
      %v659 = vld [vmem:[%s3 + $0x18] sm:$0xff]
      %v660 = vld [vmem:[%s3 + $0x20] sm:$0xff]
      %v661 = vld [vmem:[%s3 + $0x28] sm:$0xff]
      %v662 = vld [vmem:[%s3 + $0x30] sm:$0xff]
      %v663 = vld [vmem:[%s3 + $0x38] sm:$0xff]
      %v664 = vld [vmem:[%s3 + $0x40] sm:$0xff]
      %v665 = vld [vmem:[%s3 + $0x48] sm:$0xff]
      %v666 = vld [vmem:[%s3 + $0x50] sm:$0xff]
      %v667 = vld [vmem:[%s3 + $0x58] sm:$0xff]
      %v668 = vld [vmem:[%s3 + $0x60] sm:$0xff]
      %v669 = vld [vmem:[%s3 + $0x68] sm:$0xff]
      %v670 = vld [vmem:[%s3 + $0x70] sm:$0xff]
      %v671 = vld [vmem:[%s3 + $0x78] sm:$0xff]
      %v672 = vld [vmem:[%s3 + $0x80] sm:$0xff]
      %v673 = vld [vmem:[%s3 + $0x88] sm:$0xff]
      %v674 = vld [vmem:[%s3 + $0x90] sm:$0xff]
      %v675 = vld [vmem:[%s3 + $0x98] sm:$0xff]
      %v676 = vld [vmem:[%s3 + $0xa0] sm:$0xff]
      %v677 = vld [vmem:[%s3 + $0xa8] sm:$0xff]
      %v678 = vld [vmem:[%s3 + $0xb0] sm:$0xff]
      %v679 = vld [vmem:[%s3 + $0xb8] sm:$0xff]
      %v680 = vld [vmem:[%s3 + $0xc0] sm:$0xff]
      %v681 = vld [vmem:[%s3 + $0xc8] sm:$0xff]
      %v682 = vld [vmem:[%s3 + $0xd0] sm:$0xff]
      %v683 = vld [vmem:[%s3 + $0xd8] sm:$0xff]
      %v684 = vld [vmem:[%s3 + $0xe0] sm:$0xff]
      %v685 = vld [vmem:[%s3 + $0xe8] sm:$0xff]
      %v686 = vld [vmem:[%s3 + $0xf0] sm:$0xff]
      %v687 = vld [vmem:[%s3 + $0xf8] sm:$0xff]
      %v688 = vld [vmem:[%s3 + $0x100] sm:$0xff]
      %v689 = vld [vmem:[%s3 + $0x108] sm:$0xff]
      %v690 = vld [vmem:[%s3 + $0x110] sm:$0xff]
      %v691 = vld [vmem:[%s3 + $0x118] sm:$0xff]
      %v692 = vld [vmem:[%s3 + $0x120] sm:$0xff]
      %v693 = vld [vmem:[%s3 + $0x128] sm:$0xff]
      %v694 = vld [vmem:[%s3 + $0x130] sm:$0xff]
      %v695 = vld [vmem:[%s3 + $0x138] sm:$0xff]
      %v696 = vld [vmem:[%s3 + $0x140] sm:$0xff]
      %v697 = vld [vmem:[%s3 + $0x148] sm:$0xff]
      %v698 = vld [vmem:[%s3 + $0x150] sm:$0xff]
      %v699 = vld [vmem:[%s3 + $0x158] sm:$0xff]
      %v700 = vld [vmem:[%s3 + $0x160] sm:$0xff]
      %v701 = vld [vmem:[%s3 + $0x168] sm:$0xff]
      %v702 = vld [vmem:[%s3 + $0x170] sm:$0xff]
      %v703 = vld [vmem:[%s3 + $0x178] sm:$0xff]
      %v704 = vld [vmem:[%s3 + $0x180] sm:$0xff]
      %v705 = vld [vmem:[%s3 + $0x188] sm:$0xff]
      %v706 = vld [vmem:[%s3 + $0x190] sm:$0xff]
      %v707 = vld [vmem:[%s3 + $0x198] sm:$0xff]
      %v708 = vld [vmem:[%s3 + $0x1a0] sm:$0xff]
      %v709 = vld [vmem:[%s3 + $0x1a8] sm:$0xff]
      %v710 = vld [vmem:[%s3 + $0x1b0] sm:$0xff]
      %v711 = vld [vmem:[%s3 + $0x1b8] sm:$0xff]
      %v712 = vld [vmem:[%s3 + $0x1c0] sm:$0xff]
      %v713 = vld [vmem:[%s3 + $0x1c8] sm:$0xff]
      %v714 = vld [vmem:[%s3 + $0x1d0] sm:$0xff]
      %v715 = vld [vmem:[%s3 + $0x1d8] sm:$0xff]
      %v716 = vld [vmem:[%s3 + $0x1e0] sm:$0xff]
      %v717 = vld [vmem:[%s3 + $0x1e8] sm:$0xff]
      %v718 = vld [vmem:[%s3 + $0x1f0] sm:$0xff]
      %v719 = vld [vmem:[%s3 + $0x1f8] sm:$0xff]
      %v720 = vld [vmem:[%s3 + $0x200] sm:$0xff]
      %v721 = vld [vmem:[%s3 + $0x208] sm:$0xff]
      %v722 = vld [vmem:[%s3 + $0x210] sm:$0xff]
      %v723 = vld [vmem:[%s3 + $0x218] sm:$0xff]
      %v724 = vld [vmem:[%s3 + $0x220] sm:$0xff]
      %v725 = vld [vmem:[%s3 + $0x228] sm:$0xff]
      %v726 = vld [vmem:[%s3 + $0x230] sm:$0xff]
      %v727 = vld [vmem:[%s3 + $0x238] sm:$0xff]
      %v728 = vld [vmem:[%s3 + $0x240] sm:$0xff]
      %v729 = vld [vmem:[%s3 + $0x248] sm:$0xff]
      %v730 = vld [vmem:[%s3 + $0x250] sm:$0xff]
      %v731 = vld [vmem:[%s3 + $0x258] sm:$0xff]
      %v732 = vld [vmem:[%s3 + $0x260] sm:$0xff]
      %v733 = vld [vmem:[%s3 + $0x268] sm:$0xff]
      %v734 = vld [vmem:[%s3 + $0x270] sm:$0xff]
      %v735 = vld [vmem:[%s3 + $0x278] sm:$0xff]
      %v736 = vld [vmem:[%s3 + $0x280] sm:$0xff]
      %v737 = vld [vmem:[%s3 + $0x288] sm:$0xff]
      %v738 = vld [vmem:[%s3 + $0x290] sm:$0xff]
      %v739 = vld [vmem:[%s3 + $0x298] sm:$0xff]
      %v740 = vld [vmem:[%s3 + $0x2a0] sm:$0xff]
      %v741 = vld [vmem:[%s3 + $0x2a8] sm:$0xff]
      %v742 = vld [vmem:[%s3 + $0x2b0] sm:$0xff]
      %v743 = vld [vmem:[%s3 + $0x2b8] sm:$0xff]
      %v744 = vld [vmem:[%s3 + $0x2c0] sm:$0xff]
      %v745 = vld [vmem:[%s3 + $0x2c8] sm:$0xff]
      %v746 = vld [vmem:[%s3 + $0x2d0] sm:$0xff]
      %v747 = vld [vmem:[%s3 + $0x2d8] sm:$0xff]
      %v748 = vld [vmem:[%s3 + $0x2e0] sm:$0xff]
      %v749 = vld [vmem:[%s3 + $0x2e8] sm:$0xff]
      %v750 = vld [vmem:[%s3 + $0x2f0] sm:$0xff]
      %v751 = vld [vmem:[%s3 + $0x2f8] sm:$0xff]
      %v752 = vld [vmem:[%s3 + $0x300] sm:$0xff]
      %v753 = vld [vmem:[%s3 + $0x308] sm:$0xff]
      %v754 = vld [vmem:[%s3 + $0x310] sm:$0xff]
      %v755 = vld [vmem:[%s3 + $0x318] sm:$0xff]
      %v756 = vld [vmem:[%s3 + $0x320] sm:$0xff]
      %v757 = vld [vmem:[%s3 + $0x328] sm:$0xff]
      %v758 = vld [vmem:[%s3 + $0x330] sm:$0xff]
      %v759 = vld [vmem:[%s3 + $0x338] sm:$0xff]
      %v760 = vld [vmem:[%s3 + $0x340] sm:$0xff]
      %v761 = vld [vmem:[%s3 + $0x348] sm:$0xff]
      %v762 = vld [vmem:[%s3 + $0x350] sm:$0xff]
      %v763 = vld [vmem:[%s3 + $0x358] sm:$0xff]
      %v764 = vld [vmem:[%s3 + $0x360] sm:$0xff]
      %v765 = vld [vmem:[%s3 + $0x368] sm:$0xff]
      %v766 = vld [vmem:[%s3 + $0x370] sm:$0xff]
      %v767 = vld [vmem:[%s3 + $0x378] sm:$0xff]
      %v768 = vld [vmem:[%s3 + $0x380] sm:$0xff]
      %v769 = vld [vmem:[%s3 + $0x388] sm:$0xff]
      %v770 = vld [vmem:[%s3 + $0x390] sm:$0xff]
      %v771 = vld [vmem:[%s3 + $0x398] sm:$0xff]
      %v772 = vld [vmem:[%s3 + $0x3a0] sm:$0xff]
      %v773 = vld [vmem:[%s3 + $0x3a8] sm:$0xff]
      %v774 = vld [vmem:[%s3 + $0x3b0] sm:$0xff]
      %v775 = vld [vmem:[%s3 + $0x3b8] sm:$0xff]
      %v776 = vld [vmem:[%s3 + $0x3c0] sm:$0xff]
      %v777 = vld [vmem:[%s3 + $0x3c8] sm:$0xff]
      %v778 = vld [vmem:[%s3 + $0x3d0] sm:$0xff]
      %v779 = vld [vmem:[%s3 + $0x3d8] sm:$0xff]
      %v780 = vld [vmem:[%s3 + $0x3e0] sm:$0xff]
      %v781 = vld [vmem:[%s3 + $0x3e8] sm:$0xff]
      %v782 = vld [vmem:[%s3 + $0x3f0] sm:$0xff]
      %v783 = vld [vmem:[%s3 + $0x3f8] sm:$0xff]
      %v784 = vld [vmem:[%s3 + $0x400] sm:$0xff]
      %v785 = vld [vmem:[%s3 + $0x408] sm:$0xff]
      %v786 = vld [vmem:[%s3 + $0x410] sm:$0xff]
      %v787 = vld [vmem:[%s3 + $0x418] sm:$0xff]
      %v788 = vld [vmem:[%s3 + $0x420] sm:$0xff]
      %v789 = vld [vmem:[%s3 + $0x428] sm:$0xff]
      %v790 = vld [vmem:[%s3 + $0x430] sm:$0xff]
      %v791 = vld [vmem:[%s3 + $0x438] sm:$0xff]
      %v792 = vld [vmem:[%s3 + $0x440] sm:$0xff]
      %v793 = vld [vmem:[%s3 + $0x448] sm:$0xff]
      %v794 = vld [vmem:[%s3 + $0x450] sm:$0xff]
      %v795 = vld [vmem:[%s3 + $0x458] sm:$0xff]
      %v796 = vld [vmem:[%s3 + $0x460] sm:$0xff]
      %v797 = vld [vmem:[%s3 + $0x468] sm:$0xff]
      %v798 = vld [vmem:[%s3 + $0x470] sm:$0xff]
      %v799 = vld [vmem:[%s3 + $0x478] sm:$0xff]
      %800 = vmatpush.msra.mxu0 %v671
      %801 = vmatpush.msra.mxu0 %v670
      %802 = vmatpush.msra.mxu0 %v669
      %803 = vmatpush.msra.mxu0 %v668
      %804 = vmatpush.msra.mxu0 %v667
      %805 = vmatpush.msra.mxu0 %v666
      %806 = vmatpush.msra.mxu0 %v665
      %807 = vmatpush.msra.mxu0 %v664
      %808 = vmatpush.msra.mxu0 %v663
      %809 = vmatpush.msra.mxu0 %v662
      %810 = vmatpush.msra.mxu0 %v661
      %811 = vmatpush.msra.mxu0 %v660
      %812 = vmatpush.msra.mxu0 %v659
      %813 = vmatpush.msra.mxu0 %v658
      %814 = vmatpush.msra.mxu0 %v657
      %815 = vmatpush.msra.mxu0 %v656
      %816 = vmatmul.f32.gmra.mxu0 %v423
      %v817 = vpop.f32.mrf.mxu0
      %v818 = vadd.f32 0.0, %v817
      %819 = vmatmul.f32.gmra.mxu0 %v424
      %v820 = vpop.f32.mrf.mxu0
      %v821 = vadd.f32 0.0, %v820
      %822 = vmatmul.f32.gmra.mxu0 %v425
      %v823 = vpop.f32.mrf.mxu0
      %v824 = vadd.f32 0.0, %v823
      %825 = vmatmul.f32.gmra.mxu0 %v426
      %v826 = vpop.f32.mrf.mxu0
      %v827 = vadd.f32 0.0, %v826
      %828 = vmatmul.f32.gmra.mxu0 %v427
      %v829 = vpop.f32.mrf.mxu0
      %v830 = vadd.f32 0.0, %v829
      %831 = vmatmul.f32.gmra.mxu0 %v428
      %v832 = vpop.f32.mrf.mxu0
      %v833 = vadd.f32 0.0, %v832
      %834 = vmatmul.f32.gmra.mxu0 %v429
      %v835 = vpop.f32.mrf.mxu0
      %v836 = vadd.f32 0.0, %v835
      %837 = vmatmul.f32.gmra.mxu0 %v430
      %v838 = vpop.f32.mrf.mxu0
      %v839 = vadd.f32 0.0, %v838
      %840 = vdwg.mxu0
      %841 = vmatpush.msra.mxu0 %v687
      %842 = vmatpush.msra.mxu0 %v686
      %843 = vmatpush.msra.mxu0 %v685
      %844 = vmatpush.msra.mxu0 %v684
      %845 = vmatpush.msra.mxu0 %v683
      %846 = vmatpush.msra.mxu0 %v682
      %847 = vmatpush.msra.mxu0 %v681
      %848 = vmatpush.msra.mxu0 %v680
      %849 = vmatpush.msra.mxu0 %v679
      %850 = vmatpush.msra.mxu0 %v678
      %851 = vmatpush.msra.mxu0 %v677
      %852 = vmatpush.msra.mxu0 %v676
      %853 = vmatpush.msra.mxu0 %v675
      %854 = vmatpush.msra.mxu0 %v674
      %855 = vmatpush.msra.mxu0 %v673
      %856 = vmatpush.msra.mxu0 %v672
      %857 = vmatmul.f32.gmra.mxu0 %v447
      %v858 = vpop.f32.mrf.mxu0
      %v859 = vadd.f32 %v818, %v858
      %860 = vmatmul.f32.gmra.mxu0 %v448
      %v861 = vpop.f32.mrf.mxu0
      %v862 = vadd.f32 %v821, %v861
      %863 = vmatmul.f32.gmra.mxu0 %v449
      %v864 = vpop.f32.mrf.mxu0
      %v865 = vadd.f32 %v824, %v864
      %866 = vmatmul.f32.gmra.mxu0 %v450
      %v867 = vpop.f32.mrf.mxu0
      %v868 = vadd.f32 %v827, %v867
      %869 = vmatmul.f32.gmra.mxu0 %v451
      %v870 = vpop.f32.mrf.mxu0
      %v871 = vadd.f32 %v830, %v870
      %872 = vmatmul.f32.gmra.mxu0 %v452
      %v873 = vpop.f32.mrf.mxu0
      %v874 = vadd.f32 %v833, %v873
      %875 = vmatmul.f32.gmra.mxu0 %v453
      %v876 = vpop.f32.mrf.mxu0
      %v877 = vadd.f32 %v836, %v876
      %878 = vmatmul.f32.gmra.mxu0 %v454
      %v879 = vpop.f32.mrf.mxu0
      %v880 = vadd.f32 %v839, %v879
      %881 = vdwg.mxu0
      %882 = vmatpush.msra.mxu0 %v703
      %883 = vmatpush.msra.mxu0 %v702
      %884 = vmatpush.msra.mxu0 %v701
      %885 = vmatpush.msra.mxu0 %v700
      %886 = vmatpush.msra.mxu0 %v699
      %887 = vmatpush.msra.mxu0 %v698
      %888 = vmatpush.msra.mxu0 %v697
      %889 = vmatpush.msra.mxu0 %v696
      %890 = vmatpush.msra.mxu0 %v695
      %891 = vmatpush.msra.mxu0 %v694
      %892 = vmatpush.msra.mxu0 %v693
      %893 = vmatpush.msra.mxu0 %v692
      %894 = vmatpush.msra.mxu0 %v691
      %895 = vmatpush.msra.mxu0 %v690
      %896 = vmatpush.msra.mxu0 %v689
      %897 = vmatpush.msra.mxu0 %v688
      %898 = vmatmul.f32.gmra.mxu0 %v504
      %v899 = vpop.f32.mrf.mxu0
      %v900 = vadd.f32 %v859, %v899
      %901 = vmatmul.f32.gmra.mxu0 %v505
      %v902 = vpop.f32.mrf.mxu0
      %v903 = vadd.f32 %v862, %v902
      %904 = vmatmul.f32.gmra.mxu0 %v506
      %v905 = vpop.f32.mrf.mxu0
      %v906 = vadd.f32 %v865, %v905
      %907 = vmatmul.f32.gmra.mxu0 %v507
      %v908 = vpop.f32.mrf.mxu0
      %v909 = vadd.f32 %v868, %v908
      %910 = vmatmul.f32.gmra.mxu0 %v508
      %v911 = vpop.f32.mrf.mxu0
      %v912 = vadd.f32 %v871, %v911
      %913 = vmatmul.f32.gmra.mxu0 %v509
      %v914 = vpop.f32.mrf.mxu0
      %v915 = vadd.f32 %v874, %v914
      %916 = vmatmul.f32.gmra.mxu0 %v510
      %v917 = vpop.f32.mrf.mxu0
      %v918 = vadd.f32 %v877, %v917
      %919 = vmatmul.f32.gmra.mxu0 %v511
      %v920 = vpop.f32.mrf.mxu0
      %v921 = vadd.f32 %v880, %v920
      %922 = vdwg.mxu0
      %923 = vmatpush.msra.mxu0 %v719
      %924 = vmatpush.msra.mxu0 %v718
      %925 = vmatpush.msra.mxu0 %v717
      %926 = vmatpush.msra.mxu0 %v716
      %927 = vmatpush.msra.mxu0 %v715
      %928 = vmatpush.msra.mxu0 %v714
      %929 = vmatpush.msra.mxu0 %v713
      %930 = vmatpush.msra.mxu0 %v712
      %931 = vmatpush.msra.mxu0 %v711
      %932 = vmatpush.msra.mxu0 %v710
      %933 = vmatpush.msra.mxu0 %v709
      %934 = vmatpush.msra.mxu0 %v708
      %935 = vmatpush.msra.mxu0 %v707
      %936 = vmatpush.msra.mxu0 %v706
      %937 = vmatpush.msra.mxu0 %v705
      %938 = vmatpush.msra.mxu0 %v704
      %939 = vmatmul.f32.gmra.mxu0 %v528
      %v940 = vpop.f32.mrf.mxu0
      %v941 = vadd.f32 %v900, %v940
      %942 = vmatmul.f32.gmra.mxu0 %v529
      %v943 = vpop.f32.mrf.mxu0
      %v944 = vadd.f32 %v903, %v943
      %945 = vmatmul.f32.gmra.mxu0 %v530
      %v946 = vpop.f32.mrf.mxu0
      %v947 = vadd.f32 %v906, %v946
      %948 = vmatmul.f32.gmra.mxu0 %v531
      %v949 = vpop.f32.mrf.mxu0
      %v950 = vadd.f32 %v909, %v949
      %951 = vmatmul.f32.gmra.mxu0 %v532
      %v952 = vpop.f32.mrf.mxu0
      %v953 = vadd.f32 %v912, %v952
      %954 = vmatmul.f32.gmra.mxu0 %v533
      %v955 = vpop.f32.mrf.mxu0
      %v956 = vadd.f32 %v915, %v955
      %957 = vmatmul.f32.gmra.mxu0 %v534
      %v958 = vpop.f32.mrf.mxu0
      %v959 = vadd.f32 %v918, %v958
      %960 = vmatmul.f32.gmra.mxu0 %v535
      %v961 = vpop.f32.mrf.mxu0
      %v962 = vadd.f32 %v921, %v961
      %963 = vdwg.mxu0
      %964 = vmatpush.msra.mxu0 %v735
      %965 = vmatpush.msra.mxu0 %v734
      %966 = vmatpush.msra.mxu0 %v733
      %967 = vmatpush.msra.mxu0 %v732
      %968 = vmatpush.msra.mxu0 %v731
      %969 = vmatpush.msra.mxu0 %v730
      %970 = vmatpush.msra.mxu0 %v729
      %971 = vmatpush.msra.mxu0 %v728
      %972 = vmatpush.msra.mxu0 %v727
      %973 = vmatpush.msra.mxu0 %v726
      %974 = vmatpush.msra.mxu0 %v725
      %975 = vmatpush.msra.mxu0 %v724
      %976 = vmatpush.msra.mxu0 %v723
      %977 = vmatpush.msra.mxu0 %v722
      %978 = vmatpush.msra.mxu0 %v721
      %979 = vmatpush.msra.mxu0 %v720
      %980 = vmatmul.f32.gmra.mxu0 %v301
      %v981 = vpop.f32.mrf.mxu0
      %v982 = vadd.f32 %v941, %v981
      %983 = vmatmul.f32.gmra.mxu0 %v302
      %v984 = vpop.f32.mrf.mxu0
      %v985 = vadd.f32 %v944, %v984
      %986 = vmatmul.f32.gmra.mxu0 %v303
      %v987 = vpop.f32.mrf.mxu0
      %v988 = vadd.f32 %v947, %v987
      %989 = vmatmul.f32.gmra.mxu0 %v304
      %v990 = vpop.f32.mrf.mxu0
      %v991 = vadd.f32 %v950, %v990
      %992 = vmatmul.f32.gmra.mxu0 %v305
      %v993 = vpop.f32.mrf.mxu0
      %v994 = vadd.f32 %v953, %v993
      %995 = vmatmul.f32.gmra.mxu0 %v306
      %v996 = vpop.f32.mrf.mxu0
      %v997 = vadd.f32 %v956, %v996
      %998 = vmatmul.f32.gmra.mxu0 %v307
      %v999 = vpop.f32.mrf.mxu0
      %v1000 = vadd.f32 %v959, %v999
      %1001 = vmatmul.f32.gmra.mxu0 %v308
      %v1002 = vpop.f32.mrf.mxu0
      %v1003 = vadd.f32 %v962, %v1002
      %1004 = vdwg.mxu0
      %1005 = vmatpush.msra.mxu0 %v751
      %1006 = vmatpush.msra.mxu0 %v750
      %1007 = vmatpush.msra.mxu0 %v749
      %1008 = vmatpush.msra.mxu0 %v748
      %1009 = vmatpush.msra.mxu0 %v747
      %1010 = vmatpush.msra.mxu0 %v746
      %1011 = vmatpush.msra.mxu0 %v745
      %1012 = vmatpush.msra.mxu0 %v744
      %1013 = vmatpush.msra.mxu0 %v743
      %1014 = vmatpush.msra.mxu0 %v742
      %1015 = vmatpush.msra.mxu0 %v741
      %1016 = vmatpush.msra.mxu0 %v740
      %1017 = vmatpush.msra.mxu0 %v739
      %1018 = vmatpush.msra.mxu0 %v738
      %1019 = vmatpush.msra.mxu0 %v737
      %1020 = vmatpush.msra.mxu0 %v736
      %1021 = vmatmul.f32.gmra.mxu0 %v552
      %v1022 = vpop.f32.mrf.mxu0
      %v1023 = vadd.f32 %v982, %v1022
      %1024 = vmatmul.f32.gmra.mxu0 %v553
      %v1025 = vpop.f32.mrf.mxu0
      %v1026 = vadd.f32 %v985, %v1025
      %1027 = vmatmul.f32.gmra.mxu0 %v554
      %v1028 = vpop.f32.mrf.mxu0
      %v1029 = vadd.f32 %v988, %v1028
      %1030 = vmatmul.f32.gmra.mxu0 %v555
      %v1031 = vpop.f32.mrf.mxu0
      %v1032 = vadd.f32 %v991, %v1031
      %1033 = vmatmul.f32.gmra.mxu0 %v556
      %v1034 = vpop.f32.mrf.mxu0
      %v1035 = vadd.f32 %v994, %v1034
      %1036 = vmatmul.f32.gmra.mxu0 %v557
      %v1037 = vpop.f32.mrf.mxu0
      %v1038 = vadd.f32 %v997, %v1037
      %1039 = vmatmul.f32.gmra.mxu0 %v558
      %v1040 = vpop.f32.mrf.mxu0
      %v1041 = vadd.f32 %v1000, %v1040
      %1042 = vmatmul.f32.gmra.mxu0 %v559
      %v1043 = vpop.f32.mrf.mxu0
      %v1044 = vadd.f32 %v1003, %v1043
      %1045 = vdwg.mxu0
      %1046 = vmatpush.msra.mxu0 %v767
      %1047 = vmatpush.msra.mxu0 %v766
      %1048 = vmatpush.msra.mxu0 %v765
      %1049 = vmatpush.msra.mxu0 %v764
      %1050 = vmatpush.msra.mxu0 %v763
      %1051 = vmatpush.msra.mxu0 %v762
      %1052 = vmatpush.msra.mxu0 %v761
      %1053 = vmatpush.msra.mxu0 %v760
      %1054 = vmatpush.msra.mxu0 %v759
      %1055 = vmatpush.msra.mxu0 %v758
      %1056 = vmatpush.msra.mxu0 %v757
      %1057 = vmatpush.msra.mxu0 %v756
      %1058 = vmatpush.msra.mxu0 %v755
      %1059 = vmatpush.msra.mxu0 %v754
      %1060 = vmatpush.msra.mxu0 %v753
      %1061 = vmatpush.msra.mxu0 %v752
      %1062 = vmatmul.f32.gmra.mxu0 %v592
      %v1063 = vpop.f32.mrf.mxu0
      %v1064 = vadd.f32 %v1023, %v1063
      %1065 = vmatmul.f32.gmra.mxu0 %v593
      %v1066 = vpop.f32.mrf.mxu0
      %v1067 = vadd.f32 %v1026, %v1066
      %1068 = vmatmul.f32.gmra.mxu0 %v594
      %v1069 = vpop.f32.mrf.mxu0
      %v1070 = vadd.f32 %v1029, %v1069
      %1071 = vmatmul.f32.gmra.mxu0 %v595
      %v1072 = vpop.f32.mrf.mxu0
      %v1073 = vadd.f32 %v1032, %v1072
      %1074 = vmatmul.f32.gmra.mxu0 %v596
      %v1075 = vpop.f32.mrf.mxu0
      %v1076 = vadd.f32 %v1035, %v1075
      %1077 = vmatmul.f32.gmra.mxu0 %v597
      %v1078 = vpop.f32.mrf.mxu0
      %v1079 = vadd.f32 %v1038, %v1078
      %1080 = vmatmul.f32.gmra.mxu0 %v598
      %v1081 = vpop.f32.mrf.mxu0
      %v1082 = vadd.f32 %v1041, %v1081
      %1083 = vmatmul.f32.gmra.mxu0 %v599
      %v1084 = vpop.f32.mrf.mxu0
      %v1085 = vadd.f32 %v1044, %v1084
      %1086 = vdwg.mxu0
      %1087 = vmatpush.msra.mxu0 %v783
      %1088 = vmatpush.msra.mxu0 %v782
      %1089 = vmatpush.msra.mxu0 %v781
      %1090 = vmatpush.msra.mxu0 %v780
      %1091 = vmatpush.msra.mxu0 %v779
      %1092 = vmatpush.msra.mxu0 %v778
      %1093 = vmatpush.msra.mxu0 %v777
      %1094 = vmatpush.msra.mxu0 %v776
      %1095 = vmatpush.msra.mxu0 %v775
      %1096 = vmatpush.msra.mxu0 %v774
      %1097 = vmatpush.msra.mxu0 %v773
      %1098 = vmatpush.msra.mxu0 %v772
      %1099 = vmatpush.msra.mxu0 %v771
      %1100 = vmatpush.msra.mxu0 %v770
      %1101 = vmatpush.msra.mxu0 %v769
      %1102 = vmatpush.msra.mxu0 %v768
      %1103 = vmatmul.f32.gmra.mxu0 %v616
      %v1104 = vpop.f32.mrf.mxu0
      %v1105 = vadd.f32 %v1064, %v1104
      %1106 = vmatmul.f32.gmra.mxu0 %v617
      %v1107 = vpop.f32.mrf.mxu0
      %v1108 = vadd.f32 %v1067, %v1107
      %1109 = vmatmul.f32.gmra.mxu0 %v618
      %v1110 = vpop.f32.mrf.mxu0
      %v1111 = vadd.f32 %v1070, %v1110
      %1112 = vmatmul.f32.gmra.mxu0 %v619
      %v1113 = vpop.f32.mrf.mxu0
      %v1114 = vadd.f32 %v1073, %v1113
      %1115 = vmatmul.f32.gmra.mxu0 %v620
      %v1116 = vpop.f32.mrf.mxu0
      %v1117 = vadd.f32 %v1076, %v1116
      %1118 = vmatmul.f32.gmra.mxu0 %v621
      %v1119 = vpop.f32.mrf.mxu0
      %v1120 = vadd.f32 %v1079, %v1119
      %1121 = vmatmul.f32.gmra.mxu0 %v622
      %v1122 = vpop.f32.mrf.mxu0
      %v1123 = vadd.f32 %v1082, %v1122
      %1124 = vmatmul.f32.gmra.mxu0 %v623
      %v1125 = vpop.f32.mrf.mxu0
      %v1126 = vadd.f32 %v1085, %v1125
      %1127 = vdwg.mxu0
      %1128 = vmatpush.msra.mxu0 %v799
      %1129 = vmatpush.msra.mxu0 %v798
      %1130 = vmatpush.msra.mxu0 %v797
      %1131 = vmatpush.msra.mxu0 %v796
      %1132 = vmatpush.msra.mxu0 %v795
      %1133 = vmatpush.msra.mxu0 %v794
      %1134 = vmatpush.msra.mxu0 %v793
      %1135 = vmatpush.msra.mxu0 %v792
      %1136 = vmatpush.msra.mxu0 %v791
      %1137 = vmatpush.msra.mxu0 %v790
      %1138 = vmatpush.msra.mxu0 %v789
      %1139 = vmatpush.msra.mxu0 %v788
      %1140 = vmatpush.msra.mxu0 %v787
      %1141 = vmatpush.msra.mxu0 %v786
      %1142 = vmatpush.msra.mxu0 %v785
      %1143 = vmatpush.msra.mxu0 %v784
      %1144 = vmatmul.f32.gmra.mxu0 %v648
      %v1145 = vpop.f32.mrf.mxu0
      %v1146 = vadd.f32 %v1105, %v1145
      %1147 = vmatmul.f32.gmra.mxu0 %v649
      %v1148 = vpop.f32.mrf.mxu0
      %v1149 = vadd.f32 %v1108, %v1148
      %1150 = vmatmul.f32.gmra.mxu0 %v650
      %v1151 = vpop.f32.mrf.mxu0
      %v1152 = vadd.f32 %v1111, %v1151
      %1153 = vmatmul.f32.gmra.mxu0 %v651
      %v1154 = vpop.f32.mrf.mxu0
      %v1155 = vadd.f32 %v1114, %v1154
      %1156 = vmatmul.f32.gmra.mxu0 %v652
      %v1157 = vpop.f32.mrf.mxu0
      %v1158 = vadd.f32 %v1117, %v1157
      %1159 = vmatmul.f32.gmra.mxu0 %v653
      %v1160 = vpop.f32.mrf.mxu0
      %v1161 = vadd.f32 %v1120, %v1160
      %1162 = vmatmul.f32.gmra.mxu0 %v654
      %v1163 = vpop.f32.mrf.mxu0
      %v1164 = vadd.f32 %v1123, %v1163
      %1165 = vmatmul.f32.gmra.mxu0 %v655
      %v1166 = vpop.f32.mrf.mxu0
      %v1167 = vadd.f32 %v1126, %v1166
      %1168 = vdwg.mxu0
      %1169 = vst [vmem:[%s262] sm:$0xff] %v1146
      %1170 = vst [vmem:[%s262 + $0x8] sm:$0xff] %v1149
      %1171 = vst [vmem:[%s262 + $0x10] sm:$0xff] %v1152
      %1172 = vst [vmem:[%s262 + $0x18] sm:$0xff] %v1155
      %1173 = vst [vmem:[%s262 + $0x20] sm:$0xff] %v1158
      %1174 = vst [vmem:[%s262 + $0x28] sm:$0xff] %v1161
      %1175 = vst [vmem:[%s262 + $0x30] sm:$0xff] %v1164
      %1176 = vst [vmem:[%s262 + $0x38] sm:$0xff] %v1167
      %v1177 = vadd.f32 %v1146, %v1149
      %v1178 = vadd.f32 %v1177, %v1152
      %v1179 = vadd.f32 %v1178, %v1155
      %v1180 = vadd.f32 %v1179, %v1158
      %v1181 = vadd.f32 %v1180, %v1161
      %v1182 = vadd.f32 %v1181, %v1164
      %v1183 = vadd.f32 %v1182, %v1167
      %v1184 = vrot.slane %v1183, 4
      %v1185 = vadd.f32 %v1183, %v1184
      %v1186 = vrot.slane %v1185, 2
      %v1187 = vadd.f32 %v1185, %v1186
      %v1188 = vrot.slane %v1187, 1
      %v1189 = vadd.f32 %v1187, %v1188
      %1190 = vst [vmem:[%s265] sm:$0x1] %v1189
      %v1191 = vmul.f32 %v1146, %v1146
      %v1192 = vmul.f32 %v1149, %v1149
      %v1193 = vmul.f32 %v1152, %v1152
      %v1194 = vmul.f32 %v1155, %v1155
      %v1195 = vmul.f32 %v1158, %v1158
      %v1196 = vmul.f32 %v1161, %v1161
      %v1197 = vmul.f32 %v1164, %v1164
      %v1198 = vmul.f32 %v1167, %v1167
      %v1199 = vadd.f32 %v1191, %v1192
      %v1200 = vadd.f32 %v1199, %v1193
      %v1201 = vadd.f32 %v1200, %v1194
      %v1202 = vadd.f32 %v1201, %v1195
      %v1203 = vadd.f32 %v1202, %v1196
      %v1204 = vadd.f32 %v1203, %v1197
      %v1205 = vadd.f32 %v1204, %v1198
      %v1206 = vrot.slane %v1205, 4
      %v1207 = vadd.f32 %v1205, %v1206
      %v1208 = vrot.slane %v1207, 2
      %v1209 = vadd.f32 %v1207, %v1208
      %v1210 = vrot.slane %v1209, 1
      %v1211 = vadd.f32 %v1209, %v1210
      %1212 = vst [vmem:[%s268] sm:$0x1] %v1211
      %p1213 = scmp.lt.s32.totalorder %s18, 1
      %s1214 = scalar_select %p1213, %s18, 1
      %s1215 = smul.addr %s1214, 8
      %s1216 = smul.addr %s1215, 8
      %s1217 = scalar_lea.vmem %s4, %s1216
      %p1218 = scmp.lt.s32.totalorder %s18, 1
      %s1219 = scalar_select %p1218, %s18, 1
      %s1220 = scalar_lea.vmem %s5, %s1219
      %p1221 = scmp.lt.s32.totalorder %s18, 1
      %s1222 = scalar_select %p1221, %s18, 1
      %s1223 = scalar_lea.vmem %s6, %s1222
      // Predicated region
      $region37: #{block50_forward.5} parent=35 // pred_check
        %p1224 = pneg %p125
      $region38: #{block50_forward.5} parent=35 // pred_check_branch
        %1226 = sbr.rel (%p1224) target = $region40
      $region39: #{block50_forward.5} parent=35 // pred_region
        _
      $region40: #{block50_forward.5} parent=35 // pred_fallthru
        _
      // Predicated region
      $region41: #{block50_forward.5} parent=35 // pred_check
        %p1227 = pneg %p151
      $region42: #{block50_forward.5} parent=35 // pred_check_branch
        %1229 = sbr.rel (%p1227) target = $region44
      $region43: #{block50_forward.5} parent=35 // pred_region
        _
      $region44: #{block50_forward.5} parent=35 // pred_fallthru
        _
      // Predicated region
      $region45: #{block50_forward.5} parent=35 // pred_check
        %p1230 = pneg %p177
      $region46: #{block50_forward.5} parent=35 // pred_check_branch
        %1232 = sbr.rel (%p1230) target = $region48
      $region47: #{block50_forward.5} parent=35 // pred_region
        _
      $region48: #{block50_forward.5} parent=35 // pred_fallthru
        _
    $region36: #{block50_forward.5} parent=5 // pred_fallthru
      _
    %p1233 = scmp.le.s32.totalorder 2, %s13
    // Predicated region
    $region49: #{block50_forward.5} parent=5 // pred_check
      %p1234 = pneg %p1233
    $region50: #{block50_forward.5} parent=5 // pred_check_branch
      %1236 = sbr.rel (%p1234) target = $region52
    $region51: #{block50_forward.5} parent=5 // pred_region
      %s1237 = ssub.s32 %s13, 2
      // Predicated region
      $region53: #{block50_forward.5} parent=51 // pred_check
        %p1238 = pneg %p131
      $region54: #{block50_forward.5} parent=51 // pred_check_branch
        %1240 = sbr.rel (%p1238) target = $region56
      $region55: #{block50_forward.5} parent=51 // pred_region
        %p1241 = scmp.lt.s32.totalorder %s19, 1
        %s1242 = scalar_select %p1241, %s19, 1
        %s1243 = smul.addr %s1242, 8
        %s1244 = smul.addr %s1243, 8
        %s1245 = scalar_lea.vmem %s4, %s1244
      $region56: #{block50_forward.5} parent=51 // pred_fallthru
        _
      // Predicated region
      $region57: #{block50_forward.5} parent=51 // pred_check
        %p1246 = pneg %p157
      $region58: #{block50_forward.5} parent=51 // pred_check_branch
        %1248 = sbr.rel (%p1246) target = $region60
      $region59: #{block50_forward.5} parent=51 // pred_region
        %p1249 = scmp.lt.s32.totalorder %s19, 1
        %s1250 = scalar_select %p1249, %s19, 1
        %s1251 = scalar_lea.vmem %s5, %s1250
      $region60: #{block50_forward.5} parent=51 // pred_fallthru
        _
      // Predicated region
      $region61: #{block50_forward.5} parent=51 // pred_check
        %p1252 = pneg %p183
      $region62: #{block50_forward.5} parent=51 // pred_check_branch
        %1254 = sbr.rel (%p1252) target = $region64
      $region63: #{block50_forward.5} parent=51 // pred_region
        %p1255 = scmp.lt.s32.totalorder %s19, 1
        %s1256 = scalar_select %p1255, %s19, 1
        %s1257 = scalar_lea.vmem %s6, %s1256
      $region64: #{block50_forward.5} parent=51 // pred_fallthru
        _
    $region52: #{block50_forward.5} parent=5 // pred_fallthru
      _
  $region6: #{block50_forward.5} parent=0 // loop_footer
    %s17 = sadd.s32 1, %s13
  $region7: #{block50_forward.5} parent=0 // loop_footer_branch
    %12 = sbr.rel target = $region3
  $region8: #{block50_forward.5} parent=0 // loop_exit
    _

</llo_original>
